<compile_context>
chip_gen: v7x
topology: tpu7x:2x2x1
jax: 0.10.0
libtpu: 0.0.40
codegen_flags: <defaults>
</compile_context>

<pallas_src>
import functools

import jax
import jax.numpy as jnp
from jax import lax
from jax.experimental import pallas as pl
from jax.experimental.pallas import tpu as pltpu


def _vmem_limit_bytes():
    """~75% of physical VMEM (v7x has only 64 MiB/TC; v5e/v6e have 128 MiB)."""
    try:
        cap = int(pltpu.get_tpu_info().vmem_capacity_bytes)
    except Exception:
        cap = 64 * 1024 * 1024            # conservative fallback, safe on v7x too
    return (cap * 3) // 4


# ----------------------------------------------------------------------------
# Fused residual-unit kernel (one batch element per grid step)
# ----------------------------------------------------------------------------
def _rep_kernel(x_ref, w1_ref, b1_ref, w2_ref, b2_ref, *rest,
                stride, ho, wo, cin, cout, adapt):
    """One ResNet residual unit, fully fused.

    x_ref : stride==1 -> (1, Ho, Wo, cin)         unpadded NHWC input (cin == cout)
            stride==2 -> (1, 4, Hp/2, Wp/2, cin)  parity space-to-depth of the padded
                         input: x_ref[0, 2*pi+pj, a, b, :] == xpad[2a+pi, 2b+pj, :]
    w1_ref: (9*cin,  cout) bf16  conv1 weight, BN scale folded, K idx = (kh*3+kw)*cin + c
    b1_ref: (1, cout)      f32   conv1 folded-BN shift
    w2_ref: (9*cout, cout) bf16  conv2 weight, BN scale folded
    b2_ref: (1, cout)      f32   conv2 folded-BN shift
    wad_ref: (cin, cout)   bf16  1x1 stride-2 shortcut weight      [only when adapt]
    out_ref: (1, Ho, Wo, cout)
    Scratch (bf16):
      xp_ref: (Ho+2, Wo+2, cin)   in-VMEM zero-padded input        [only when stride==1]
      hp_ref: (Ho+2, Wo+2, cout)  in-VMEM zero-padded conv1 output
      s1_ref: (Ho, Wo, 9*cin)     conv1 im2col slab
      s2_ref: (Ho, Wo, 9*cout)    conv2 im2col slab
    """
    if adapt:
        wad_ref, out_ref, *scratch = rest
    else:
        out_ref, *scratch = rest
    if stride == 1:
        xp_ref, hp_ref, s1_ref, s2_ref = scratch
    else:
        hp_ref, s1_ref, s2_ref = scratch

    m = ho * wo
    cdt = w1_ref.dtype                      # MXU compute dtype (bf16)

    def zero_border(ref, hh, ww, c):
        # Interior is fully overwritten every step; only the 1-wide border needs
        # zeros.  Re-zeroed every step (NOT pl.when(pid==0)) so it is correct under
        # v7x megacore sharding of the parallel batch axis.
        ref[0:1, :, :] = jnp.zeros((1, ww + 2, c), cdt)
        ref[hh + 1:hh + 2, :, :] = jnp.zeros((1, ww + 2, c), cdt)
        ref[:, 0:1, :] = jnp.zeros((hh + 2, 1, c), cdt)
        ref[:, ww + 1:ww + 2, :] = jnp.zeros((hh + 2, 1, c), cdt)

    # ---- conv1: assemble (m, 9*cin) im2col slab, one big-K MXU matmul --------
    if stride == 1:
        zero_border(xp_ref, ho, wo, cin)
        xp_ref[1:ho + 1, 1:wo + 1, :] = x_ref[0]        # pad in VMEM, never in HBM
        for kh in range(3):
            for kw in range(3):
                t = kh * 3 + kw
                s1_ref[:, :, t * cin:(t + 1) * cin] = xp_ref[kh:kh + ho, kw:kw + wo, :]
    else:
        xs = x_ref[0]                                    # (4, Hp/2, Wp/2, cin)
        for kh in range(3):
            for kw in range(3):
                t = kh * 3 + kw
                p = (kh % 2) * 2 + (kw % 2)
                s1_ref[:, :, t * cin:(t + 1) * cin] = (
                    xs[p, kh // 2:kh // 2 + ho, kw // 2:kw // 2 + wo, :])

    acc1 = jnp.dot(s1_ref[...].reshape(m, 9 * cin), w1_ref[...],
                   preferred_element_type=jnp.float32)
    h = jnp.maximum(acc1 + b1_ref[...], 0.0).astype(cdt)   # f32 epilogue, bf16 store

    # ---- conv1 output zero-padded in VMEM (bf16, border-only zeroing) --------
    zero_border(hp_ref, ho, wo, cout)
    hp_ref[1:ho + 1, 1:wo + 1, :] = h.reshape(ho, wo, cout)

    # ---- conv2: same im2col slab + single big-K matmul ------------------------
    for kh in range(3):
        for kw in range(3):
            t = kh * 3 + kw
            s2_ref[:, :, t * cout:(t + 1) * cout] = hp_ref[kh:kh + ho, kw:kw + wo, :]
    acc2 = jnp.dot(s2_ref[...].reshape(m, 9 * cout), w2_ref[...],
                   preferred_element_type=jnp.float32) + b2_ref[...]

    # ---- fused residual (optional 1x1 stride-2 shortcut) + add + ReLU --------
    if adapt:
        xdec = xs[3, 0:ho, 0:wo, :].reshape(m, cin)          # == x[2i, 2j, :]
        res = jnp.dot(xdec, wad_ref[...],
                      preferred_element_type=jnp.float32).reshape(ho, wo, cout)
    else:
        res = x_ref[0].astype(jnp.float32)                   # identity shortcut (3D)

    out3 = jnp.maximum(acc2.reshape(ho, wo, cout) + res, 0.0)
    out_ref[0] = out3.astype(out_ref.dtype)


# ----------------------------------------------------------------------------
# Wrapper: one fused residual unit
# ----------------------------------------------------------------------------
def _space_to_depth2(xpad):
    """(N, Hp, Wp, C) -> (N, 4, Hp/2, Wp/2, C), out[n, 2*pi+pj, a, b] = xpad[n, 2a+pi, 2b+pj]."""
    n, hp, wp, c = xpad.shape
    ph, pw = hp % 2, wp % 2
    if ph or pw:
        xpad = jnp.pad(xpad, ((0, 0), (0, ph), (0, pw), (0, 0)))
        hp, wp = hp + ph, wp + pw
    x = xpad.reshape(n, hp // 2, 2, wp // 2, 2, c)
    return jnp.transpose(x, (0, 2, 4, 1, 3, 5)).reshape(n, 4, hp // 2, wp // 2, c)


def resnet_rep(x, w1, b1, w2, b2, wad, *, stride):
    """One fused residual unit. x: (N, H, W, Cin) in the compute dtype (bf16)."""
    assert stride in (1, 2)
    n, h, w, cin = x.shape
    cout = w1.shape[-1]
    ho = (h + 2 - 3) // stride + 1
    wo = (w + 2 - 3) // stride + 1
    adapt = wad is not None
    assert adapt == (stride == 2)

    if stride == 1:
        assert cin == cout
        xk = x                       # unpadded; zero-padding happens in-kernel (VMEM)
    else:
        # TODO(synk): the stride-2 first rep keeps one wrapper-side pad + parity
        # space-to-depth HBM copy so the kernel only needs unit-stride slices.
        xk = _space_to_depth2(jnp.pad(x, ((0, 0), (1, 1), (1, 1), (0, 0))))

    kernel = functools.partial(_rep_kernel, stride=stride, ho=ho, wo=wo,
                               cin=cin, cout=cout, adapt=adapt)

    def _const_spec(a):
        return pl.BlockSpec(a.shape, lambda i, _s=a.ndim: (0,) * _s)

    x_spec = pl.BlockSpec((1,) + tuple(xk.shape[1:]),
                          lambda i, _nd=xk.ndim - 1: (i,) + (0,) * _nd)

    in_specs = [x_spec, _const_spec(w1), _const_spec(b1),
                _const_spec(w2), _const_spec(b2)]
    args = [xk, w1, b1, w2, b2]
    if adapt:
        in_specs.append(_const_spec(wad))
        args.append(wad)

    cdt = x.dtype
    scratch_shapes = []
    if stride == 1:
        scratch_shapes.append(pltpu.VMEM((ho + 2, wo + 2, cin), cdt))      # xp
    scratch_shapes += [pltpu.VMEM((ho + 2, wo + 2, cout), cdt),            # hp (bf16)
                       pltpu.VMEM((ho, wo, 9 * cin), cdt),                 # conv1 slab
                       pltpu.VMEM((ho, wo, 9 * cout), cdt)]                # conv2 slab

    flops = 2 * n * ho * wo * (9 * cin * cout + 9 * cout * cout
                               + (cin * cout if adapt else 0))
    bytes_accessed = (sum(int(a.size) * a.dtype.itemsize for a in args)
                      + n * ho * wo * cout * cdt.itemsize)

    return pl.pallas_call(
        kernel,
        out_shape=jax.ShapeDtypeStruct((n, ho, wo, cout), cdt),
        grid=(n,),                   # batch >= 2 -> >= 2 parallel blocks (v7x megacore)
        in_specs=in_specs,
        out_specs=pl.BlockSpec((1, ho, wo, cout), lambda i: (i, 0, 0, 0)),
        scratch_shapes=scratch_shapes,
        compiler_params=pltpu.CompilerParams(
            dimension_semantics=("parallel",),
            vmem_limit_bytes=_vmem_limit_bytes()),
        cost_estimate=pl.CostEstimate(flops=flops, transcendentals=0,
                                      bytes_accessed=bytes_accessed),
    )(*args)


# ----------------------------------------------------------------------------
# ResnetBlock wrapper (deterministic synthetic parameters, inference)
# ----------------------------------------------------------------------------
class ResnetBlockPallas:
    def __init__(self, strides, nf, nf0, reps, bn, key, compute_dtype=jnp.bfloat16):
        self.adapt = strides == 2
        self.nf = nf
        self.bn = bn
        self.compute_dtype = compute_dtype
        counter = [0]

        def next_key():
            counter[0] += 1
            return jax.random.fold_in(key, counter[0])

        def init_w(kh, kw, cin, cout):
            fan_in = kh * kw * cin
            return (jax.random.normal(next_key(), (kh, kw, cin, cout), jnp.float32)
                    * jnp.sqrt(2.0 / fan_in))

        eps = 0.001

        def bn_affine(c):
            if bn:
                # TODO(synk): BatchNorm2d is implemented in inference mode (running_mean=0,
                # running_var=1 folded into scale/shift); training-mode batch statistics
                # are not computed in-kernel.
                gamma = 1.0 + 0.1 * jax.random.normal(next_key(), (c,), jnp.float32)
                beta = 0.1 * jax.random.normal(next_key(), (c,), jnp.float32)
                rmean = jnp.zeros((c,), jnp.float32)
                rvar = jnp.ones((c,), jnp.float32)
                scale = gamma * lax.rsqrt(rvar + eps)
                shift = beta - rmean * scale
            else:
                scale = jnp.ones((c,), jnp.float32)
                shift = jnp.zeros((c,), jnp.float32)
            return scale, shift

        def fold(w_hwio, scale):
            # Fold the BN scale into the conv weight (exact: conv is linear), cast to the
            # MXU compute dtype and flatten HWIO -> (9*Cin, Cout), K idx = (kh*3+kw)*Cin + c.
            wf = (w_hwio * scale[None, None, None, :]).astype(compute_dtype)
            return wf.reshape(9 * w_hwio.shape[2], w_hwio.shape[3])

        # NB: the PyTorch adapt_layer (1x1 stride-2 shortcut) has no BatchNorm.
        self.adapt_w = (init_w(1, 1, nf0, nf).reshape(nf0, nf).astype(compute_dtype)
                        if self.adapt else None)

        self.reps = []
        s, cin = strides, nf0
        for _ in range(reps):
            w1 = init_w(3, 3, cin, nf)
            sc1, sh1 = bn_affine(nf)
            w2 = init_w(3, 3, nf, nf)
            sc2, sh2 = bn_affine(nf)
            self.reps.append(dict(stride=s,
                                  w1=fold(w1, sc1), b1=sh1.reshape(1, nf),
                                  w2=fold(w2, sc2), b2=sh2.reshape(1, nf)))
            s, cin = 1, nf

    def __call__(self, x_nchw):
        # NCHW (PyTorch) -> NHWC (TPU lane-friendly), bf16 into the MXU.
        x = jnp.transpose(x_nchw, (0, 2, 3, 1)).astype(self.compute_dtype)
        for i, r in enumerate(self.reps):
            wad = self.adapt_w if (self.adapt and i == 0) else None
            x = resnet_rep(x, r["w1"], r["b1"], r["w2"], r["b2"], wad,
                           stride=r["stride"])
        return jnp.transpose(x, (0, 3, 1, 2)).astype(x_nchw.dtype)


# ----------------------------------------------------------------------------
# Pure-JAX reference (mirrors the same bf16 cast points; for correctness only)
# ----------------------------------------------------------------------------
def _conv_ref(x, w_hwio, stride, padding):
    return lax.conv_general_dilated(
        x, w_hwio, (stride, stride), [(padding, padding), (padding, padding)],
        dimension_numbers=("NHWC", "HWIO", "NHWC"),
        preferred_element_type=jnp.float32)


def reference_forward(block, x_nchw):
    dt = block.compute_dtype
    nf = block.nf
    x = jnp.transpose(x_nchw, (0, 2, 3, 1)).astype(dt)
    for i, r in enumerate(block.reps):
        cin = r["w1"].shape[0] // 9
        w1 = r["w1"].reshape(3, 3, cin, nf)
        w2 = r["w2"].reshape(3, 3, nf, nf)
        h = jnp.maximum(_conv_ref(x, w1, r["stride"], 1) + r["b1"][0], 0.0).astype(dt)
        rama = _conv_ref(h, w2, 1, 1) + r["b2"][0]
        if block.adapt and i == 0:
            res = _conv_ref(x, block.adapt_w.reshape(1, 1, cin, nf), r["stride"], 0)
        else:
            res = x.astype(jnp.float32)
        x = jnp.maximum(res + rama, 0.0).astype(dt)
    return jnp.transpose(x, (0, 3, 1, 2)).astype(jnp.float32)


if __name__ == "__main__":
    key = jax.random.PRNGKey(0)
    # Small shapes consistent with the module: batch=2, nf0=4 in-channels,
    # 16x16 spatial, block with strides=2, nf=8, reps=2, bn=False.
    x = jax.random.normal(jax.random.fold_in(key, 1000), (2, 4, 16, 16), jnp.float32)

    block = ResnetBlockPallas(strides=2, nf=8, nf0=4, reps=2, bn=False, key=key)

    fwd = jax.jit(block.__call__)
    y = jax.block_until_ready(fwd(x))
    assert y.shape == (2, 8, 8, 8), y.shape

    y_ref = jax.block_until_ready(reference_forward(block, x))
    max_err = float(jnp.abs(y - y_ref).max())
    # bf16 compute: tolerance covers 1-ulp rounding-order differences only.
    assert jnp.allclose(y, y_ref, atol=2e-2, rtol=2e-2), max_err

    print("KERNEL_OK")
</pallas_src>

<mosaic_0001>
module attributes {stable_mosaic.version = 11 : i64} {
  func.func @_rep_kernel(%arg0: i32, %arg1: memref<1x8x8x8xbf16, #tpu.memory_space<vmem>>, %arg2: memref<72x8xbf16, #tpu.memory_space<vmem>>, %arg3: memref<1x8xf32, #tpu.memory_space<vmem>>, %arg4: memref<72x8xbf16, #tpu.memory_space<vmem>>, %arg5: memref<1x8xf32, #tpu.memory_space<vmem>>, %arg6: memref<1x8x8x8xbf16, #tpu.memory_space<vmem>>, %arg7: memref<10x10x8xbf16, #tpu.memory_space<vmem>>, %arg8: memref<10x10x8xbf16, #tpu.memory_space<vmem>>, %arg9: memref<8x8x72xbf16, #tpu.memory_space<vmem>>, %arg10: memref<8x8x72xbf16, #tpu.memory_space<vmem>>) attributes {dimension_semantics = [#tpu.dimension_semantics<parallel>], iteration_bounds = array<i64: 2>, scalar_prefetch = 0 : i64, scratch_operands = 4 : i64, tpu.core_type = #tpu.core_type<tc>, window_params = [{transform_indices = @transform_0, window_bounds = array<i64: 1, 8, 8, 8>}, {pipeline_mode = #tpu.pipeline_mode<synchronous>, transform_indices = @transform_1, window_bounds = array<i64: 72, 8>}, {pipeline_mode = #tpu.pipeline_mode<synchronous>, transform_indices = @transform_2, window_bounds = array<i64: 1, 8>}, {pipeline_mode = #tpu.pipeline_mode<synchronous>, transform_indices = @transform_3, window_bounds = array<i64: 72, 8>}, {pipeline_mode = #tpu.pipeline_mode<synchronous>, transform_indices = @transform_4, window_bounds = array<i64: 1, 8>}, {transform_indices = @transform_5, window_bounds = array<i64: 1, 8, 8, 8>}]} {
    %cst = arith.constant 0.000000e+00 : bf16
    %0 = vector.broadcast %cst : bf16 to vector<1x10x8xbf16>
    %c0 = arith.constant 0 : index
    %c0_0 = arith.constant 0 : index
    %c0_1 = arith.constant 0 : index
    %1 = vector.load %arg7[%c0, %c0_0, %c0_1] : memref<10x10x8xbf16, #tpu.memory_space<vmem>>, vector<1x10x8xbf16>
    tpu.vector_store %arg7[%c0, %c0_0, %c0_1], %0 {strides = array<i32>} : memref<10x10x8xbf16, #tpu.memory_space<vmem>>, vector<1x10x8xbf16>,
    %cst_2 = arith.constant 0.000000e+00 : bf16
    %2 = vector.broadcast %cst_2 : bf16 to vector<1x10x8xbf16>
    %c9 = arith.constant 9 : index
    %c0_3 = arith.constant 0 : index
    %c0_4 = arith.constant 0 : index
    %3 = vector.load %arg7[%c9, %c0_3, %c0_4] : memref<10x10x8xbf16, #tpu.memory_space<vmem>>, vector<1x10x8xbf16>
    tpu.vector_store %arg7[%c9, %c0_3, %c0_4], %2 {strides = array<i32>} : memref<10x10x8xbf16, #tpu.memory_space<vmem>>, vector<1x10x8xbf16>,
    %cst_5 = arith.constant 0.000000e+00 : bf16
    %4 = vector.broadcast %cst_5 : bf16 to vector<10x1x8xbf16>
    %c0_6 = arith.constant 0 : index
    %c0_7 = arith.constant 0 : index
    %c0_8 = arith.constant 0 : index
    %5 = vector.load %arg7[%c0_6, %c0_7, %c0_8] : memref<10x10x8xbf16, #tpu.memory_space<vmem>>, vector<10x1x8xbf16>
    tpu.vector_store %arg7[%c0_6, %c0_7, %c0_8], %4 {strides = array<i32>} : memref<10x10x8xbf16, #tpu.memory_space<vmem>>, vector<10x1x8xbf16>,
    %cst_9 = arith.constant 0.000000e+00 : bf16
    %6 = vector.broadcast %cst_9 : bf16 to vector<10x1x8xbf16>
    %c0_10 = arith.constant 0 : index
    %c9_11 = arith.constant 9 : index
    %c0_12 = arith.constant 0 : index
    %7 = vector.load %arg7[%c0_10, %c9_11, %c0_12] : memref<10x10x8xbf16, #tpu.memory_space<vmem>>, vector<10x1x8xbf16>
    tpu.vector_store %arg7[%c0_10, %c9_11, %c0_12], %6 {strides = array<i32>} : memref<10x10x8xbf16, #tpu.memory_space<vmem>>, vector<10x1x8xbf16>,
    %c0_13 = arith.constant 0 : index
    %c0_14 = arith.constant 0 : index
    %c0_15 = arith.constant 0 : index
    %c0_16 = arith.constant 0 : index
    %8 = vector.load %arg1[%c0_13, %c0_14, %c0_15, %c0_16] : memref<1x8x8x8xbf16, #tpu.memory_space<vmem>>, vector<1x8x8x8xbf16>
    %9 = vector.shape_cast %8 : vector<1x8x8x8xbf16> to vector<8x8x8xbf16>
    %c1 = arith.constant 1 : index
    %c1_17 = arith.constant 1 : index
    %c0_18 = arith.constant 0 : index
    %10 = vector.load %arg7[%c1, %c1_17, %c0_18] : memref<10x10x8xbf16, #tpu.memory_space<vmem>>, vector<8x8x8xbf16>
    tpu.vector_store %arg7[%c1, %c1_17, %c0_18], %9 {strides = array<i32>} : memref<10x10x8xbf16, #tpu.memory_space<vmem>>, vector<8x8x8xbf16>,
    %c0_19 = arith.constant 0 : index
    %c0_20 = arith.constant 0 : index
    %c0_21 = arith.constant 0 : index
    %11 = vector.load %arg7[%c0_19, %c0_20, %c0_21] : memref<10x10x8xbf16, #tpu.memory_space<vmem>>, vector<8x8x8xbf16>
    %c0_22 = arith.constant 0 : index
    %c0_23 = arith.constant 0 : index
    %c0_24 = arith.constant 0 : index
    %12 = vector.load %arg9[%c0_22, %c0_23, %c0_24] : memref<8x8x72xbf16, #tpu.memory_space<vmem>>, vector<8x8x8xbf16>
    tpu.vector_store %arg9[%c0_22, %c0_23, %c0_24], %11 {strides = array<i32>} : memref<8x8x72xbf16, #tpu.memory_space<vmem>>, vector<8x8x8xbf16>,
    %c0_25 = arith.constant 0 : index
    %c1_26 = arith.constant 1 : index
    %c0_27 = arith.constant 0 : index
    %13 = vector.load %arg7[%c0_25, %c1_26, %c0_27] : memref<10x10x8xbf16, #tpu.memory_space<vmem>>, vector<8x8x8xbf16>
    %c0_28 = arith.constant 0 : index
    %c0_29 = arith.constant 0 : index
    %c8 = arith.constant 8 : index
    %14 = vector.load %arg9[%c0_28, %c0_29, %c8] : memref<8x8x72xbf16, #tpu.memory_space<vmem>>, vector<8x8x8xbf16>
    tpu.vector_store %arg9[%c0_28, %c0_29, %c8], %13 {strides = array<i32>} : memref<8x8x72xbf16, #tpu.memory_space<vmem>>, vector<8x8x8xbf16>,
    %c0_30 = arith.constant 0 : index
    %c2 = arith.constant 2 : index
    %c0_31 = arith.constant 0 : index
    %15 = vector.load %arg7[%c0_30, %c2, %c0_31] : memref<10x10x8xbf16, #tpu.memory_space<vmem>>, vector<8x8x8xbf16>
    %c0_32 = arith.constant 0 : index
    %c0_33 = arith.constant 0 : index
    %c16 = arith.constant 16 : index
    %16 = vector.load %arg9[%c0_32, %c0_33, %c16] : memref<8x8x72xbf16, #tpu.memory_space<vmem>>, vector<8x8x8xbf16>
    tpu.vector_store %arg9[%c0_32, %c0_33, %c16], %15 {strides = array<i32>} : memref<8x8x72xbf16, #tpu.memory_space<vmem>>, vector<8x8x8xbf16>,
    %c1_34 = arith.constant 1 : index
    %c0_35 = arith.constant 0 : index
    %c0_36 = arith.constant 0 : index
    %17 = vector.load %arg7[%c1_34, %c0_35, %c0_36] : memref<10x10x8xbf16, #tpu.memory_space<vmem>>, vector<8x8x8xbf16>
    %c0_37 = arith.constant 0 : index
    %c0_38 = arith.constant 0 : index
    %c24 = arith.constant 24 : index
    %18 = vector.load %arg9[%c0_37, %c0_38, %c24] : memref<8x8x72xbf16, #tpu.memory_space<vmem>>, vector<8x8x8xbf16>
    tpu.vector_store %arg9[%c0_37, %c0_38, %c24], %17 {strides = array<i32>} : memref<8x8x72xbf16, #tpu.memory_space<vmem>>, vector<8x8x8xbf16>,
    %c1_39 = arith.constant 1 : index
    %c1_40 = arith.constant 1 : index
    %c0_41 = arith.constant 0 : index
    %19 = vector.load %arg7[%c1_39, %c1_40, %c0_41] : memref<10x10x8xbf16, #tpu.memory_space<vmem>>, vector<8x8x8xbf16>
    %c0_42 = arith.constant 0 : index
    %c0_43 = arith.constant 0 : index
    %c32 = arith.constant 32 : index
    %20 = vector.load %arg9[%c0_42, %c0_43, %c32] : memref<8x8x72xbf16, #tpu.memory_space<vmem>>, vector<8x8x8xbf16>
    tpu.vector_store %arg9[%c0_42, %c0_43, %c32], %19 {strides = array<i32>} : memref<8x8x72xbf16, #tpu.memory_space<vmem>>, vector<8x8x8xbf16>,
    %c1_44 = arith.constant 1 : index
    %c2_45 = arith.constant 2 : index
    %c0_46 = arith.constant 0 : index
    %21 = vector.load %arg7[%c1_44, %c2_45, %c0_46] : memref<10x10x8xbf16, #tpu.memory_space<vmem>>, vector<8x8x8xbf16>
    %c0_47 = arith.constant 0 : index
    %c0_48 = arith.constant 0 : index
    %c40 = arith.constant 40 : index
    %22 = vector.load %arg9[%c0_47, %c0_48, %c40] : memref<8x8x72xbf16, #tpu.memory_space<vmem>>, vector<8x8x8xbf16>
    tpu.vector_store %arg9[%c0_47, %c0_48, %c40], %21 {strides = array<i32>} : memref<8x8x72xbf16, #tpu.memory_space<vmem>>, vector<8x8x8xbf16>,
    %c2_49 = arith.constant 2 : index
    %c0_50 = arith.constant 0 : index
    %c0_51 = arith.constant 0 : index
    %23 = vector.load %arg7[%c2_49, %c0_50, %c0_51] : memref<10x10x8xbf16, #tpu.memory_space<vmem>>, vector<8x8x8xbf16>
    %c0_52 = arith.constant 0 : index
    %c0_53 = arith.constant 0 : index
    %c48 = arith.constant 48 : index
    %24 = vector.load %arg9[%c0_52, %c0_53, %c48] : memref<8x8x72xbf16, #tpu.memory_space<vmem>>, vector<8x8x8xbf16>
    tpu.vector_store %arg9[%c0_52, %c0_53, %c48], %23 {strides = array<i32>} : memref<8x8x72xbf16, #tpu.memory_space<vmem>>, vector<8x8x8xbf16>,
    %c2_54 = arith.constant 2 : index
    %c1_55 = arith.constant 1 : index
    %c0_56 = arith.constant 0 : index
    %25 = vector.load %arg7[%c2_54, %c1_55, %c0_56] : memref<10x10x8xbf16, #tpu.memory_space<vmem>>, vector<8x8x8xbf16>
    %c0_57 = arith.constant 0 : index
    %c0_58 = arith.constant 0 : index
    %c56 = arith.constant 56 : index
    %26 = vector.load %arg9[%c0_57, %c0_58, %c56] : memref<8x8x72xbf16, #tpu.memory_space<vmem>>, vector<8x8x8xbf16>
    tpu.vector_store %arg9[%c0_57, %c0_58, %c56], %25 {strides = array<i32>} : memref<8x8x72xbf16, #tpu.memory_space<vmem>>, vector<8x8x8xbf16>,
    %c2_59 = arith.constant 2 : index
    %c2_60 = arith.constant 2 : index
    %c0_61 = arith.constant 0 : index
    %27 = vector.load %arg7[%c2_59, %c2_60, %c0_61] : memref<10x10x8xbf16, #tpu.memory_space<vmem>>, vector<8x8x8xbf16>
    %c0_62 = arith.constant 0 : index
    %c0_63 = arith.constant 0 : index
    %c64 = arith.constant 64 : index
    %28 = vector.load %arg9[%c0_62, %c0_63, %c64] : memref<8x8x72xbf16, #tpu.memory_space<vmem>>, vector<8x8x8xbf16>
    tpu.vector_store %arg9[%c0_62, %c0_63, %c64], %27 {strides = array<i32>} : memref<8x8x72xbf16, #tpu.memory_space<vmem>>, vector<8x8x8xbf16>,
    %c0_64 = arith.constant 0 : index
    %c0_65 = arith.constant 0 : index
    %c0_66 = arith.constant 0 : index
    %29 = vector.load %arg9[%c0_64, %c0_65, %c0_66] : memref<8x8x72xbf16, #tpu.memory_space<vmem>>, vector<8x8x72xbf16>
    %30 = vector.shape_cast %29 : vector<8x8x72xbf16> to vector<64x72xbf16>
    %c0_67 = arith.constant 0 : index
    %c0_68 = arith.constant 0 : index
    %31 = vector.load %arg2[%c0_67, %c0_68] : memref<72x8xbf16, #tpu.memory_space<vmem>>, vector<72x8xbf16>
    %cst_69 = arith.constant dense<0.000000e+00> : vector<64x8xf32>
    %32 = tpu.matmul %30, %31, %cst_69 {dimension_numbers = #tpu.dot_dimension_numbers<[1], [0], [0], [1], [0, 0, 1, 1], [], []>} : vector<64x72xbf16>, vector<72x8xbf16>, vector<64x8xf32> -> vector<64x8xf32>
    %c0_70 = arith.constant 0 : index
    %c0_71 = arith.constant 0 : index
    %33 = vector.load %arg3[%c0_70, %c0_71] : memref<1x8xf32, #tpu.memory_space<vmem>>, vector<1x8xf32>
    %34 = vector.broadcast %33 : vector<1x8xf32> to vector<64x8xf32>
    %35 = arith.addf %32, %34 : vector<64x8xf32>
    %cst_72 = arith.constant 0.000000e+00 : f32
    %36 = vector.broadcast %cst_72 : f32 to vector<64x8xf32>
    %37 = arith.maximumf %35, %36 : vector<64x8xf32>
    %38 = arith.truncf %37 : vector<64x8xf32> to vector<64x8xbf16>
    %cst_73 = arith.constant 0.000000e+00 : bf16
    %39 = vector.broadcast %cst_73 : bf16 to vector<1x10x8xbf16>
    %c0_74 = arith.constant 0 : index
    %c0_75 = arith.constant 0 : index
    %c0_76 = arith.constant 0 : index
    %40 = vector.load %arg8[%c0_74, %c0_75, %c0_76] : memref<10x10x8xbf16, #tpu.memory_space<vmem>>, vector<1x10x8xbf16>
    tpu.vector_store %arg8[%c0_74, %c0_75, %c0_76], %39 {strides = array<i32>} : memref<10x10x8xbf16, #tpu.memory_space<vmem>>, vector<1x10x8xbf16>,
    %cst_77 = arith.constant 0.000000e+00 : bf16
    %41 = vector.broadcast %cst_77 : bf16 to vector<1x10x8xbf16>
    %c9_78 = arith.constant 9 : index
    %c0_79 = arith.constant 0 : index
    %c0_80 = arith.constant 0 : index
    %42 = vector.load %arg8[%c9_78, %c0_79, %c0_80] : memref<10x10x8xbf16, #tpu.memory_space<vmem>>, vector<1x10x8xbf16>
    tpu.vector_store %arg8[%c9_78, %c0_79, %c0_80], %41 {strides = array<i32>} : memref<10x10x8xbf16, #tpu.memory_space<vmem>>, vector<1x10x8xbf16>,
    %cst_81 = arith.constant 0.000000e+00 : bf16
    %43 = vector.broadcast %cst_81 : bf16 to vector<10x1x8xbf16>
    %c0_82 = arith.constant 0 : index
    %c0_83 = arith.constant 0 : index
    %c0_84 = arith.constant 0 : index
    %44 = vector.load %arg8[%c0_82, %c0_83, %c0_84] : memref<10x10x8xbf16, #tpu.memory_space<vmem>>, vector<10x1x8xbf16>
    tpu.vector_store %arg8[%c0_82, %c0_83, %c0_84], %43 {strides = array<i32>} : memref<10x10x8xbf16, #tpu.memory_space<vmem>>, vector<10x1x8xbf16>,
    %cst_85 = arith.constant 0.000000e+00 : bf16
    %45 = vector.broadcast %cst_85 : bf16 to vector<10x1x8xbf16>
    %c0_86 = arith.constant 0 : index
    %c9_87 = arith.constant 9 : index
    %c0_88 = arith.constant 0 : index
    %46 = vector.load %arg8[%c0_86, %c9_87, %c0_88] : memref<10x10x8xbf16, #tpu.memory_space<vmem>>, vector<10x1x8xbf16>
    tpu.vector_store %arg8[%c0_86, %c9_87, %c0_88], %45 {strides = array<i32>} : memref<10x10x8xbf16, #tpu.memory_space<vmem>>, vector<10x1x8xbf16>,
    %47 = vector.shape_cast %38 : vector<64x8xbf16> to vector<8x8x8xbf16>
    %c1_89 = arith.constant 1 : index
    %c1_90 = arith.constant 1 : index
    %c0_91 = arith.constant 0 : index
    %48 = vector.load %arg8[%c1_89, %c1_90, %c0_91] : memref<10x10x8xbf16, #tpu.memory_space<vmem>>, vector<8x8x8xbf16>
    tpu.vector_store %arg8[%c1_89, %c1_90, %c0_91], %47 {strides = array<i32>} : memref<10x10x8xbf16, #tpu.memory_space<vmem>>, vector<8x8x8xbf16>,
    %c0_92 = arith.constant 0 : index
    %c0_93 = arith.constant 0 : index
    %c0_94 = arith.constant 0 : index
    %49 = vector.load %arg8[%c0_92, %c0_93, %c0_94] : memref<10x10x8xbf16, #tpu.memory_space<vmem>>, vector<8x8x8xbf16>
    %c0_95 = arith.constant 0 : index
    %c0_96 = arith.constant 0 : index
    %c0_97 = arith.constant 0 : index
    %50 = vector.load %arg10[%c0_95, %c0_96, %c0_97] : memref<8x8x72xbf16, #tpu.memory_space<vmem>>, vector<8x8x8xbf16>
    tpu.vector_store %arg10[%c0_95, %c0_96, %c0_97], %49 {strides = array<i32>} : memref<8x8x72xbf16, #tpu.memory_space<vmem>>, vector<8x8x8xbf16>,
    %c0_98 = arith.constant 0 : index
    %c1_99 = arith.constant 1 : index
    %c0_100 = arith.constant 0 : index
    %51 = vector.load %arg8[%c0_98, %c1_99, %c0_100] : memref<10x10x8xbf16, #tpu.memory_space<vmem>>, vector<8x8x8xbf16>
    %c0_101 = arith.constant 0 : index
    %c0_102 = arith.constant 0 : index
    %c8_103 = arith.constant 8 : index
    %52 = vector.load %arg10[%c0_101, %c0_102, %c8_103] : memref<8x8x72xbf16, #tpu.memory_space<vmem>>, vector<8x8x8xbf16>
    tpu.vector_store %arg10[%c0_101, %c0_102, %c8_103], %51 {strides = array<i32>} : memref<8x8x72xbf16, #tpu.memory_space<vmem>>, vector<8x8x8xbf16>,
    %c0_104 = arith.constant 0 : index
    %c2_105 = arith.constant 2 : index
    %c0_106 = arith.constant 0 : index
    %53 = vector.load %arg8[%c0_104, %c2_105, %c0_106] : memref<10x10x8xbf16, #tpu.memory_space<vmem>>, vector<8x8x8xbf16>
    %c0_107 = arith.constant 0 : index
    %c0_108 = arith.constant 0 : index
    %c16_109 = arith.constant 16 : index
    %54 = vector.load %arg10[%c0_107, %c0_108, %c16_109] : memref<8x8x72xbf16, #tpu.memory_space<vmem>>, vector<8x8x8xbf16>
    tpu.vector_store %arg10[%c0_107, %c0_108, %c16_109], %53 {strides = array<i32>} : memref<8x8x72xbf16, #tpu.memory_space<vmem>>, vector<8x8x8xbf16>,
    %c1_110 = arith.constant 1 : index
    %c0_111 = arith.constant 0 : index
    %c0_112 = arith.constant 0 : index
    %55 = vector.load %arg8[%c1_110, %c0_111, %c0_112] : memref<10x10x8xbf16, #tpu.memory_space<vmem>>, vector<8x8x8xbf16>
    %c0_113 = arith.constant 0 : index
    %c0_114 = arith.constant 0 : index
    %c24_115 = arith.constant 24 : index
    %56 = vector.load %arg10[%c0_113, %c0_114, %c24_115] : memref<8x8x72xbf16, #tpu.memory_space<vmem>>, vector<8x8x8xbf16>
    tpu.vector_store %arg10[%c0_113, %c0_114, %c24_115], %55 {strides = array<i32>} : memref<8x8x72xbf16, #tpu.memory_space<vmem>>, vector<8x8x8xbf16>,
    %c1_116 = arith.constant 1 : index
    %c1_117 = arith.constant 1 : index
    %c0_118 = arith.constant 0 : index
    %57 = vector.load %arg8[%c1_116, %c1_117, %c0_118] : memref<10x10x8xbf16, #tpu.memory_space<vmem>>, vector<8x8x8xbf16>
    %c0_119 = arith.constant 0 : index
    %c0_120 = arith.constant 0 : index
    %c32_121 = arith.constant 32 : index
    %58 = vector.load %arg10[%c0_119, %c0_120, %c32_121] : memref<8x8x72xbf16, #tpu.memory_space<vmem>>, vector<8x8x8xbf16>
    tpu.vector_store %arg10[%c0_119, %c0_120, %c32_121], %57 {strides = array<i32>} : memref<8x8x72xbf16, #tpu.memory_space<vmem>>, vector<8x8x8xbf16>,
    %c1_122 = arith.constant 1 : index
    %c2_123 = arith.constant 2 : index
    %c0_124 = arith.constant 0 : index
    %59 = vector.load %arg8[%c1_122, %c2_123, %c0_124] : memref<10x10x8xbf16, #tpu.memory_space<vmem>>, vector<8x8x8xbf16>
    %c0_125 = arith.constant 0 : index
    %c0_126 = arith.constant 0 : index
    %c40_127 = arith.constant 40 : index
    %60 = vector.load %arg10[%c0_125, %c0_126, %c40_127] : memref<8x8x72xbf16, #tpu.memory_space<vmem>>, vector<8x8x8xbf16>
    tpu.vector_store %arg10[%c0_125, %c0_126, %c40_127], %59 {strides = array<i32>} : memref<8x8x72xbf16, #tpu.memory_space<vmem>>, vector<8x8x8xbf16>,
    %c2_128 = arith.constant 2 : index
    %c0_129 = arith.constant 0 : index
    %c0_130 = arith.constant 0 : index
    %61 = vector.load %arg8[%c2_128, %c0_129, %c0_130] : memref<10x10x8xbf16, #tpu.memory_space<vmem>>, vector<8x8x8xbf16>
    %c0_131 = arith.constant 0 : index
    %c0_132 = arith.constant 0 : index
    %c48_133 = arith.constant 48 : index
    %62 = vector.load %arg10[%c0_131, %c0_132, %c48_133] : memref<8x8x72xbf16, #tpu.memory_space<vmem>>, vector<8x8x8xbf16>
    tpu.vector_store %arg10[%c0_131, %c0_132, %c48_133], %61 {strides = array<i32>} : memref<8x8x72xbf16, #tpu.memory_space<vmem>>, vector<8x8x8xbf16>,
    %c2_134 = arith.constant 2 : index
    %c1_135 = arith.constant 1 : index
    %c0_136 = arith.constant 0 : index
    %63 = vector.load %arg8[%c2_134, %c1_135, %c0_136] : memref<10x10x8xbf16, #tpu.memory_space<vmem>>, vector<8x8x8xbf16>
    %c0_137 = arith.constant 0 : index
    %c0_138 = arith.constant 0 : index
    %c56_139 = arith.constant 56 : index
    %64 = vector.load %arg10[%c0_137, %c0_138, %c56_139] : memref<8x8x72xbf16, #tpu.memory_space<vmem>>, vector<8x8x8xbf16>
    tpu.vector_store %arg10[%c0_137, %c0_138, %c56_139], %63 {strides = array<i32>} : memref<8x8x72xbf16, #tpu.memory_space<vmem>>, vector<8x8x8xbf16>,
    %c2_140 = arith.constant 2 : index
    %c2_141 = arith.constant 2 : index
    %c0_142 = arith.constant 0 : index
    %65 = vector.load %arg8[%c2_140, %c2_141, %c0_142] : memref<10x10x8xbf16, #tpu.memory_space<vmem>>, vector<8x8x8xbf16>
    %c0_143 = arith.constant 0 : index
    %c0_144 = arith.constant 0 : index
    %c64_145 = arith.constant 64 : index
    %66 = vector.load %arg10[%c0_143, %c0_144, %c64_145] : memref<8x8x72xbf16, #tpu.memory_space<vmem>>, vector<8x8x8xbf16>
    tpu.vector_store %arg10[%c0_143, %c0_144, %c64_145], %65 {strides = array<i32>} : memref<8x8x72xbf16, #tpu.memory_space<vmem>>, vector<8x8x8xbf16>,
    %c0_146 = arith.constant 0 : index
    %c0_147 = arith.constant 0 : index
    %c0_148 = arith.constant 0 : index
    %67 = vector.load %arg10[%c0_146, %c0_147, %c0_148] : memref<8x8x72xbf16, #tpu.memory_space<vmem>>, vector<8x8x72xbf16>
    %68 = vector.shape_cast %67 : vector<8x8x72xbf16> to vector<64x72xbf16>
    %c0_149 = arith.constant 0 : index
    %c0_150 = arith.constant 0 : index
    %69 = vector.load %arg4[%c0_149, %c0_150] : memref<72x8xbf16, #tpu.memory_space<vmem>>, vector<72x8xbf16>
    %cst_151 = arith.constant dense<0.000000e+00> : vector<64x8xf32>
    %70 = tpu.matmul %68, %69, %cst_151 {dimension_numbers = #tpu.dot_dimension_numbers<[1], [0], [0], [1], [0, 0, 1, 1], [], []>} : vector<64x72xbf16>, vector<72x8xbf16>, vector<64x8xf32> -> vector<64x8xf32>
    %c0_152 = arith.constant 0 : index
    %c0_153 = arith.constant 0 : index
    %71 = vector.load %arg5[%c0_152, %c0_153] : memref<1x8xf32, #tpu.memory_space<vmem>>, vector<1x8xf32>
    %72 = vector.broadcast %71 : vector<1x8xf32> to vector<64x8xf32>
    %73 = arith.addf %70, %72 : vector<64x8xf32>
    %c0_154 = arith.constant 0 : index
    %c0_155 = arith.constant 0 : index
    %c0_156 = arith.constant 0 : index
    %c0_157 = arith.constant 0 : index
    %74 = vector.load %arg1[%c0_154, %c0_155, %c0_156, %c0_157] : memref<1x8x8x8xbf16, #tpu.memory_space<vmem>>, vector<1x8x8x8xbf16>
    %75 = vector.shape_cast %74 : vector<1x8x8x8xbf16> to vector<8x8x8xbf16>
    %76 = arith.extf %75 : vector<8x8x8xbf16> to vector<8x8x8xf32>
    %77 = vector.shape_cast %73 : vector<64x8xf32> to vector<8x8x8xf32>
    %78 = arith.addf %77, %76 : vector<8x8x8xf32>
    %cst_158 = arith.constant 0.000000e+00 : f32
    %79 = vector.broadcast %cst_158 : f32 to vector<8x8x8xf32>
    %80 = arith.maximumf %78, %79 : vector<8x8x8xf32>
    %81 = arith.truncf %80 : vector<8x8x8xf32> to vector<8x8x8xbf16>
    %c0_159 = arith.constant 0 : index
    %c0_160 = arith.constant 0 : index
    %c0_161 = arith.constant 0 : index
    %c0_162 = arith.constant 0 : index
    %82 = vector.load %arg6[%c0_159, %c0_160, %c0_161, %c0_162] : memref<1x8x8x8xbf16, #tpu.memory_space<vmem>>, vector<1x8x8x8xbf16>
    %83 = vector.shape_cast %82 : vector<1x8x8x8xbf16> to vector<8x8x8xbf16>
    %84 = vector.shape_cast %81 : vector<8x8x8xbf16> to vector<1x8x8x8xbf16>
    tpu.vector_store %arg6[%c0_159, %c0_160, %c0_161, %c0_162], %84 {strides = array<i32>} : memref<1x8x8x8xbf16, #tpu.memory_space<vmem>>, vector<1x8x8x8xbf16>,
    return
  }
  func.func @transform_0(%arg0: i32) -> (i32, i32, i32, i32) {
    %c0_i32 = arith.constant 0 : i32
    %c0_i32_0 = arith.constant 0 : i32
    %c0_i32_1 = arith.constant 0 : i32
    %c0_i32_2 = arith.constant 0 : i32
    return %arg0, %c0_i32, %c0_i32_0, %c0_i32_1 : i32, i32, i32, i32
  }
  func.func @transform_1(%arg0: i32) -> (i32, i32) {
    %c0_i32 = arith.constant 0 : i32
    %c0_i32_0 = arith.constant 0 : i32
    %c0_i32_1 = arith.constant 0 : i32
    return %c0_i32, %c0_i32_0 : i32, i32
  }
  func.func @transform_2(%arg0: i32) -> (i32, i32) {
    %c0_i32 = arith.constant 0 : i32
    %c0_i32_0 = arith.constant 0 : i32
    %c0_i32_1 = arith.constant 0 : i32
    return %c0_i32, %c0_i32_0 : i32, i32
  }
  func.func @transform_3(%arg0: i32) -> (i32, i32) {
    %c0_i32 = arith.constant 0 : i32
    %c0_i32_0 = arith.constant 0 : i32
    %c0_i32_1 = arith.constant 0 : i32
    return %c0_i32, %c0_i32_0 : i32, i32
  }
  func.func @transform_4(%arg0: i32) -> (i32, i32) {
    %c0_i32 = arith.constant 0 : i32
    %c0_i32_0 = arith.constant 0 : i32
    %c0_i32_1 = arith.constant 0 : i32
    return %c0_i32, %c0_i32_0 : i32, i32
  }
  func.func @transform_5(%arg0: i32) -> (i32, i32, i32, i32) {
    %c0_i32 = arith.constant 0 : i32
    %c0_i32_0 = arith.constant 0 : i32
    %c0_i32_1 = arith.constant 0 : i32
    %c0_i32_2 = arith.constant 0 : i32
    return %arg0, %c0_i32, %c0_i32_0, %c0_i32_1 : i32, i32, i32, i32
  }
}

module attributes {stable_mosaic.version = 11 : i64} {
  func.func @_rep_kernel(%arg0: i32, %arg1: memref<1x4x9x9x4xbf16, #tpu.memory_space<vmem>>, %arg2: memref<36x8xbf16, #tpu.memory_space<vmem>>, %arg3: memref<1x8xf32, #tpu.memory_space<vmem>>, %arg4: memref<72x8xbf16, #tpu.memory_space<vmem>>, %arg5: memref<1x8xf32, #tpu.memory_space<vmem>>, %arg6: memref<4x8xbf16, #tpu.memory_space<vmem>>, %arg7: memref<1x8x8x8xbf16, #tpu.memory_space<vmem>>, %arg8: memref<10x10x8xbf16, #tpu.memory_space<vmem>>, %arg9: memref<8x8x36xbf16, #tpu.memory_space<vmem>>, %arg10: memref<8x8x72xbf16, #tpu.memory_space<vmem>>) attributes {dimension_semantics = [#tpu.dimension_semantics<parallel>], iteration_bounds = array<i64: 2>, scalar_prefetch = 0 : i64, scratch_operands = 3 : i64, tpu.core_type = #tpu.core_type<tc>, window_params = [{transform_indices = @transform_0, window_bounds = array<i64: 1, 4, 9, 9, 4>}, {pipeline_mode = #tpu.pipeline_mode<synchronous>, transform_indices = @transform_1, window_bounds = array<i64: 36, 8>}, {pipeline_mode = #tpu.pipeline_mode<synchronous>, transform_indices = @transform_2, window_bounds = array<i64: 1, 8>}, {pipeline_mode = #tpu.pipeline_mode<synchronous>, transform_indices = @transform_3, window_bounds = array<i64: 72, 8>}, {pipeline_mode = #tpu.pipeline_mode<synchronous>, transform_indices = @transform_4, window_bounds = array<i64: 1, 8>}, {pipeline_mode = #tpu.pipeline_mode<synchronous>, transform_indices = @transform_5, window_bounds = array<i64: 4, 8>}, {transform_indices = @transform_6, window_bounds = array<i64: 1, 8, 8, 8>}]} {
    %c0 = arith.constant 0 : index
    %c0_0 = arith.constant 0 : index
    %c0_1 = arith.constant 0 : index
    %c0_2 = arith.constant 0 : index
    %c0_3 = arith.constant 0 : index
    %0 = vector.load %arg1[%c0, %c0_0, %c0_1, %c0_2, %c0_3] : memref<1x4x9x9x4xbf16, #tpu.memory_space<vmem>>, vector<1x4x9x9x4xbf16>
    %1 = vector.shape_cast %0 : vector<1x4x9x9x4xbf16> to vector<4x9x9x4xbf16>
    %2 = vector.extract_strided_slice %1 {offsets = [0, 0, 0, 0], sizes = [1, 8, 8, 4], strides = [1, 1, 1, 1]} : vector<4x9x9x4xbf16> to vector<1x8x8x4xbf16>
    %3 = vector.shape_cast %2 : vector<1x8x8x4xbf16> to vector<8x8x4xbf16>
    %c0_4 = arith.constant 0 : index
    %c0_5 = arith.constant 0 : index
    %c0_6 = arith.constant 0 : index
    %4 = vector.load %arg9[%c0_4, %c0_5, %c0_6] : memref<8x8x36xbf16, #tpu.memory_space<vmem>>, vector<8x8x4xbf16>
    tpu.vector_store %arg9[%c0_4, %c0_5, %c0_6], %3 {strides = array<i32>} : memref<8x8x36xbf16, #tpu.memory_space<vmem>>, vector<8x8x4xbf16>,
    %5 = vector.extract_strided_slice %1 {offsets = [1, 0, 0, 0], sizes = [1, 8, 8, 4], strides = [1, 1, 1, 1]} : vector<4x9x9x4xbf16> to vector<1x8x8x4xbf16>
    %6 = vector.shape_cast %5 : vector<1x8x8x4xbf16> to vector<8x8x4xbf16>
    %c0_7 = arith.constant 0 : index
    %c0_8 = arith.constant 0 : index
    %c4 = arith.constant 4 : index
    %7 = vector.load %arg9[%c0_7, %c0_8, %c4] : memref<8x8x36xbf16, #tpu.memory_space<vmem>>, vector<8x8x4xbf16>
    tpu.vector_store %arg9[%c0_7, %c0_8, %c4], %6 {strides = array<i32>} : memref<8x8x36xbf16, #tpu.memory_space<vmem>>, vector<8x8x4xbf16>,
    %8 = vector.extract_strided_slice %1 {offsets = [0, 0, 1, 0], sizes = [1, 8, 8, 4], strides = [1, 1, 1, 1]} : vector<4x9x9x4xbf16> to vector<1x8x8x4xbf16>
    %9 = vector.shape_cast %8 : vector<1x8x8x4xbf16> to vector<8x8x4xbf16>
    %c0_9 = arith.constant 0 : index
    %c0_10 = arith.constant 0 : index
    %c8 = arith.constant 8 : index
    %10 = vector.load %arg9[%c0_9, %c0_10, %c8] : memref<8x8x36xbf16, #tpu.memory_space<vmem>>, vector<8x8x4xbf16>
    tpu.vector_store %arg9[%c0_9, %c0_10, %c8], %9 {strides = array<i32>} : memref<8x8x36xbf16, #tpu.memory_space<vmem>>, vector<8x8x4xbf16>,
    %11 = vector.extract_strided_slice %1 {offsets = [2, 0, 0, 0], sizes = [1, 8, 8, 4], strides = [1, 1, 1, 1]} : vector<4x9x9x4xbf16> to vector<1x8x8x4xbf16>
    %12 = vector.shape_cast %11 : vector<1x8x8x4xbf16> to vector<8x8x4xbf16>
    %c0_11 = arith.constant 0 : index
    %c0_12 = arith.constant 0 : index
    %c12 = arith.constant 12 : index
    %13 = vector.load %arg9[%c0_11, %c0_12, %c12] : memref<8x8x36xbf16, #tpu.memory_space<vmem>>, vector<8x8x4xbf16>
    tpu.vector_store %arg9[%c0_11, %c0_12, %c12], %12 {strides = array<i32>} : memref<8x8x36xbf16, #tpu.memory_space<vmem>>, vector<8x8x4xbf16>,
    %14 = vector.extract_strided_slice %1 {offsets = [3, 0, 0, 0], sizes = [1, 8, 8, 4], strides = [1, 1, 1, 1]} : vector<4x9x9x4xbf16> to vector<1x8x8x4xbf16>
    %15 = vector.shape_cast %14 : vector<1x8x8x4xbf16> to vector<8x8x4xbf16>
    %c0_13 = arith.constant 0 : index
    %c0_14 = arith.constant 0 : index
    %c16 = arith.constant 16 : index
    %16 = vector.load %arg9[%c0_13, %c0_14, %c16] : memref<8x8x36xbf16, #tpu.memory_space<vmem>>, vector<8x8x4xbf16>
    tpu.vector_store %arg9[%c0_13, %c0_14, %c16], %15 {strides = array<i32>} : memref<8x8x36xbf16, #tpu.memory_space<vmem>>, vector<8x8x4xbf16>,
    %17 = vector.extract_strided_slice %1 {offsets = [2, 0, 1, 0], sizes = [1, 8, 8, 4], strides = [1, 1, 1, 1]} : vector<4x9x9x4xbf16> to vector<1x8x8x4xbf16>
    %18 = vector.shape_cast %17 : vector<1x8x8x4xbf16> to vector<8x8x4xbf16>
    %c0_15 = arith.constant 0 : index
    %c0_16 = arith.constant 0 : index
    %c20 = arith.constant 20 : index
    %19 = vector.load %arg9[%c0_15, %c0_16, %c20] : memref<8x8x36xbf16, #tpu.memory_space<vmem>>, vector<8x8x4xbf16>
    tpu.vector_store %arg9[%c0_15, %c0_16, %c20], %18 {strides = array<i32>} : memref<8x8x36xbf16, #tpu.memory_space<vmem>>, vector<8x8x4xbf16>,
    %20 = vector.extract_strided_slice %1 {offsets = [0, 1, 0, 0], sizes = [1, 8, 8, 4], strides = [1, 1, 1, 1]} : vector<4x9x9x4xbf16> to vector<1x8x8x4xbf16>
    %21 = vector.shape_cast %20 : vector<1x8x8x4xbf16> to vector<8x8x4xbf16>
    %c0_17 = arith.constant 0 : index
    %c0_18 = arith.constant 0 : index
    %c24 = arith.constant 24 : index
    %22 = vector.load %arg9[%c0_17, %c0_18, %c24] : memref<8x8x36xbf16, #tpu.memory_space<vmem>>, vector<8x8x4xbf16>
    tpu.vector_store %arg9[%c0_17, %c0_18, %c24], %21 {strides = array<i32>} : memref<8x8x36xbf16, #tpu.memory_space<vmem>>, vector<8x8x4xbf16>,
    %23 = vector.extract_strided_slice %1 {offsets = [1, 1, 0, 0], sizes = [1, 8, 8, 4], strides = [1, 1, 1, 1]} : vector<4x9x9x4xbf16> to vector<1x8x8x4xbf16>
    %24 = vector.shape_cast %23 : vector<1x8x8x4xbf16> to vector<8x8x4xbf16>
    %c0_19 = arith.constant 0 : index
    %c0_20 = arith.constant 0 : index
    %c28 = arith.constant 28 : index
    %25 = vector.load %arg9[%c0_19, %c0_20, %c28] : memref<8x8x36xbf16, #tpu.memory_space<vmem>>, vector<8x8x4xbf16>
    tpu.vector_store %arg9[%c0_19, %c0_20, %c28], %24 {strides = array<i32>} : memref<8x8x36xbf16, #tpu.memory_space<vmem>>, vector<8x8x4xbf16>,
    %26 = vector.extract_strided_slice %1 {offsets = [0, 1, 1, 0], sizes = [1, 8, 8, 4], strides = [1, 1, 1, 1]} : vector<4x9x9x4xbf16> to vector<1x8x8x4xbf16>
    %27 = vector.shape_cast %26 : vector<1x8x8x4xbf16> to vector<8x8x4xbf16>
    %c0_21 = arith.constant 0 : index
    %c0_22 = arith.constant 0 : index
    %c32 = arith.constant 32 : index
    %28 = vector.load %arg9[%c0_21, %c0_22, %c32] : memref<8x8x36xbf16, #tpu.memory_space<vmem>>, vector<8x8x4xbf16>
    tpu.vector_store %arg9[%c0_21, %c0_22, %c32], %27 {strides = array<i32>} : memref<8x8x36xbf16, #tpu.memory_space<vmem>>, vector<8x8x4xbf16>,
    %c0_23 = arith.constant 0 : index
    %c0_24 = arith.constant 0 : index
    %c0_25 = arith.constant 0 : index
    %29 = vector.load %arg9[%c0_23, %c0_24, %c0_25] : memref<8x8x36xbf16, #tpu.memory_space<vmem>>, vector<8x8x36xbf16>
    %30 = vector.shape_cast %29 : vector<8x8x36xbf16> to vector<64x36xbf16>
    %c0_26 = arith.constant 0 : index
    %c0_27 = arith.constant 0 : index
    %31 = vector.load %arg2[%c0_26, %c0_27] : memref<36x8xbf16, #tpu.memory_space<vmem>>, vector<36x8xbf16>
    %cst = arith.constant dense<0.000000e+00> : vector<64x8xf32>
    %32 = tpu.matmul %30, %31, %cst {dimension_numbers = #tpu.dot_dimension_numbers<[1], [0], [0], [1], [0, 0, 1, 1], [], []>} : vector<64x36xbf16>, vector<36x8xbf16>, vector<64x8xf32> -> vector<64x8xf32>
    %c0_28 = arith.constant 0 : index
    %c0_29 = arith.constant 0 : index
    %33 = vector.load %arg3[%c0_28, %c0_29] : memref<1x8xf32, #tpu.memory_space<vmem>>, vector<1x8xf32>
    %34 = vector.broadcast %33 : vector<1x8xf32> to vector<64x8xf32>
    %35 = arith.addf %32, %34 : vector<64x8xf32>
    %cst_30 = arith.constant 0.000000e+00 : f32
    %36 = vector.broadcast %cst_30 : f32 to vector<64x8xf32>
    %37 = arith.maximumf %35, %36 : vector<64x8xf32>
    %38 = arith.truncf %37 : vector<64x8xf32> to vector<64x8xbf16>
    %cst_31 = arith.constant 0.000000e+00 : bf16
    %39 = vector.broadcast %cst_31 : bf16 to vector<1x10x8xbf16>
    %c0_32 = arith.constant 0 : index
    %c0_33 = arith.constant 0 : index
    %c0_34 = arith.constant 0 : index
    %40 = vector.load %arg8[%c0_32, %c0_33, %c0_34] : memref<10x10x8xbf16, #tpu.memory_space<vmem>>, vector<1x10x8xbf16>
    tpu.vector_store %arg8[%c0_32, %c0_33, %c0_34], %39 {strides = array<i32>} : memref<10x10x8xbf16, #tpu.memory_space<vmem>>, vector<1x10x8xbf16>,
    %cst_35 = arith.constant 0.000000e+00 : bf16
    %41 = vector.broadcast %cst_35 : bf16 to vector<1x10x8xbf16>
    %c9 = arith.constant 9 : index
    %c0_36 = arith.constant 0 : index
    %c0_37 = arith.constant 0 : index
    %42 = vector.load %arg8[%c9, %c0_36, %c0_37] : memref<10x10x8xbf16, #tpu.memory_space<vmem>>, vector<1x10x8xbf16>
    tpu.vector_store %arg8[%c9, %c0_36, %c0_37], %41 {strides = array<i32>} : memref<10x10x8xbf16, #tpu.memory_space<vmem>>, vector<1x10x8xbf16>,
    %cst_38 = arith.constant 0.000000e+00 : bf16
    %43 = vector.broadcast %cst_38 : bf16 to vector<10x1x8xbf16>
    %c0_39 = arith.constant 0 : index
    %c0_40 = arith.constant 0 : index
    %c0_41 = arith.constant 0 : index
    %44 = vector.load %arg8[%c0_39, %c0_40, %c0_41] : memref<10x10x8xbf16, #tpu.memory_space<vmem>>, vector<10x1x8xbf16>
    tpu.vector_store %arg8[%c0_39, %c0_40, %c0_41], %43 {strides = array<i32>} : memref<10x10x8xbf16, #tpu.memory_space<vmem>>, vector<10x1x8xbf16>,
    %cst_42 = arith.constant 0.000000e+00 : bf16
    %45 = vector.broadcast %cst_42 : bf16 to vector<10x1x8xbf16>
    %c0_43 = arith.constant 0 : index
    %c9_44 = arith.constant 9 : index
    %c0_45 = arith.constant 0 : index
    %46 = vector.load %arg8[%c0_43, %c9_44, %c0_45] : memref<10x10x8xbf16, #tpu.memory_space<vmem>>, vector<10x1x8xbf16>
    tpu.vector_store %arg8[%c0_43, %c9_44, %c0_45], %45 {strides = array<i32>} : memref<10x10x8xbf16, #tpu.memory_space<vmem>>, vector<10x1x8xbf16>,
    %47 = vector.shape_cast %38 : vector<64x8xbf16> to vector<8x8x8xbf16>
    %c1 = arith.constant 1 : index
    %c1_46 = arith.constant 1 : index
    %c0_47 = arith.constant 0 : index
    %48 = vector.load %arg8[%c1, %c1_46, %c0_47] : memref<10x10x8xbf16, #tpu.memory_space<vmem>>, vector<8x8x8xbf16>
    tpu.vector_store %arg8[%c1, %c1_46, %c0_47], %47 {strides = array<i32>} : memref<10x10x8xbf16, #tpu.memory_space<vmem>>, vector<8x8x8xbf16>,
    %c0_48 = arith.constant 0 : index
    %c0_49 = arith.constant 0 : index
    %c0_50 = arith.constant 0 : index
    %49 = vector.load %arg8[%c0_48, %c0_49, %c0_50] : memref<10x10x8xbf16, #tpu.memory_space<vmem>>, vector<8x8x8xbf16>
    %c0_51 = arith.constant 0 : index
    %c0_52 = arith.constant 0 : index
    %c0_53 = arith.constant 0 : index
    %50 = vector.load %arg10[%c0_51, %c0_52, %c0_53] : memref<8x8x72xbf16, #tpu.memory_space<vmem>>, vector<8x8x8xbf16>
    tpu.vector_store %arg10[%c0_51, %c0_52, %c0_53], %49 {strides = array<i32>} : memref<8x8x72xbf16, #tpu.memory_space<vmem>>, vector<8x8x8xbf16>,
    %c0_54 = arith.constant 0 : index
    %c1_55 = arith.constant 1 : index
    %c0_56 = arith.constant 0 : index
    %51 = vector.load %arg8[%c0_54, %c1_55, %c0_56] : memref<10x10x8xbf16, #tpu.memory_space<vmem>>, vector<8x8x8xbf16>
    %c0_57 = arith.constant 0 : index
    %c0_58 = arith.constant 0 : index
    %c8_59 = arith.constant 8 : index
    %52 = vector.load %arg10[%c0_57, %c0_58, %c8_59] : memref<8x8x72xbf16, #tpu.memory_space<vmem>>, vector<8x8x8xbf16>
    tpu.vector_store %arg10[%c0_57, %c0_58, %c8_59], %51 {strides = array<i32>} : memref<8x8x72xbf16, #tpu.memory_space<vmem>>, vector<8x8x8xbf16>,
    %c0_60 = arith.constant 0 : index
    %c2 = arith.constant 2 : index
    %c0_61 = arith.constant 0 : index
    %53 = vector.load %arg8[%c0_60, %c2, %c0_61] : memref<10x10x8xbf16, #tpu.memory_space<vmem>>, vector<8x8x8xbf16>
    %c0_62 = arith.constant 0 : index
    %c0_63 = arith.constant 0 : index
    %c16_64 = arith.constant 16 : index
    %54 = vector.load %arg10[%c0_62, %c0_63, %c16_64] : memref<8x8x72xbf16, #tpu.memory_space<vmem>>, vector<8x8x8xbf16>
    tpu.vector_store %arg10[%c0_62, %c0_63, %c16_64], %53 {strides = array<i32>} : memref<8x8x72xbf16, #tpu.memory_space<vmem>>, vector<8x8x8xbf16>,
    %c1_65 = arith.constant 1 : index
    %c0_66 = arith.constant 0 : index
    %c0_67 = arith.constant 0 : index
    %55 = vector.load %arg8[%c1_65, %c0_66, %c0_67] : memref<10x10x8xbf16, #tpu.memory_space<vmem>>, vector<8x8x8xbf16>
    %c0_68 = arith.constant 0 : index
    %c0_69 = arith.constant 0 : index
    %c24_70 = arith.constant 24 : index
    %56 = vector.load %arg10[%c0_68, %c0_69, %c24_70] : memref<8x8x72xbf16, #tpu.memory_space<vmem>>, vector<8x8x8xbf16>
    tpu.vector_store %arg10[%c0_68, %c0_69, %c24_70], %55 {strides = array<i32>} : memref<8x8x72xbf16, #tpu.memory_space<vmem>>, vector<8x8x8xbf16>,
    %c1_71 = arith.constant 1 : index
    %c1_72 = arith.constant 1 : index
    %c0_73 = arith.constant 0 : index
    %57 = vector.load %arg8[%c1_71, %c1_72, %c0_73] : memref<10x10x8xbf16, #tpu.memory_space<vmem>>, vector<8x8x8xbf16>
    %c0_74 = arith.constant 0 : index
    %c0_75 = arith.constant 0 : index
    %c32_76 = arith.constant 32 : index
    %58 = vector.load %arg10[%c0_74, %c0_75, %c32_76] : memref<8x8x72xbf16, #tpu.memory_space<vmem>>, vector<8x8x8xbf16>
    tpu.vector_store %arg10[%c0_74, %c0_75, %c32_76], %57 {strides = array<i32>} : memref<8x8x72xbf16, #tpu.memory_space<vmem>>, vector<8x8x8xbf16>,
    %c1_77 = arith.constant 1 : index
    %c2_78 = arith.constant 2 : index
    %c0_79 = arith.constant 0 : index
    %59 = vector.load %arg8[%c1_77, %c2_78, %c0_79] : memref<10x10x8xbf16, #tpu.memory_space<vmem>>, vector<8x8x8xbf16>
    %c0_80 = arith.constant 0 : index
    %c0_81 = arith.constant 0 : index
    %c40 = arith.constant 40 : index
    %60 = vector.load %arg10[%c0_80, %c0_81, %c40] : memref<8x8x72xbf16, #tpu.memory_space<vmem>>, vector<8x8x8xbf16>
    tpu.vector_store %arg10[%c0_80, %c0_81, %c40], %59 {strides = array<i32>} : memref<8x8x72xbf16, #tpu.memory_space<vmem>>, vector<8x8x8xbf16>,
    %c2_82 = arith.constant 2 : index
    %c0_83 = arith.constant 0 : index
    %c0_84 = arith.constant 0 : index
    %61 = vector.load %arg8[%c2_82, %c0_83, %c0_84] : memref<10x10x8xbf16, #tpu.memory_space<vmem>>, vector<8x8x8xbf16>
    %c0_85 = arith.constant 0 : index
    %c0_86 = arith.constant 0 : index
    %c48 = arith.constant 48 : index
    %62 = vector.load %arg10[%c0_85, %c0_86, %c48] : memref<8x8x72xbf16, #tpu.memory_space<vmem>>, vector<8x8x8xbf16>
    tpu.vector_store %arg10[%c0_85, %c0_86, %c48], %61 {strides = array<i32>} : memref<8x8x72xbf16, #tpu.memory_space<vmem>>, vector<8x8x8xbf16>,
    %c2_87 = arith.constant 2 : index
    %c1_88 = arith.constant 1 : index
    %c0_89 = arith.constant 0 : index
    %63 = vector.load %arg8[%c2_87, %c1_88, %c0_89] : memref<10x10x8xbf16, #tpu.memory_space<vmem>>, vector<8x8x8xbf16>
    %c0_90 = arith.constant 0 : index
    %c0_91 = arith.constant 0 : index
    %c56 = arith.constant 56 : index
    %64 = vector.load %arg10[%c0_90, %c0_91, %c56] : memref<8x8x72xbf16, #tpu.memory_space<vmem>>, vector<8x8x8xbf16>
    tpu.vector_store %arg10[%c0_90, %c0_91, %c56], %63 {strides = array<i32>} : memref<8x8x72xbf16, #tpu.memory_space<vmem>>, vector<8x8x8xbf16>,
    %c2_92 = arith.constant 2 : index
    %c2_93 = arith.constant 2 : index
    %c0_94 = arith.constant 0 : index
    %65 = vector.load %arg8[%c2_92, %c2_93, %c0_94] : memref<10x10x8xbf16, #tpu.memory_space<vmem>>, vector<8x8x8xbf16>
    %c0_95 = arith.constant 0 : index
    %c0_96 = arith.constant 0 : index
    %c64 = arith.constant 64 : index
    %66 = vector.load %arg10[%c0_95, %c0_96, %c64] : memref<8x8x72xbf16, #tpu.memory_space<vmem>>, vector<8x8x8xbf16>
    tpu.vector_store %arg10[%c0_95, %c0_96, %c64], %65 {strides = array<i32>} : memref<8x8x72xbf16, #tpu.memory_space<vmem>>, vector<8x8x8xbf16>,
    %c0_97 = arith.constant 0 : index
    %c0_98 = arith.constant 0 : index
    %c0_99 = arith.constant 0 : index
    %67 = vector.load %arg10[%c0_97, %c0_98, %c0_99] : memref<8x8x72xbf16, #tpu.memory_space<vmem>>, vector<8x8x72xbf16>
    %68 = vector.shape_cast %67 : vector<8x8x72xbf16> to vector<64x72xbf16>
    %c0_100 = arith.constant 0 : index
    %c0_101 = arith.constant 0 : index
    %69 = vector.load %arg4[%c0_100, %c0_101] : memref<72x8xbf16, #tpu.memory_space<vmem>>, vector<72x8xbf16>
    %cst_102 = arith.constant dense<0.000000e+00> : vector<64x8xf32>
    %70 = tpu.matmul %68, %69, %cst_102 {dimension_numbers = #tpu.dot_dimension_numbers<[1], [0], [0], [1], [0, 0, 1, 1], [], []>} : vector<64x72xbf16>, vector<72x8xbf16>, vector<64x8xf32> -> vector<64x8xf32>
    %c0_103 = arith.constant 0 : index
    %c0_104 = arith.constant 0 : index
    %71 = vector.load %arg5[%c0_103, %c0_104] : memref<1x8xf32, #tpu.memory_space<vmem>>, vector<1x8xf32>
    %72 = vector.broadcast %71 : vector<1x8xf32> to vector<64x8xf32>
    %73 = arith.addf %70, %72 : vector<64x8xf32>
    %74 = vector.extract_strided_slice %1 {offsets = [3, 0, 0, 0], sizes = [1, 8, 8, 4], strides = [1, 1, 1, 1]} : vector<4x9x9x4xbf16> to vector<1x8x8x4xbf16>
    %75 = vector.shape_cast %74 : vector<1x8x8x4xbf16> to vector<8x8x4xbf16>
    %76 = vector.shape_cast %75 : vector<8x8x4xbf16> to vector<64x4xbf16>
    %c0_105 = arith.constant 0 : index
    %c0_106 = arith.constant 0 : index
    %77 = vector.load %arg6[%c0_105, %c0_106] : memref<4x8xbf16, #tpu.memory_space<vmem>>, vector<4x8xbf16>
    %cst_107 = arith.constant dense<0.000000e+00> : vector<64x8xf32>
    %78 = tpu.matmul %76, %77, %cst_107 {dimension_numbers = #tpu.dot_dimension_numbers<[1], [0], [0], [1], [0, 0, 1, 1], [], []>} : vector<64x4xbf16>, vector<4x8xbf16>, vector<64x8xf32> -> vector<64x8xf32>
    %79 = vector.shape_cast %78 : vector<64x8xf32> to vector<8x8x8xf32>
    %80 = vector.shape_cast %73 : vector<64x8xf32> to vector<8x8x8xf32>
    %81 = arith.addf %80, %79 : vector<8x8x8xf32>
    %cst_108 = arith.constant 0.000000e+00 : f32
    %82 = vector.broadcast %cst_108 : f32 to vector<8x8x8xf32>
    %83 = arith.maximumf %81, %82 : vector<8x8x8xf32>
    %84 = arith.truncf %83 : vector<8x8x8xf32> to vector<8x8x8xbf16>
    %c0_109 = arith.constant 0 : index
    %c0_110 = arith.constant 0 : index
    %c0_111 = arith.constant 0 : index
    %c0_112 = arith.constant 0 : index
    %85 = vector.load %arg7[%c0_109, %c0_110, %c0_111, %c0_112] : memref<1x8x8x8xbf16, #tpu.memory_space<vmem>>, vector<1x8x8x8xbf16>
    %86 = vector.shape_cast %85 : vector<1x8x8x8xbf16> to vector<8x8x8xbf16>
    %87 = vector.shape_cast %84 : vector<8x8x8xbf16> to vector<1x8x8x8xbf16>
    tpu.vector_store %arg7[%c0_109, %c0_110, %c0_111, %c0_112], %87 {strides = array<i32>} : memref<1x8x8x8xbf16, #tpu.memory_space<vmem>>, vector<1x8x8x8xbf16>,
    return
  }
  func.func @transform_0(%arg0: i32) -> (i32, i32, i32, i32, i32) {
    %c0_i32 = arith.constant 0 : i32
    %c0_i32_0 = arith.constant 0 : i32
    %c0_i32_1 = arith.constant 0 : i32
    %c0_i32_2 = arith.constant 0 : i32
    %c0_i32_3 = arith.constant 0 : i32
    return %arg0, %c0_i32, %c0_i32_0, %c0_i32_1, %c0_i32_2 : i32, i32, i32, i32, i32
  }
  func.func @transform_1(%arg0: i32) -> (i32, i32) {
    %c0_i32 = arith.constant 0 : i32
    %c0_i32_0 = arith.constant 0 : i32
    %c0_i32_1 = arith.constant 0 : i32
    return %c0_i32, %c0_i32_0 : i32, i32
  }
  func.func @transform_2(%arg0: i32) -> (i32, i32) {
    %c0_i32 = arith.constant 0 : i32
    %c0_i32_0 = arith.constant 0 : i32
    %c0_i32_1 = arith.constant 0 : i32
    return %c0_i32, %c0_i32_0 : i32, i32
  }
  func.func @transform_3(%arg0: i32) -> (i32, i32) {
    %c0_i32 = arith.constant 0 : i32
    %c0_i32_0 = arith.constant 0 : i32
    %c0_i32_1 = arith.constant 0 : i32
    return %c0_i32, %c0_i32_0 : i32, i32
  }
  func.func @transform_4(%arg0: i32) -> (i32, i32) {
    %c0_i32 = arith.constant 0 : i32
    %c0_i32_0 = arith.constant 0 : i32
    %c0_i32_1 = arith.constant 0 : i32
    return %c0_i32, %c0_i32_0 : i32, i32
  }
  func.func @transform_5(%arg0: i32) -> (i32, i32) {
    %c0_i32 = arith.constant 0 : i32
    %c0_i32_0 = arith.constant 0 : i32
    %c0_i32_1 = arith.constant 0 : i32
    return %c0_i32, %c0_i32_0 : i32, i32
  }
  func.func @transform_6(%arg0: i32) -> (i32, i32, i32, i32) {
    %c0_i32 = arith.constant 0 : i32
    %c0_i32_0 = arith.constant 0 : i32
    %c0_i32_1 = arith.constant 0 : i32
    %c0_i32_2 = arith.constant 0 : i32
    return %arg0, %c0_i32, %c0_i32_0, %c0_i32_1 : i32, i32, i32, i32
  }
}

</mosaic_0001>

<llo_original>
// kernel: a_call__.2
$region0: #{a_call__.2}
  #allocation0 [shape = 'u32[]', space=smem, size = 0x4, offset = 0x4, fixed_abs, tag = 'smem constant byte address 0x4 - core index']
  #allocation1 [shape = 'u32[144,128]{1,0:T(1,128)}', space=vmem, size = 0x12000, scoped, tag = 'internal scratch']
  #allocation2 [shape = 'bf16[10,10,8]{2,1,0:T(8,128)(2,1)}', space=vmem, size = 0xa000, scoped, tag = 'scratch operand']
  #allocation3 [shape = 'bf16[8,8,36]{2,1,0:T(8,128)(2,1)}', space=vmem, size = 0x4000, scoped, tag = 'scratch operand']
  #allocation4 [shape = 'bf16[8,8,72]{2,1,0:T(8,128)(2,1)}', space=vmem, size = 0x4000, scoped, tag = 'scratch operand']
  %s0 = inlined_call_operand.vmem [shape: bf16[2,4,9,9,4], index: 0, kind: input, shape index: {}]
  %s1 = inlined_call_operand.vmem [shape: bf16[36,8], index: 1, kind: input, shape index: {}]
  %s2 = inlined_call_operand.vmem [shape: f32[1,8], index: 2, kind: input, shape index: {}, may-alias: {2,4}]
  %s3 = inlined_call_operand.vmem [shape: bf16[72,8], index: 3, kind: input, shape index: {}]
  %s4 = inlined_call_operand.vmem [shape: f32[1,8], index: 4, kind: input, shape index: {}, may-alias: {2,4}]
  %s5 = inlined_call_operand.vmem [shape: bf16[4,8], index: 5, kind: input, shape index: {}]
  %s6 = inlined_call_operand.vmem [shape: bf16[2,8,8,8], index: 6, kind: output, shape index: {}]
  %s7 = sld [smem:[#allocation0]]
  $region57: #{a_call__.2} parent=0
    _
  %s9 = ssub.s32 1, %s7
  %s10 = scalar_select 0, %s9, %s7
  loop: start=0, step=1, limit=4
  $region2: #{a_call__.2} parent=0 // loop_pre_header
    _
  $region3: #{a_call__.2} parent=0 // loop_header
    %s12 = sphi 0, %s16
    %p13 = scmp.ge.s32.totalorder %s12, 4
    %s22 = sphi 0, %s24
    %s25 = sphi 0, %s22
    %s26 = sphi 0, %s25
    %s42 = sphi 0, %s26
    %s46 = sphi 0, %s46
    %s48 = sphi 0, %s46
    %s49 = sphi 0, %s48
    %s63 = sphi 0, %s49
    %s67 = sphi 0, %s67
    %s69 = sphi 0, %s67
    %s70 = sphi 0, %s69
    %s84 = sphi 0, %s70
    %s88 = sphi 0, %s88
    %s90 = sphi 0, %s88
    %s91 = sphi 0, %s90
    %s105 = sphi 0, %s91
    %s109 = sphi 0, %s109
    %s111 = sphi 0, %s109
    %s112 = sphi 0, %s111
    %s126 = sphi 0, %s112
    %s130 = sphi 0, %s130
    %s132 = sphi 0, %s130
    %s133 = sphi 0, %s132
    %s147 = sphi 0, %s133
    %s153 = sphi 0, %s155
    %s156 = sphi 0, %s153
    %s157 = sphi 0, %s156
    %s173 = sphi 0, %s157
  $region4: #{a_call__.2} parent=0 // loop_header_branch
    %15 = sbr.rel (%p13) target = $region8
  $region5: #{a_call__.2} parent=0 // loop_body
    %s17 = ssub.s32 %s12, 1
    %s18 = ssub.s32 %s12, 2
    %s19 = sadd.s32 %s12, 1
    %s20 = ssub.s32 %s12, %s19
    %p21 = scmp.eq.s32.totalorder %s20, 0
    %s23 = sadd.s32 %s22, 1
    %s24 = scalar_select %p21, %s22, %s23
    %p27 = pneg %p21
    %p28 = scmp.eq.s32.totalorder %s12, 1
    %p29 = por %p27, %p28
    %p30 = scmp.ne.s32.totalorder %s22, %s25
    %p31 = scmp.eq.s32.totalorder %s12, 0
    %p32 = por %p30, %p31
    %p33 = scmp.ne.s32.totalorder %s22, %s25
    %p34 = scmp.eq.s32.totalorder %s17, 1
    %p35 = por %p33, %p34
    %p36 = scmp.ne.s32.totalorder %s25, %s26
    %p37 = scmp.eq.s32.totalorder %s17, 0
    %p38 = por %p36, %p37
    %p39 = scmp.ne.s32.totalorder %s25, %s26
    %p40 = scmp.eq.s32.totalorder %s18, 1
    %p41 = por %p39, %p40
    %p43 = scmp.ne.s32.totalorder %s26, %s42
    %p44 = scmp.eq.s32.totalorder %s18, 0
    %p45 = por %p43, %p44
    %s47 = sadd.s32 %s46, 1
    %p50 = scmp.eq.s32.totalorder %s12, 1
    %p51 = scmp.ne.s32.totalorder %s46, %s48
    %p52 = scmp.eq.s32.totalorder %s12, 0
    %p53 = por %p51, %p52
    %p54 = scmp.ne.s32.totalorder %s46, %s48
    %p55 = scmp.eq.s32.totalorder %s17, 1
    %p56 = por %p54, %p55
    %p57 = scmp.ne.s32.totalorder %s48, %s49
    %p58 = scmp.eq.s32.totalorder %s17, 0
    %p59 = por %p57, %p58
    %p60 = scmp.ne.s32.totalorder %s48, %s49
    %p61 = scmp.eq.s32.totalorder %s18, 1
    %p62 = por %p60, %p61
    %p64 = scmp.ne.s32.totalorder %s49, %s63
    %p65 = scmp.eq.s32.totalorder %s18, 0
    %p66 = por %p64, %p65
    %s68 = sadd.s32 %s67, 1
    %p71 = scmp.eq.s32.totalorder %s12, 1
    %p72 = scmp.ne.s32.totalorder %s67, %s69
    %p73 = scmp.eq.s32.totalorder %s12, 0
    %p74 = por %p72, %p73
    %p75 = scmp.ne.s32.totalorder %s67, %s69
    %p76 = scmp.eq.s32.totalorder %s17, 1
    %p77 = por %p75, %p76
    %p78 = scmp.ne.s32.totalorder %s69, %s70
    %p79 = scmp.eq.s32.totalorder %s17, 0
    %p80 = por %p78, %p79
    %p81 = scmp.ne.s32.totalorder %s69, %s70
    %p82 = scmp.eq.s32.totalorder %s18, 1
    %p83 = por %p81, %p82
    %p85 = scmp.ne.s32.totalorder %s70, %s84
    %p86 = scmp.eq.s32.totalorder %s18, 0
    %p87 = por %p85, %p86
    %s89 = sadd.s32 %s88, 1
    %p92 = scmp.eq.s32.totalorder %s12, 1
    %p93 = scmp.ne.s32.totalorder %s88, %s90
    %p94 = scmp.eq.s32.totalorder %s12, 0
    %p95 = por %p93, %p94
    %p96 = scmp.ne.s32.totalorder %s88, %s90
    %p97 = scmp.eq.s32.totalorder %s17, 1
    %p98 = por %p96, %p97
    %p99 = scmp.ne.s32.totalorder %s90, %s91
    %p100 = scmp.eq.s32.totalorder %s17, 0
    %p101 = por %p99, %p100
    %p102 = scmp.ne.s32.totalorder %s90, %s91
    %p103 = scmp.eq.s32.totalorder %s18, 1
    %p104 = por %p102, %p103
    %p106 = scmp.ne.s32.totalorder %s91, %s105
    %p107 = scmp.eq.s32.totalorder %s18, 0
    %p108 = por %p106, %p107
    %s110 = sadd.s32 %s109, 1
    %p113 = scmp.eq.s32.totalorder %s12, 1
    %p114 = scmp.ne.s32.totalorder %s109, %s111
    %p115 = scmp.eq.s32.totalorder %s12, 0
    %p116 = por %p114, %p115
    %p117 = scmp.ne.s32.totalorder %s109, %s111
    %p118 = scmp.eq.s32.totalorder %s17, 1
    %p119 = por %p117, %p118
    %p120 = scmp.ne.s32.totalorder %s111, %s112
    %p121 = scmp.eq.s32.totalorder %s17, 0
    %p122 = por %p120, %p121
    %p123 = scmp.ne.s32.totalorder %s111, %s112
    %p124 = scmp.eq.s32.totalorder %s18, 1
    %p125 = por %p123, %p124
    %p127 = scmp.ne.s32.totalorder %s112, %s126
    %p128 = scmp.eq.s32.totalorder %s18, 0
    %p129 = por %p127, %p128
    %s131 = sadd.s32 %s130, 1
    %p134 = scmp.eq.s32.totalorder %s12, 1
    %p135 = scmp.ne.s32.totalorder %s130, %s132
    %p136 = scmp.eq.s32.totalorder %s12, 0
    %p137 = por %p135, %p136
    %p138 = scmp.ne.s32.totalorder %s130, %s132
    %p139 = scmp.eq.s32.totalorder %s17, 1
    %p140 = por %p138, %p139
    %p141 = scmp.ne.s32.totalorder %s132, %s133
    %p142 = scmp.eq.s32.totalorder %s17, 0
    %p143 = por %p141, %p142
    %p144 = scmp.ne.s32.totalorder %s132, %s133
    %p145 = scmp.eq.s32.totalorder %s18, 1
    %p146 = por %p144, %p145
    %p148 = scmp.ne.s32.totalorder %s133, %s147
    %p149 = scmp.eq.s32.totalorder %s18, 0
    %p150 = por %p148, %p149
    %s151 = ssub.s32 %s12, %s19
    %p152 = scmp.eq.s32.totalorder %s151, 0
    %s154 = sadd.s32 %s153, 1
    %s155 = scalar_select %p152, %s153, %s154
    %p158 = pneg %p152
    %p159 = scmp.eq.s32.totalorder %s12, 1
    %p160 = por %p158, %p159
    %p161 = scmp.ne.s32.totalorder %s153, %s156
    %p162 = scmp.eq.s32.totalorder %s12, 0
    %p163 = por %p161, %p162
    %p164 = scmp.ne.s32.totalorder %s153, %s156
    %p165 = scmp.eq.s32.totalorder %s17, 1
    %p166 = por %p164, %p165
    %p167 = scmp.ne.s32.totalorder %s156, %s157
    %p168 = scmp.eq.s32.totalorder %s17, 0
    %p169 = por %p167, %p168
    %p170 = scmp.ne.s32.totalorder %s156, %s157
    %p171 = scmp.eq.s32.totalorder %s18, 1
    %p172 = por %p170, %p171
    %p174 = scmp.ne.s32.totalorder %s157, %s173
    %p175 = scmp.eq.s32.totalorder %s18, 0
    %p176 = por %p174, %p175
    %p177 = scmp.le.s32.totalorder 1, %s12
    %p178 = scmp.lt.s32.totalorder %s12, 3
    %p179 = pnand %p177, %p178
    %p180 = pneg %p179
    // Predicated region
    $region9: #{a_call__.2} parent=5 // pred_check
      _
    $region10: #{a_call__.2} parent=5 // pred_check_branch
      %182 = sbr.rel (%p179) target = $region12
    $region11: #{a_call__.2} parent=5 // pred_region
      %s183 = ssub.s32 %s12, 1
      // Predicated region
      $region13: #{a_call__.2} parent=11 // pred_check
        %p184 = pneg %p59
      $region14: #{a_call__.2} parent=11 // pred_check_branch
        %186 = sbr.rel (%p184) target = $region16
      $region15: #{a_call__.2} parent=11 // pred_region
        _
      $region16: #{a_call__.2} parent=11 // pred_fallthru
        _
      // Predicated region
      $region17: #{a_call__.2} parent=11 // pred_check
        %p187 = pneg %p80
      $region18: #{a_call__.2} parent=11 // pred_check_branch
        %189 = sbr.rel (%p187) target = $region20
      $region19: #{a_call__.2} parent=11 // pred_region
        _
      $region20: #{a_call__.2} parent=11 // pred_fallthru
        _
      // Predicated region
      $region21: #{a_call__.2} parent=11 // pred_check
        %p190 = pneg %p101
      $region22: #{a_call__.2} parent=11 // pred_check_branch
        %192 = sbr.rel (%p190) target = $region24
      $region23: #{a_call__.2} parent=11 // pred_region
        _
      $region24: #{a_call__.2} parent=11 // pred_fallthru
        _
      // Predicated region
      $region25: #{a_call__.2} parent=11 // pred_check
        %p193 = pneg %p122
      $region26: #{a_call__.2} parent=11 // pred_check_branch
        %195 = sbr.rel (%p193) target = $region28
      $region27: #{a_call__.2} parent=11 // pred_region
        _
      $region28: #{a_call__.2} parent=11 // pred_fallthru
        _
      // Predicated region
      $region29: #{a_call__.2} parent=11 // pred_check
        %p196 = pneg %p143
      $region30: #{a_call__.2} parent=11 // pred_check_branch
        %198 = sbr.rel (%p196) target = $region32
      $region31: #{a_call__.2} parent=11 // pred_region
        _
      $region32: #{a_call__.2} parent=11 // pred_fallthru
        _
    $region12: #{a_call__.2} parent=5 // pred_fallthru
      _
    %p199 = scmp.lt.s32.totalorder %s12, 2
    // Predicated region
    $region33: #{a_call__.2} parent=5 // pred_check
      %p200 = pneg %p199
    $region34: #{a_call__.2} parent=5 // pred_check_branch
      %202 = sbr.rel (%p200) target = $region36
    $region35: #{a_call__.2} parent=5 // pred_region
      // Predicated region
      $region37: #{a_call__.2} parent=35 // pred_check
        %p203 = pneg %p32
      $region38: #{a_call__.2} parent=35 // pred_check_branch
        %205 = sbr.rel (%p203) target = $region40
      $region39: #{a_call__.2} parent=35 // pred_region
        %p206 = scmp.lt.s32.totalorder %s12, 1
        %s207 = scalar_select %p206, %s12, 1
        %s208 = smul.addr %s207, 72
        %s209 = smul.addr %s208, 4
        %s210 = scalar_lea.vmem %s0, %s209
      $region40: #{a_call__.2} parent=35 // pred_fallthru
        _
    $region36: #{a_call__.2} parent=5 // pred_fallthru
      _
    %p211 = scmp.le.s32.totalorder 1, %s12
    %p212 = scmp.lt.s32.totalorder %s12, 3
    %p213 = pnand %p211, %p212
    %p214 = pneg %p213
    // Predicated region
    $region41: #{a_call__.2} parent=5 // pred_check
      _
    $region42: #{a_call__.2} parent=5 // pred_check_branch
      %216 = sbr.rel (%p213) target = $region44
    $region43: #{a_call__.2} parent=5 // pred_region
      %s217 = ssub.s32 %s12, 1
      %p218 = scmp.lt.s32.totalorder %s17, 1
      %s219 = scalar_select %p218, %s17, 1
      %s220 = smul.addr %s219, 72
      %s221 = smul.addr %s220, 4
      %s222 = scalar_lea.vmem %s0, %s221
      %p223 = pneg %p38
      %p224 = pneg %p35
      %p225 = pneg %p59
      %p226 = pneg %p56
      %p227 = pneg %p80
      %p228 = pneg %p77
      %p229 = pneg %p101
      %p230 = pneg %p98
      %p231 = pneg %p122
      %p232 = pneg %p119
      %p233 = pneg %p143
      %p234 = pneg %p140
      %p235 = pneg %p169
      %p236 = pneg %p166
      %p237 = scmp.lt.s32.totalorder %s17, 1
      %s238 = scalar_select %p237, %s17, 1
      %s239 = smul.addr %s238, 8
      %s240 = smul.addr %s239, 4
      %s241 = scalar_lea.vmem %s6, %s240
      %p242 = scmp.lt.s32.totalorder %s17, 1
      %s243 = scalar_select %p242, %s17, 1
      %s244 = smul.addr %s243, 72
      %s245 = smul.addr %s244, 4
      %s246 = scalar_lea.vmem %s0, %s245
      %p247 = scmp.lt.s32.totalorder %s17, 1
      %s248 = scalar_select %p247, %s17, 1
      %s249 = smul.addr %s248, 8
      %s250 = smul.addr %s249, 4
      %s251 = scalar_lea.vmem %s6, %s250
      %v253 = vld [vmem:[%s246] sm:$0xf]
      %v254 = vld [vmem:[%s246 + $0x4] sm:$0x1]
      %v255 = vld [vmem:[%s246 + $0x8] sm:$0xf]
      %v256 = vld [vmem:[%s246 + $0xc] sm:$0x1]
      %v257 = vld [vmem:[%s246 + $0x10] sm:$0xf]
      %v258 = vld [vmem:[%s246 + $0x14] sm:$0x1]
      %v259 = vld [vmem:[%s246 + $0x18] sm:$0xf]
      %v260 = vld [vmem:[%s246 + $0x1c] sm:$0x1]
      %v261 = vld [vmem:[%s246 + $0x20] sm:$0xf]
      %v262 = vld [vmem:[%s246 + $0x24] sm:$0x1]
      %v263 = vld [vmem:[%s246 + $0x28] sm:$0xf]
      %v264 = vld [vmem:[%s246 + $0x2c] sm:$0x1]
      %v265 = vld [vmem:[%s246 + $0x30] sm:$0xf]
      %v266 = vld [vmem:[%s246 + $0x34] sm:$0x1]
      %v267 = vld [vmem:[%s246 + $0x38] sm:$0xf]
      %v268 = vld [vmem:[%s246 + $0x3c] sm:$0x1]
      %v269 = vld [vmem:[%s246 + $0x40] sm:$0xf]
      %v270 = vld [vmem:[%s246 + $0x44] sm:$0x1]
      %v271 = vld [vmem:[%s246 + $0x48] sm:$0xf]
      %v272 = vld [vmem:[%s246 + $0x50] sm:$0xf]
      %v273 = vld [vmem:[%s246 + $0x58] sm:$0xf]
      %v274 = vld [vmem:[%s246 + $0x60] sm:$0xf]
      %v275 = vld [vmem:[%s246 + $0x68] sm:$0xf]
      %v276 = vld [vmem:[%s246 + $0x70] sm:$0xf]
      %v277 = vld [vmem:[%s246 + $0x78] sm:$0xf]
      %v278 = vld [vmem:[%s246 + $0x80] sm:$0xf]
      %v279 = vld [vmem:[%s246 + $0x88] sm:$0xf]
      %v280 = vld [vmem:[%s246 + $0x90] sm:$0xf]
      %v281 = vld [vmem:[%s246 + $0x94] sm:$0x1]
      %v282 = vld [vmem:[%s246 + $0x98] sm:$0xf]
      %v283 = vld [vmem:[%s246 + $0x9c] sm:$0x1]
      %v284 = vld [vmem:[%s246 + $0xa0] sm:$0xf]
      %v285 = vld [vmem:[%s246 + $0xa4] sm:$0x1]
      %v286 = vld [vmem:[%s246 + $0xa8] sm:$0xf]
      %v287 = vld [vmem:[%s246 + $0xac] sm:$0x1]
      %v288 = vld [vmem:[%s246 + $0xb0] sm:$0xf]
      %v289 = vld [vmem:[%s246 + $0xb4] sm:$0x1]
      %v290 = vld [vmem:[%s246 + $0xb8] sm:$0xf]
      %v291 = vld [vmem:[%s246 + $0xbc] sm:$0x1]
      %v292 = vld [vmem:[%s246 + $0xc0] sm:$0xf]
      %v293 = vld [vmem:[%s246 + $0xc4] sm:$0x1]
      %v294 = vld [vmem:[%s246 + $0xc8] sm:$0xf]
      %v295 = vld [vmem:[%s246 + $0xcc] sm:$0x1]
      %v296 = vld [vmem:[%s246 + $0xd8] sm:$0xf]
      %v297 = vld [vmem:[%s246 + $0xe0] sm:$0xf]
      %v298 = vld [vmem:[%s246 + $0xe8] sm:$0xf]
      %v299 = vld [vmem:[%s246 + $0xf0] sm:$0xf]
      %v300 = vld [vmem:[%s246 + $0xf8] sm:$0xf]
      %v301 = vld [vmem:[%s246 + $0x100] sm:$0xf]
      %v302 = vld [vmem:[%s246 + $0x108] sm:$0xf]
      %v303 = vld [vmem:[%s246 + $0x110] sm:$0xf]
      %vm304 = vcmask 27648
      %305 = vst.msk [vmem:[#allocation3] sm:$0xf] %vm304, %v253
      %306 = vst.msk [vmem:[#allocation3 + $0x4] sm:$0xf] %vm304, %v255
      %307 = vst.msk [vmem:[#allocation3 + $0x8] sm:$0xf] %vm304, %v257
      %308 = vst.msk [vmem:[#allocation3 + $0xc] sm:$0xf] %vm304, %v259
      %309 = vst.msk [vmem:[#allocation3 + $0x10] sm:$0xf] %vm304, %v261
      %310 = vst.msk [vmem:[#allocation3 + $0x14] sm:$0xf] %vm304, %v263
      %311 = vst.msk [vmem:[#allocation3 + $0x18] sm:$0xf] %vm304, %v265
      %312 = vst.msk [vmem:[#allocation3 + $0x1c] sm:$0xf] %vm304, %v267
      %321 = vrot.lane.b32.xlu0 %v271, 4
      %v322 = vpop.permute.xlu0 %321
      %323 = vrot.lane.b32.xlu0 %v272, 4
      %v324 = vpop.permute.xlu0 %323
      %325 = vrot.lane.b32.xlu0 %v273, 4
      %v326 = vpop.permute.xlu0 %325
      %327 = vrot.lane.b32.xlu0 %v274, 4
      %v328 = vpop.permute.xlu0 %327
      %329 = vrot.lane.b32.xlu0 %v275, 4
      %v330 = vpop.permute.xlu0 %329
      %331 = vrot.lane.b32.xlu0 %v276, 4
      %v332 = vpop.permute.xlu0 %331
      %333 = vrot.lane.b32.xlu0 %v277, 4
      %v334 = vpop.permute.xlu0 %333
      %335 = vrot.lane.b32.xlu0 %v278, 4
      %v336 = vpop.permute.xlu0 %335
      %vm345 = vcmask 60448
      %346 = vst.msk [vmem:[#allocation3] sm:$0xf] %vm345, %v322
      %347 = vst.msk [vmem:[#allocation3 + $0x4] sm:$0xf] %vm345, %v324
      %348 = vst.msk [vmem:[#allocation3 + $0x8] sm:$0xf] %vm345, %v326
      %349 = vst.msk [vmem:[#allocation3 + $0xc] sm:$0xf] %vm345, %v328
      %350 = vst.msk [vmem:[#allocation3 + $0x10] sm:$0xf] %vm345, %v330
      %351 = vst.msk [vmem:[#allocation3 + $0x14] sm:$0xf] %vm345, %v332
      %352 = vst.msk [vmem:[#allocation3 + $0x18] sm:$0xf] %vm345, %v334
      %353 = vst.msk [vmem:[#allocation3 + $0x1c] sm:$0xf] %vm345, %v336
      %vm354 = vsmask.f32 3328
      %vm355 = vsmask.f32 7440
      %vm356 = vmor %vm354, %vm355
      %v358 = vshrl.u32 %v253, 16
      %v360 = vrot.slane %v358, 4
      %v361 = vshll.u32 %v253, 16
      %v363 = vrot.slane %v361, 5
      %v364 = vor.u32 %v360, %v363
      %v365 = vrot.slane %v364, 4
      %v367 = vshll.u32 %v254, 16
      %v369 = vrot.slane %v367, 5
      %v370 = vsel %vm356, %v365, %v369
      %v372 = vshrl.u32 %v255, 16
      %v374 = vrot.slane %v372, 4
      %v375 = vshll.u32 %v255, 16
      %v377 = vrot.slane %v375, 5
      %v378 = vor.u32 %v374, %v377
      %v379 = vrot.slane %v378, 4
      %v381 = vshll.u32 %v256, 16
      %v383 = vrot.slane %v381, 5
      %v384 = vsel %vm356, %v379, %v383
      %v386 = vshrl.u32 %v257, 16
      %v388 = vrot.slane %v386, 4
      %v389 = vshll.u32 %v257, 16
      %v391 = vrot.slane %v389, 5
      %v392 = vor.u32 %v388, %v391
      %v393 = vrot.slane %v392, 4
      %v395 = vshll.u32 %v258, 16
      %v397 = vrot.slane %v395, 5
      %v398 = vsel %vm356, %v393, %v397
      %v400 = vshrl.u32 %v259, 16
      %v402 = vrot.slane %v400, 4
      %v403 = vshll.u32 %v259, 16
      %v405 = vrot.slane %v403, 5
      %v406 = vor.u32 %v402, %v405
      %v407 = vrot.slane %v406, 4
      %v409 = vshll.u32 %v260, 16
      %v411 = vrot.slane %v409, 5
      %v412 = vsel %vm356, %v407, %v411
      %v414 = vshrl.u32 %v261, 16
      %v416 = vrot.slane %v414, 4
      %v417 = vshll.u32 %v261, 16
      %v419 = vrot.slane %v417, 5
      %v420 = vor.u32 %v416, %v419
      %v421 = vrot.slane %v420, 4
      %v423 = vshll.u32 %v262, 16
      %v425 = vrot.slane %v423, 5
      %v426 = vsel %vm356, %v421, %v425
      %v428 = vshrl.u32 %v263, 16
      %v430 = vrot.slane %v428, 4
      %v431 = vshll.u32 %v263, 16
      %v433 = vrot.slane %v431, 5
      %v434 = vor.u32 %v430, %v433
      %v435 = vrot.slane %v434, 4
      %v437 = vshll.u32 %v264, 16
      %v439 = vrot.slane %v437, 5
      %v440 = vsel %vm356, %v435, %v439
      %v442 = vshrl.u32 %v265, 16
      %v444 = vrot.slane %v442, 4
      %v445 = vshll.u32 %v265, 16
      %v447 = vrot.slane %v445, 5
      %v448 = vor.u32 %v444, %v447
      %v449 = vrot.slane %v448, 4
      %v451 = vshll.u32 %v266, 16
      %v453 = vrot.slane %v451, 5
      %v454 = vsel %vm356, %v449, %v453
      %v456 = vshrl.u32 %v267, 16
      %v458 = vrot.slane %v456, 4
      %v459 = vshll.u32 %v267, 16
      %v461 = vrot.slane %v459, 5
      %v462 = vor.u32 %v458, %v461
      %v463 = vrot.slane %v462, 4
      %v465 = vshll.u32 %v268, 16
      %v467 = vrot.slane %v465, 5
      %v468 = vsel %vm356, %v463, %v467
      %469 = vrot.lane.b32.xlu0 %v370, 8
      %v470 = vpop.permute.xlu0 %469
      %471 = vrot.lane.b32.xlu0 %v384, 8
      %v472 = vpop.permute.xlu0 %471
      %473 = vrot.lane.b32.xlu0 %v398, 8
      %v474 = vpop.permute.xlu0 %473
      %475 = vrot.lane.b32.xlu0 %v412, 8
      %v476 = vpop.permute.xlu0 %475
      %477 = vrot.lane.b32.xlu0 %v426, 8
      %v478 = vpop.permute.xlu0 %477
      %479 = vrot.lane.b32.xlu0 %v440, 8
      %v480 = vpop.permute.xlu0 %479
      %481 = vrot.lane.b32.xlu0 %v454, 8
      %v482 = vpop.permute.xlu0 %481
      %483 = vrot.lane.b32.xlu0 %v468, 8
      %v484 = vpop.permute.xlu0 %483
      %vm493 = vcmask 93248
      %494 = vst.msk [vmem:[#allocation3] sm:$0xf] %vm493, %v470
      %495 = vst.msk [vmem:[#allocation3 + $0x4] sm:$0xf] %vm493, %v472
      %496 = vst.msk [vmem:[#allocation3 + $0x8] sm:$0xf] %vm493, %v474
      %497 = vst.msk [vmem:[#allocation3 + $0xc] sm:$0xf] %vm493, %v476
      %498 = vst.msk [vmem:[#allocation3 + $0x10] sm:$0xf] %vm493, %v478
      %499 = vst.msk [vmem:[#allocation3 + $0x14] sm:$0xf] %vm493, %v480
      %500 = vst.msk [vmem:[#allocation3 + $0x18] sm:$0xf] %vm493, %v482
      %501 = vst.msk [vmem:[#allocation3 + $0x1c] sm:$0xf] %vm493, %v484
      %510 = vrot.lane.b32.xlu0 %v280, 12
      %v511 = vpop.permute.xlu0 %510
      %512 = vrot.lane.b32.xlu0 %v282, 12
      %v513 = vpop.permute.xlu0 %512
      %514 = vrot.lane.b32.xlu0 %v284, 12
      %v515 = vpop.permute.xlu0 %514
      %516 = vrot.lane.b32.xlu0 %v286, 12
      %v517 = vpop.permute.xlu0 %516
      %518 = vrot.lane.b32.xlu0 %v288, 12
      %v519 = vpop.permute.xlu0 %518
      %520 = vrot.lane.b32.xlu0 %v290, 12
      %v521 = vpop.permute.xlu0 %520
      %522 = vrot.lane.b32.xlu0 %v292, 12
      %v523 = vpop.permute.xlu0 %522
      %524 = vrot.lane.b32.xlu0 %v294, 12
      %v525 = vpop.permute.xlu0 %524
      %vm534 = vcmask 126048
      %535 = vst.msk [vmem:[#allocation3] sm:$0xf] %vm534, %v511
      %536 = vst.msk [vmem:[#allocation3 + $0x4] sm:$0xf] %vm534, %v513
      %537 = vst.msk [vmem:[#allocation3 + $0x8] sm:$0xf] %vm534, %v515
      %538 = vst.msk [vmem:[#allocation3 + $0xc] sm:$0xf] %vm534, %v517
      %539 = vst.msk [vmem:[#allocation3 + $0x10] sm:$0xf] %vm534, %v519
      %540 = vst.msk [vmem:[#allocation3 + $0x14] sm:$0xf] %vm534, %v521
      %541 = vst.msk [vmem:[#allocation3 + $0x18] sm:$0xf] %vm534, %v523
      %542 = vst.msk [vmem:[#allocation3 + $0x1c] sm:$0xf] %vm534, %v525
      %551 = vrot.lane.b32.xlu0 %v296, 16
      %v552 = vpop.permute.xlu0 %551
      %553 = vrot.lane.b32.xlu0 %v297, 16
      %v554 = vpop.permute.xlu0 %553
      %555 = vrot.lane.b32.xlu0 %v298, 16
      %v556 = vpop.permute.xlu0 %555
      %557 = vrot.lane.b32.xlu0 %v299, 16
      %v558 = vpop.permute.xlu0 %557
      %559 = vrot.lane.b32.xlu0 %v300, 16
      %v560 = vpop.permute.xlu0 %559
      %561 = vrot.lane.b32.xlu0 %v301, 16
      %v562 = vpop.permute.xlu0 %561
      %563 = vrot.lane.b32.xlu0 %v302, 16
      %v564 = vpop.permute.xlu0 %563
      %565 = vrot.lane.b32.xlu0 %v303, 16
      %v566 = vpop.permute.xlu0 %565
      %vm575 = vcmask 158848
      %576 = vst.msk [vmem:[#allocation3] sm:$0xf] %vm575, %v552
      %577 = vst.msk [vmem:[#allocation3 + $0x4] sm:$0xf] %vm575, %v554
      %578 = vst.msk [vmem:[#allocation3 + $0x8] sm:$0xf] %vm575, %v556
      %579 = vst.msk [vmem:[#allocation3 + $0xc] sm:$0xf] %vm575, %v558
      %580 = vst.msk [vmem:[#allocation3 + $0x10] sm:$0xf] %vm575, %v560
      %581 = vst.msk [vmem:[#allocation3 + $0x14] sm:$0xf] %vm575, %v562
      %582 = vst.msk [vmem:[#allocation3 + $0x18] sm:$0xf] %vm575, %v564
      %583 = vst.msk [vmem:[#allocation3 + $0x1c] sm:$0xf] %vm575, %v566
      %v585 = vshrl.u32 %v280, 16
      %v587 = vrot.slane %v585, 4
      %v588 = vshll.u32 %v280, 16
      %v590 = vrot.slane %v588, 5
      %v591 = vor.u32 %v587, %v590
      %v592 = vrot.slane %v591, 4
      %v594 = vshll.u32 %v281, 16
      %v596 = vrot.slane %v594, 5
      %v597 = vsel %vm356, %v592, %v596
      %v599 = vshrl.u32 %v282, 16
      %v601 = vrot.slane %v599, 4
      %v602 = vshll.u32 %v282, 16
      %v604 = vrot.slane %v602, 5
      %v605 = vor.u32 %v601, %v604
      %v606 = vrot.slane %v605, 4
      %v608 = vshll.u32 %v283, 16
      %v610 = vrot.slane %v608, 5
      %v611 = vsel %vm356, %v606, %v610
      %v613 = vshrl.u32 %v284, 16
      %v615 = vrot.slane %v613, 4
      %v616 = vshll.u32 %v284, 16
      %v618 = vrot.slane %v616, 5
      %v619 = vor.u32 %v615, %v618
      %v620 = vrot.slane %v619, 4
      %v622 = vshll.u32 %v285, 16
      %v624 = vrot.slane %v622, 5
      %v625 = vsel %vm356, %v620, %v624
      %v627 = vshrl.u32 %v286, 16
      %v629 = vrot.slane %v627, 4
      %v630 = vshll.u32 %v286, 16
      %v632 = vrot.slane %v630, 5
      %v633 = vor.u32 %v629, %v632
      %v634 = vrot.slane %v633, 4
      %v636 = vshll.u32 %v287, 16
      %v638 = vrot.slane %v636, 5
      %v639 = vsel %vm356, %v634, %v638
      %v641 = vshrl.u32 %v288, 16
      %v643 = vrot.slane %v641, 4
      %v644 = vshll.u32 %v288, 16
      %v646 = vrot.slane %v644, 5
      %v647 = vor.u32 %v643, %v646
      %v648 = vrot.slane %v647, 4
      %v650 = vshll.u32 %v289, 16
      %v652 = vrot.slane %v650, 5
      %v653 = vsel %vm356, %v648, %v652
      %v655 = vshrl.u32 %v290, 16
      %v657 = vrot.slane %v655, 4
      %v658 = vshll.u32 %v290, 16
      %v660 = vrot.slane %v658, 5
      %v661 = vor.u32 %v657, %v660
      %v662 = vrot.slane %v661, 4
      %v664 = vshll.u32 %v291, 16
      %v666 = vrot.slane %v664, 5
      %v667 = vsel %vm356, %v662, %v666
      %v669 = vshrl.u32 %v292, 16
      %v671 = vrot.slane %v669, 4
      %v672 = vshll.u32 %v292, 16
      %v674 = vrot.slane %v672, 5
      %v675 = vor.u32 %v671, %v674
      %v676 = vrot.slane %v675, 4
      %v678 = vshll.u32 %v293, 16
      %v680 = vrot.slane %v678, 5
      %v681 = vsel %vm356, %v676, %v680
      %v683 = vshrl.u32 %v294, 16
      %v685 = vrot.slane %v683, 4
      %v686 = vshll.u32 %v294, 16
      %v688 = vrot.slane %v686, 5
      %v689 = vor.u32 %v685, %v688
      %v690 = vrot.slane %v689, 4
      %v692 = vshll.u32 %v295, 16
      %v694 = vrot.slane %v692, 5
      %v695 = vsel %vm356, %v690, %v694
      %696 = vrot.lane.b32.xlu0 %v597, 20
      %v697 = vpop.permute.xlu0 %696
      %698 = vrot.lane.b32.xlu0 %v611, 20
      %v699 = vpop.permute.xlu0 %698
      %700 = vrot.lane.b32.xlu0 %v625, 20
      %v701 = vpop.permute.xlu0 %700
      %702 = vrot.lane.b32.xlu0 %v639, 20
      %v703 = vpop.permute.xlu0 %702
      %704 = vrot.lane.b32.xlu0 %v653, 20
      %v705 = vpop.permute.xlu0 %704
      %706 = vrot.lane.b32.xlu0 %v667, 20
      %v707 = vpop.permute.xlu0 %706
      %708 = vrot.lane.b32.xlu0 %v681, 20
      %v709 = vpop.permute.xlu0 %708
      %710 = vrot.lane.b32.xlu0 %v695, 20
      %v711 = vpop.permute.xlu0 %710
      %vm720 = vcmask 191648
      %721 = vst.msk [vmem:[#allocation3] sm:$0xf] %vm720, %v697
      %722 = vst.msk [vmem:[#allocation3 + $0x4] sm:$0xf] %vm720, %v699
      %723 = vst.msk [vmem:[#allocation3 + $0x8] sm:$0xf] %vm720, %v701
      %724 = vst.msk [vmem:[#allocation3 + $0xc] sm:$0xf] %vm720, %v703
      %725 = vst.msk [vmem:[#allocation3 + $0x10] sm:$0xf] %vm720, %v705
      %726 = vst.msk [vmem:[#allocation3 + $0x14] sm:$0xf] %vm720, %v707
      %727 = vst.msk [vmem:[#allocation3 + $0x18] sm:$0xf] %vm720, %v709
      %728 = vst.msk [vmem:[#allocation3 + $0x1c] sm:$0xf] %vm720, %v711
      %737 = vrot.lane.b32.xlu0 %v255, 24
      %v738 = vpop.permute.xlu0 %737
      %739 = vrot.lane.b32.xlu0 %v257, 24
      %v740 = vpop.permute.xlu0 %739
      %741 = vrot.lane.b32.xlu0 %v259, 24
      %v742 = vpop.permute.xlu0 %741
      %743 = vrot.lane.b32.xlu0 %v261, 24
      %v744 = vpop.permute.xlu0 %743
      %745 = vrot.lane.b32.xlu0 %v263, 24
      %v746 = vpop.permute.xlu0 %745
      %747 = vrot.lane.b32.xlu0 %v265, 24
      %v748 = vpop.permute.xlu0 %747
      %749 = vrot.lane.b32.xlu0 %v267, 24
      %v750 = vpop.permute.xlu0 %749
      %751 = vrot.lane.b32.xlu0 %v269, 24
      %v752 = vpop.permute.xlu0 %751
      %vm761 = vcmask 224448
      %762 = vst.msk [vmem:[#allocation3] sm:$0xf] %vm761, %v738
      %763 = vst.msk [vmem:[#allocation3 + $0x4] sm:$0xf] %vm761, %v740
      %764 = vst.msk [vmem:[#allocation3 + $0x8] sm:$0xf] %vm761, %v742
      %765 = vst.msk [vmem:[#allocation3 + $0xc] sm:$0xf] %vm761, %v744
      %766 = vst.msk [vmem:[#allocation3 + $0x10] sm:$0xf] %vm761, %v746
      %767 = vst.msk [vmem:[#allocation3 + $0x14] sm:$0xf] %vm761, %v748
      %768 = vst.msk [vmem:[#allocation3 + $0x18] sm:$0xf] %vm761, %v750
      %769 = vst.msk [vmem:[#allocation3 + $0x1c] sm:$0xf] %vm761, %v752
      %771 = vrot.lane.b32.xlu0 %v272, 28
      %v772 = vpop.permute.xlu0 %771
      %773 = vrot.lane.b32.xlu0 %v273, 28
      %v774 = vpop.permute.xlu0 %773
      %775 = vrot.lane.b32.xlu0 %v274, 28
      %v776 = vpop.permute.xlu0 %775
      %777 = vrot.lane.b32.xlu0 %v275, 28
      %v778 = vpop.permute.xlu0 %777
      %779 = vrot.lane.b32.xlu0 %v276, 28
      %v780 = vpop.permute.xlu0 %779
      %781 = vrot.lane.b32.xlu0 %v277, 28
      %v782 = vpop.permute.xlu0 %781
      %783 = vrot.lane.b32.xlu0 %v278, 28
      %v784 = vpop.permute.xlu0 %783
      %785 = vrot.lane.b32.xlu0 %v279, 28
      %v786 = vpop.permute.xlu0 %785
      %vm795 = vcmask 257248
      %796 = vst.msk [vmem:[#allocation3] sm:$0xf] %vm795, %v772
      %797 = vst.msk [vmem:[#allocation3 + $0x4] sm:$0xf] %vm795, %v774
      %798 = vst.msk [vmem:[#allocation3 + $0x8] sm:$0xf] %vm795, %v776
      %799 = vst.msk [vmem:[#allocation3 + $0xc] sm:$0xf] %vm795, %v778
      %800 = vst.msk [vmem:[#allocation3 + $0x10] sm:$0xf] %vm795, %v780
      %801 = vst.msk [vmem:[#allocation3 + $0x14] sm:$0xf] %vm795, %v782
      %802 = vst.msk [vmem:[#allocation3 + $0x18] sm:$0xf] %vm795, %v784
      %803 = vst.msk [vmem:[#allocation3 + $0x1c] sm:$0xf] %vm795, %v786
      %v805 = vshrl.u32 %v269, 16
      %v807 = vrot.slane %v805, 4
      %v808 = vshll.u32 %v269, 16
      %v810 = vrot.slane %v808, 5
      %v811 = vor.u32 %v807, %v810
      %v812 = vrot.slane %v811, 4
      %v814 = vshll.u32 %v270, 16
      %v816 = vrot.slane %v814, 5
      %v817 = vsel %vm356, %v812, %v816
      %818 = vrot.lane.b32.xlu0 %v384, 32
      %v819 = vpop.permute.xlu0 %818
      %820 = vrot.lane.b32.xlu0 %v398, 32
      %v821 = vpop.permute.xlu0 %820
      %822 = vrot.lane.b32.xlu0 %v412, 32
      %v823 = vpop.permute.xlu0 %822
      %824 = vrot.lane.b32.xlu0 %v426, 32
      %v825 = vpop.permute.xlu0 %824
      %826 = vrot.lane.b32.xlu0 %v440, 32
      %v827 = vpop.permute.xlu0 %826
      %828 = vrot.lane.b32.xlu0 %v454, 32
      %v829 = vpop.permute.xlu0 %828
      %830 = vrot.lane.b32.xlu0 %v468, 32
      %v831 = vpop.permute.xlu0 %830
      %832 = vrot.lane.b32.xlu0 %v817, 32
      %v833 = vpop.permute.xlu0 %832
      %vm842 = vcmask 290048
      %843 = vst.msk [vmem:[#allocation3] sm:$0xf] %vm842, %v819
      %844 = vst.msk [vmem:[#allocation3 + $0x4] sm:$0xf] %vm842, %v821
      %845 = vst.msk [vmem:[#allocation3 + $0x8] sm:$0xf] %vm842, %v823
      %846 = vst.msk [vmem:[#allocation3 + $0xc] sm:$0xf] %vm842, %v825
      %847 = vst.msk [vmem:[#allocation3 + $0x10] sm:$0xf] %vm842, %v827
      %848 = vst.msk [vmem:[#allocation3 + $0x14] sm:$0xf] %vm842, %v829
      %849 = vst.msk [vmem:[#allocation3 + $0x18] sm:$0xf] %vm842, %v831
      %850 = vst.msk [vmem:[#allocation3 + $0x1c] sm:$0xf] %vm842, %v833
      %v851 = vld [vmem:[#allocation3] sm:$0xf]
      %v852 = vld [vmem:[#allocation3 + $0x4] sm:$0xf]
      %v853 = vld [vmem:[#allocation3 + $0x8] sm:$0xf]
      %v854 = vld [vmem:[#allocation3 + $0xc] sm:$0xf]
      %v855 = vld [vmem:[#allocation3 + $0x10] sm:$0xf]
      %v856 = vld [vmem:[#allocation3 + $0x14] sm:$0xf]
      %v857 = vld [vmem:[#allocation3 + $0x18] sm:$0xf]
      %v858 = vld [vmem:[#allocation3 + $0x1c] sm:$0xf]
      %v859 = vld [vmem:[%s1] sm:$0xf]
      %v860 = vld [vmem:[%s1 + $0x4] sm:$0xf]
      %v861 = vld [vmem:[%s1 + $0x8] sm:$0xf]
      %v862 = vld [vmem:[%s1 + $0xc] sm:$0xf]
      %v863 = vld [vmem:[%s1 + $0x10] sm:$0x3]
      %v864 = vld [vmem:[%s2] sm:$0x1]
      %v866 = vlaneseq
      %v867 = vshrl.u32 %v866, 7
      %v868 = vsub.s32 0, %v867
      %v869 = vrot.slane %v864, %v868
      %v879 = vunpack.c.l.b16 %v851
      %v880 = vunpack.c.l.b16 %v852
      %v881 = vunpack.c.l.b16 %v853
      %v882 = vunpack.c.l.b16 %v854
      %v883 = vunpack.c.l.b16 %v855
      %v884 = vunpack.c.l.b16 %v856
      %v885 = vunpack.c.l.b16 %v857
      %v886 = vunpack.c.l.b16 %v858
      %v887 = vpack.c.b16 %v880, %v879
      %v888 = vpack.c.b16 %v882, %v881
      %v889 = vpack.c.b16 %v884, %v883
      %v890 = vpack.c.b16 %v886, %v885
      %v896 = vunpack.c.l.b16 %v859
      %v897 = vunpack.c.l.b16 %v860
      %v898 = vunpack.c.l.b16 %v861
      %v899 = vunpack.c.l.b16 %v862
      %v900 = vunpack.c.l.b16 %v863
      %v901 = vpack.c.b16 %v897, %v896
      %v902 = vpack.c.b16 %v899, %v898
      %v903 = vpack.c.b16 %v900, %v900
      %vm906 = vcmask 293888
      %v908 = vsel %vm906, %v887, 0
      %v911 = vsel %vm906, %v888, 0
      %v914 = vsel %vm906, %v889, 0
      %v917 = vsel %vm906, %v890, 0
      %vm919 = vcmask 1041408
      %v921 = vsel %vm919, %v903, 0
      %923 = vmatprep.subr.bf16.mxu0 0
      %924 = vmatpush1.bf16.msra.mxu0 %v901
      %925 = vmatprep.subr.bf16.mxu0 0
      %926 = vmatpush1.bf16.msra.mxu0 %v902
      %927 = vmatprep.subr.bf16.mxu0 0
      %928 = vmatpush1.bf16.msra.mxu0 %v921
      %929 = vmatprep.subr.bf16.mxu0 0
      %930 = vmatpush1.bf16.msra.mxu0 0
      %931 = vmatprep.subr.bf16.mxu0 0
      %932 = vmatpush1.bf16.msra.mxu0 0
      %933 = vmatprep.subr.bf16.mxu0 0
      %934 = vmatpush1.bf16.msra.mxu0 0
      %935 = vmatprep.subr.bf16.mxu0 0
      %936 = vmatpush1.bf16.msra.mxu0 0
      %937 = vmatprep.subr.bf16.mxu0 0
      %938 = vmatpush1.bf16.msra.mxu0 0
      %939 = vmatprep.subr.bf16.mxu0 0
      %940 = vmatpush1.bf16.msra.mxu0 0
      %941 = vmatprep.subr.bf16.mxu0 0
      %942 = vmatpush1.bf16.msra.mxu0 0
      %943 = vmatprep.subr.bf16.mxu0 0
      %944 = vmatpush1.bf16.msra.mxu0 0
      %945 = vmatprep.subr.bf16.mxu0 0
      %946 = vmatpush1.bf16.msra.mxu0 0
      %947 = vmatprep.subr.bf16.mxu0 0
      %948 = vmatpush1.bf16.msra.mxu0 0
      %949 = vmatprep.subr.bf16.mxu0 0
      %950 = vmatpush1.bf16.msra.mxu0 0
      %951 = vmatprep.subr.bf16.mxu0 0
      %952 = vmatpush1.bf16.msra.mxu0 0
      %953 = vmatprep.subr.bf16.mxu0 0
      %954 = vmatpush1.bf16.msra.mxu0 0
      %955 = vmatprep.mubr.bf16.mxu0 0
      %956 = vmatmul.mubr.bf16.gmra.mrb[0].mxu0 %v908
      %v957 = vpop.f32.mrb[0].mxu0
      %v958 = vadd.f32 %v869, %v957
      %v959 = vpop.f32.mrb[0].mxu0
      %v960 = vpop.f32.mrb[0].mxu0
      %v961 = vadd.f32 %v869, %v960
      %v962 = vpop.f32.mrb[0].mxu0
      %963 = vmatprep.mubr.bf16.mxu0 0
      %964 = vmatmul.mubr.bf16.gmra.mrb[0].mxu0 %v911
      %v965 = vpop.f32.mrb[0].mxu0
      %v966 = vadd.f32 %v869, %v965
      %v967 = vpop.f32.mrb[0].mxu0
      %v968 = vpop.f32.mrb[0].mxu0
      %v969 = vadd.f32 %v869, %v968
      %v970 = vpop.f32.mrb[0].mxu0
      %971 = vmatprep.mubr.bf16.mxu0 0
      %972 = vmatmul.mubr.bf16.gmra.mrb[0].mxu0 %v914
      %v973 = vpop.f32.mrb[0].mxu0
      %v974 = vadd.f32 %v869, %v973
      %v975 = vpop.f32.mrb[0].mxu0
      %v976 = vpop.f32.mrb[0].mxu0
      %v977 = vadd.f32 %v869, %v976
      %v978 = vpop.f32.mrb[0].mxu0
      %979 = vmatprep.mubr.bf16.mxu0 0
      %980 = vmatmul.mubr.bf16.gmra.mrb[0].mxu0 %v917
      %v981 = vpop.f32.mrb[0].mxu0
      %v982 = vadd.f32 %v869, %v981
      %v983 = vpop.f32.mrb[0].mxu0
      %v984 = vpop.f32.mrb[0].mxu0
      %v985 = vadd.f32 %v869, %v984
      %v986 = vpop.f32.mrb[0].mxu0
      %987 = vdwg.mxu0
      %v988 = vmax.f32 %v958, 0.0
      %v989 = vmax.f32 %v961, 0.0
      %v990 = vmax.f32 %v966, 0.0
      %v991 = vmax.f32 %v969, 0.0
      %v992 = vmax.f32 %v974, 0.0
      %v993 = vmax.f32 %v977, 0.0
      %v994 = vmax.f32 %v982, 0.0
      %v995 = vmax.f32 %v985, 0.0
      %v996 = vpack.c.bf16 %v989, %v988
      %v997 = vpack.c.bf16 %v991, %v990
      %v998 = vpack.c.bf16 %v993, %v992
      %v999 = vpack.c.bf16 %v995, %v994
      %vm1000 = vcmask 60416
      %1001 = vst.msk [vmem:[#allocation2] sm:$0xf] %vm1000, 0
      %vm1002 = vcmask 57344
      %1003 = vst.msk [vmem:[#allocation2 + $0x4] sm:$0x1] %vm1002, 0
      %s1004 = scalar_lea.vmem [#allocation2], 72
      %1005 = vst.msk [vmem:[%s1004] sm:$0xf] %vm1000, 0
      %1006 = vst.msk [vmem:[%s1004 + $0x4] sm:$0x1] %vm1002, 0
      %vm1007 = vcmask 57344
      %vm1008 = vsmask.f32 256
      %vm1009 = vmand %vm1007, %vm1008
      %v1010 = vld [vmem:[#allocation2] sm:$0x1]
      %v1011 = vsel %vm1009, 0, %v1010
      %1012 = vst [vmem:[#allocation2] sm:$0x1] %v1011
      %v1013 = vld [vmem:[#allocation2 + $0x8] sm:$0x1]
      %v1014 = vsel %vm1009, 0, %v1013
      %1015 = vst [vmem:[#allocation2 + $0x8] sm:$0x1] %v1014
      %v1016 = vld [vmem:[#allocation2 + $0x10] sm:$0x1]
      %v1017 = vsel %vm1009, 0, %v1016
      %1018 = vst [vmem:[#allocation2 + $0x10] sm:$0x1] %v1017
      %v1019 = vld [vmem:[#allocation2 + $0x18] sm:$0x1]
      %v1020 = vsel %vm1009, 0, %v1019
      %1021 = vst [vmem:[#allocation2 + $0x18] sm:$0x1] %v1020
      %v1022 = vld [vmem:[#allocation2 + $0x20] sm:$0x1]
      %v1023 = vsel %vm1009, 0, %v1022
      %1024 = vst [vmem:[#allocation2 + $0x20] sm:$0x1] %v1023
      %v1025 = vld [vmem:[#allocation2 + $0x28] sm:$0x1]
      %v1026 = vsel %vm1009, 0, %v1025
      %1027 = vst [vmem:[#allocation2 + $0x28] sm:$0x1] %v1026
      %v1028 = vld [vmem:[#allocation2 + $0x30] sm:$0x1]
      %v1029 = vsel %vm1009, 0, %v1028
      %1030 = vst [vmem:[#allocation2 + $0x30] sm:$0x1] %v1029
      %v1031 = vld [vmem:[#allocation2 + $0x38] sm:$0x1]
      %v1032 = vsel %vm1009, 0, %v1031
      %1033 = vst [vmem:[#allocation2 + $0x38] sm:$0x1] %v1032
      %v1034 = vld [vmem:[#allocation2 + $0x40] sm:$0x1]
      %v1035 = vsel %vm1009, 0, %v1034
      %1036 = vst [vmem:[#allocation2 + $0x40] sm:$0x1] %v1035
      %v1037 = vld [vmem:[#allocation2 + $0x48] sm:$0x1]
      %v1038 = vsel %vm1009, 0, %v1037
      %1039 = vst [vmem:[#allocation2 + $0x48] sm:$0x1] %v1038
      %vm1040 = vsmask.f32 7938
      %vm1041 = vmand %vm1007, %vm1040
      %v1042 = vld [vmem:[#allocation2 + $0x4] sm:$0x1]
      %v1043 = vsel %vm1041, 0, %v1042
      %1044 = vst [vmem:[#allocation2 + $0x4] sm:$0x1] %v1043
      %v1045 = vld [vmem:[#allocation2 + $0xc] sm:$0x1]
      %v1046 = vsel %vm1041, 0, %v1045
      %1047 = vst [vmem:[#allocation2 + $0xc] sm:$0x1] %v1046
      %v1048 = vld [vmem:[#allocation2 + $0x14] sm:$0x1]
      %v1049 = vsel %vm1041, 0, %v1048
      %1050 = vst [vmem:[#allocation2 + $0x14] sm:$0x1] %v1049
      %v1051 = vld [vmem:[#allocation2 + $0x1c] sm:$0x1]
      %v1052 = vsel %vm1041, 0, %v1051
      %1053 = vst [vmem:[#allocation2 + $0x1c] sm:$0x1] %v1052
      %v1054 = vld [vmem:[#allocation2 + $0x24] sm:$0x1]
      %v1055 = vsel %vm1041, 0, %v1054
      %1056 = vst [vmem:[#allocation2 + $0x24] sm:$0x1] %v1055
      %v1057 = vld [vmem:[#allocation2 + $0x2c] sm:$0x1]
      %v1058 = vsel %vm1041, 0, %v1057
      %1059 = vst [vmem:[#allocation2 + $0x2c] sm:$0x1] %v1058
      %v1060 = vld [vmem:[#allocation2 + $0x34] sm:$0x1]
      %v1061 = vsel %vm1041, 0, %v1060
      %1062 = vst [vmem:[#allocation2 + $0x34] sm:$0x1] %v1061
      %v1063 = vld [vmem:[#allocation2 + $0x3c] sm:$0x1]
      %v1064 = vsel %vm1041, 0, %v1063
      %1065 = vst [vmem:[#allocation2 + $0x3c] sm:$0x1] %v1064
      %v1066 = vld [vmem:[#allocation2 + $0x44] sm:$0x1]
      %v1067 = vsel %vm1041, 0, %v1066
      %1068 = vst [vmem:[#allocation2 + $0x44] sm:$0x1] %v1067
      %v1069 = vld [vmem:[#allocation2 + $0x4c] sm:$0x1]
      %v1070 = vsel %vm1041, 0, %v1069
      %1071 = vst [vmem:[#allocation2 + $0x4c] sm:$0x1] %v1070
      %v1076 = vunpack.c.l.b16 %v996
      %v1077 = vunpack.c.h.b16 %v996
      %v1078 = vunpack.c.l.b16 %v997
      %v1079 = vunpack.c.h.b16 %v997
      %v1080 = vunpack.c.l.b16 %v998
      %v1081 = vunpack.c.h.b16 %v998
      %v1082 = vunpack.c.l.b16 %v999
      %v1083 = vunpack.c.h.b16 %v999
      %v1084 = vpack.c.b16 %v1076, %v1076
      %v1085 = vpack.c.b16 %v1077, %v1077
      %v1086 = vpack.c.b16 %v1078, %v1078
      %v1087 = vpack.c.b16 %v1079, %v1079
      %v1088 = vpack.c.b16 %v1080, %v1080
      %v1089 = vpack.c.b16 %v1081, %v1081
      %v1090 = vpack.c.b16 %v1082, %v1082
      %v1091 = vpack.c.b16 %v1083, %v1083
      %v1093 = vshrl.u32 %v1084, 16
      %v1095 = vrot.slane %v1093, 7
      %v1096 = vshll.u32 %v1084, 16
      %v1098 = vor.u32 %v1095, %v1096
      %v1099 = vrot.slane %v1095, 4
      %v1101 = vshrl.u32 %v1085, 16
      %v1103 = vrot.slane %v1101, 7
      %v1104 = vshll.u32 %v1085, 16
      %v1106 = vor.u32 %v1103, %v1104
      %v1107 = vrot.slane %v1103, 4
      %v1109 = vshrl.u32 %v1086, 16
      %v1111 = vrot.slane %v1109, 7
      %v1112 = vshll.u32 %v1086, 16
      %v1114 = vor.u32 %v1111, %v1112
      %v1115 = vrot.slane %v1111, 4
      %v1117 = vshrl.u32 %v1087, 16
      %v1119 = vrot.slane %v1117, 7
      %v1120 = vshll.u32 %v1087, 16
      %v1122 = vor.u32 %v1119, %v1120
      %v1123 = vrot.slane %v1119, 4
      %v1125 = vshrl.u32 %v1088, 16
      %v1127 = vrot.slane %v1125, 7
      %v1128 = vshll.u32 %v1088, 16
      %v1130 = vor.u32 %v1127, %v1128
      %v1131 = vrot.slane %v1127, 4
      %v1133 = vshrl.u32 %v1089, 16
      %v1135 = vrot.slane %v1133, 7
      %v1136 = vshll.u32 %v1089, 16
      %v1138 = vor.u32 %v1135, %v1136
      %v1139 = vrot.slane %v1135, 4
      %v1141 = vshrl.u32 %v1090, 16
      %v1143 = vrot.slane %v1141, 7
      %v1144 = vshll.u32 %v1090, 16
      %v1146 = vor.u32 %v1143, %v1144
      %v1147 = vrot.slane %v1143, 4
      %v1149 = vshrl.u32 %v1091, 16
      %v1151 = vrot.slane %v1149, 7
      %v1152 = vshll.u32 %v1091, 16
      %v1154 = vor.u32 %v1151, %v1152
      %v1155 = vrot.slane %v1151, 4
      %s1172 = scalar_lea.vmem [#allocation2], 8
      %vm1173 = vcmask 60416
      %vm1174 = vmand %vm1173, %vm1040
      %v1175 = vld [vmem:[%s1172] sm:$0xf]
      %v1176 = vsel %vm1174, %v1098, %v1175
      %1177 = vst [vmem:[%s1172] sm:$0xf] %v1176
      %v1178 = vld [vmem:[%s1172 + $0x4] sm:$0x1]
      %v1179 = vsel %vm1009, %v1099, %v1178
      %1180 = vst [vmem:[%s1172 + $0x4] sm:$0x1] %v1179
      %v1181 = vld [vmem:[%s1172 + $0x8] sm:$0xf]
      %v1182 = vsel %vm1174, %v1106, %v1181
      %1183 = vst [vmem:[%s1172 + $0x8] sm:$0xf] %v1182
      %v1184 = vld [vmem:[%s1172 + $0xc] sm:$0x1]
      %v1185 = vsel %vm1009, %v1107, %v1184
      %1186 = vst [vmem:[%s1172 + $0xc] sm:$0x1] %v1185
      %v1187 = vld [vmem:[%s1172 + $0x10] sm:$0xf]
      %v1188 = vsel %vm1174, %v1114, %v1187
      %1189 = vst [vmem:[%s1172 + $0x10] sm:$0xf] %v1188
      %v1190 = vld [vmem:[%s1172 + $0x14] sm:$0x1]
      %v1191 = vsel %vm1009, %v1115, %v1190
      %1192 = vst [vmem:[%s1172 + $0x14] sm:$0x1] %v1191
      %v1193 = vld [vmem:[%s1172 + $0x18] sm:$0xf]
      %v1194 = vsel %vm1174, %v1122, %v1193
      %1195 = vst [vmem:[%s1172 + $0x18] sm:$0xf] %v1194
      %v1196 = vld [vmem:[%s1172 + $0x1c] sm:$0x1]
      %v1197 = vsel %vm1009, %v1123, %v1196
      %1198 = vst [vmem:[%s1172 + $0x1c] sm:$0x1] %v1197
      %v1199 = vld [vmem:[%s1172 + $0x20] sm:$0xf]
      %v1200 = vsel %vm1174, %v1130, %v1199
      %1201 = vst [vmem:[%s1172 + $0x20] sm:$0xf] %v1200
      %v1202 = vld [vmem:[%s1172 + $0x24] sm:$0x1]
      %v1203 = vsel %vm1009, %v1131, %v1202
      %1204 = vst [vmem:[%s1172 + $0x24] sm:$0x1] %v1203
      %v1205 = vld [vmem:[%s1172 + $0x28] sm:$0xf]
      %v1206 = vsel %vm1174, %v1138, %v1205
      %1207 = vst [vmem:[%s1172 + $0x28] sm:$0xf] %v1206
      %v1208 = vld [vmem:[%s1172 + $0x2c] sm:$0x1]
      %v1209 = vsel %vm1009, %v1139, %v1208
      %1210 = vst [vmem:[%s1172 + $0x2c] sm:$0x1] %v1209
      %v1211 = vld [vmem:[%s1172 + $0x30] sm:$0xf]
      %v1212 = vsel %vm1174, %v1146, %v1211
      %1213 = vst [vmem:[%s1172 + $0x30] sm:$0xf] %v1212
      %v1214 = vld [vmem:[%s1172 + $0x34] sm:$0x1]
      %v1215 = vsel %vm1009, %v1147, %v1214
      %1216 = vst [vmem:[%s1172 + $0x34] sm:$0x1] %v1215
      %v1217 = vld [vmem:[%s1172 + $0x38] sm:$0xf]
      %v1218 = vsel %vm1174, %v1154, %v1217
      %1219 = vst [vmem:[%s1172 + $0x38] sm:$0xf] %v1218
      %v1220 = vld [vmem:[%s1172 + $0x3c] sm:$0x1]
      %v1221 = vsel %vm1009, %v1155, %v1220
      %1222 = vst [vmem:[%s1172 + $0x3c] sm:$0x1] %v1221
      %v1223 = vld [vmem:[#allocation2] sm:$0xf]
      %v1224 = vld [vmem:[#allocation2 + $0x8] sm:$0xf]
      %v1225 = vld [vmem:[#allocation2 + $0x10] sm:$0xf]
      %v1226 = vld [vmem:[#allocation2 + $0x18] sm:$0xf]
      %v1227 = vld [vmem:[#allocation2 + $0x20] sm:$0xf]
      %v1228 = vld [vmem:[#allocation2 + $0x28] sm:$0xf]
      %v1229 = vld [vmem:[#allocation2 + $0x30] sm:$0xf]
      %v1230 = vld [vmem:[#allocation2 + $0x38] sm:$0xf]
      %1231 = vst.msk [vmem:[#allocation4] sm:$0xf] %vm1000, %v1223
      %1232 = vst.msk [vmem:[#allocation4 + $0x4] sm:$0xf] %vm1000, %v1224
      %1233 = vst.msk [vmem:[#allocation4 + $0x8] sm:$0xf] %vm1000, %v1225
      %1234 = vst.msk [vmem:[#allocation4 + $0xc] sm:$0xf] %vm1000, %v1226
      %1235 = vst.msk [vmem:[#allocation4 + $0x10] sm:$0xf] %vm1000, %v1227
      %1236 = vst.msk [vmem:[#allocation4 + $0x14] sm:$0xf] %vm1000, %v1228
      %1237 = vst.msk [vmem:[#allocation4 + $0x18] sm:$0xf] %vm1000, %v1229
      %1238 = vst.msk [vmem:[#allocation4 + $0x1c] sm:$0xf] %vm1000, %v1230
      %v1239 = vld [vmem:[#allocation2] sm:$0xf]
      %v1240 = vld [vmem:[#allocation2 + $0x4] sm:$0x1]
      %v1241 = vld [vmem:[#allocation2 + $0x8] sm:$0xf]
      %v1242 = vld [vmem:[#allocation2 + $0xc] sm:$0x1]
      %v1243 = vld [vmem:[#allocation2 + $0x10] sm:$0xf]
      %v1244 = vld [vmem:[#allocation2 + $0x14] sm:$0x1]
      %v1245 = vld [vmem:[#allocation2 + $0x18] sm:$0xf]
      %v1246 = vld [vmem:[#allocation2 + $0x1c] sm:$0x1]
      %v1247 = vld [vmem:[#allocation2 + $0x20] sm:$0xf]
      %v1248 = vld [vmem:[#allocation2 + $0x24] sm:$0x1]
      %v1249 = vld [vmem:[#allocation2 + $0x28] sm:$0xf]
      %v1250 = vld [vmem:[#allocation2 + $0x2c] sm:$0x1]
      %v1251 = vld [vmem:[#allocation2 + $0x30] sm:$0xf]
      %v1252 = vld [vmem:[#allocation2 + $0x34] sm:$0x1]
      %v1253 = vld [vmem:[#allocation2 + $0x38] sm:$0xf]
      %v1254 = vld [vmem:[#allocation2 + $0x3c] sm:$0x1]
      %v1256 = vshrl.u32 %v1239, 16
      %v1258 = vrot.slane %v1256, 4
      %v1259 = vshll.u32 %v1239, 16
      %v1261 = vrot.slane %v1259, 5
      %v1262 = vor.u32 %v1258, %v1261
      %v1263 = vrot.slane %v1262, 4
      %v1265 = vshll.u32 %v1240, 16
      %v1267 = vrot.slane %v1265, 5
      %v1268 = vsel %vm356, %v1263, %v1267
      %v1270 = vshrl.u32 %v1241, 16
      %v1272 = vrot.slane %v1270, 4
      %v1273 = vshll.u32 %v1241, 16
      %v1275 = vrot.slane %v1273, 5
      %v1276 = vor.u32 %v1272, %v1275
      %v1277 = vrot.slane %v1276, 4
      %v1279 = vshll.u32 %v1242, 16
      %v1281 = vrot.slane %v1279, 5
      %v1282 = vsel %vm356, %v1277, %v1281
      %v1284 = vshrl.u32 %v1243, 16
      %v1286 = vrot.slane %v1284, 4
      %v1287 = vshll.u32 %v1243, 16
      %v1289 = vrot.slane %v1287, 5
      %v1290 = vor.u32 %v1286, %v1289
      %v1291 = vrot.slane %v1290, 4
      %v1293 = vshll.u32 %v1244, 16
      %v1295 = vrot.slane %v1293, 5
      %v1296 = vsel %vm356, %v1291, %v1295
      %v1298 = vshrl.u32 %v1245, 16
      %v1300 = vrot.slane %v1298, 4
      %v1301 = vshll.u32 %v1245, 16
      %v1303 = vrot.slane %v1301, 5
      %v1304 = vor.u32 %v1300, %v1303
      %v1305 = vrot.slane %v1304, 4
      %v1307 = vshll.u32 %v1246, 16
      %v1309 = vrot.slane %v1307, 5
      %v1310 = vsel %vm356, %v1305, %v1309
      %v1312 = vshrl.u32 %v1247, 16
      %v1314 = vrot.slane %v1312, 4
      %v1315 = vshll.u32 %v1247, 16
      %v1317 = vrot.slane %v1315, 5
      %v1318 = vor.u32 %v1314, %v1317
      %v1319 = vrot.slane %v1318, 4
      %v1321 = vshll.u32 %v1248, 16
      %v1323 = vrot.slane %v1321, 5
      %v1324 = vsel %vm356, %v1319, %v1323
      %v1326 = vshrl.u32 %v1249, 16
      %v1328 = vrot.slane %v1326, 4
      %v1329 = vshll.u32 %v1249, 16
      %v1331 = vrot.slane %v1329, 5
      %v1332 = vor.u32 %v1328, %v1331
      %v1333 = vrot.slane %v1332, 4
      %v1335 = vshll.u32 %v1250, 16
      %v1337 = vrot.slane %v1335, 5
      %v1338 = vsel %vm356, %v1333, %v1337
      %v1340 = vshrl.u32 %v1251, 16
      %v1342 = vrot.slane %v1340, 4
      %v1343 = vshll.u32 %v1251, 16
      %v1345 = vrot.slane %v1343, 5
      %v1346 = vor.u32 %v1342, %v1345
      %v1347 = vrot.slane %v1346, 4
      %v1349 = vshll.u32 %v1252, 16
      %v1351 = vrot.slane %v1349, 5
      %v1352 = vsel %vm356, %v1347, %v1351
      %v1354 = vshrl.u32 %v1253, 16
      %v1356 = vrot.slane %v1354, 4
      %v1357 = vshll.u32 %v1253, 16
      %v1359 = vrot.slane %v1357, 5
      %v1360 = vor.u32 %v1356, %v1359
      %v1361 = vrot.slane %v1360, 4
      %v1363 = vshll.u32 %v1254, 16
      %v1365 = vrot.slane %v1363, 5
      %v1366 = vsel %vm356, %v1361, %v1365
      %1367 = vrot.lane.b32.xlu0 %v1268, 8
      %v1368 = vpop.permute.xlu0 %1367
      %1369 = vrot.lane.b32.xlu0 %v1282, 8
      %v1370 = vpop.permute.xlu0 %1369
      %1371 = vrot.lane.b32.xlu0 %v1296, 8
      %v1372 = vpop.permute.xlu0 %1371
      %1373 = vrot.lane.b32.xlu0 %v1310, 8
      %v1374 = vpop.permute.xlu0 %1373
      %1375 = vrot.lane.b32.xlu0 %v1324, 8
      %v1376 = vpop.permute.xlu0 %1375
      %1377 = vrot.lane.b32.xlu0 %v1338, 8
      %v1378 = vpop.permute.xlu0 %1377
      %1379 = vrot.lane.b32.xlu0 %v1352, 8
      %v1380 = vpop.permute.xlu0 %1379
      %1381 = vrot.lane.b32.xlu0 %v1366, 8
      %v1382 = vpop.permute.xlu0 %1381
      %vm1391 = vcmask 126016
      %1392 = vst.msk [vmem:[#allocation4] sm:$0xf] %vm1391, %v1368
      %1393 = vst.msk [vmem:[#allocation4 + $0x4] sm:$0xf] %vm1391, %v1370
      %1394 = vst.msk [vmem:[#allocation4 + $0x8] sm:$0xf] %vm1391, %v1372
      %1395 = vst.msk [vmem:[#allocation4 + $0xc] sm:$0xf] %vm1391, %v1374
      %1396 = vst.msk [vmem:[#allocation4 + $0x10] sm:$0xf] %vm1391, %v1376
      %1397 = vst.msk [vmem:[#allocation4 + $0x14] sm:$0xf] %vm1391, %v1378
      %1398 = vst.msk [vmem:[#allocation4 + $0x18] sm:$0xf] %vm1391, %v1380
      %1399 = vst.msk [vmem:[#allocation4 + $0x1c] sm:$0xf] %vm1391, %v1382
      %v1400 = vld [vmem:[#allocation2] sm:$0xe]
      %v1401 = vld [vmem:[#allocation2 + $0x4] sm:$0x1]
      %v1402 = vld [vmem:[#allocation2 + $0x8] sm:$0xe]
      %v1403 = vld [vmem:[#allocation2 + $0xc] sm:$0x1]
      %v1404 = vld [vmem:[#allocation2 + $0x10] sm:$0xe]
      %v1405 = vld [vmem:[#allocation2 + $0x14] sm:$0x1]
      %v1406 = vld [vmem:[#allocation2 + $0x18] sm:$0xe]
      %v1407 = vld [vmem:[#allocation2 + $0x1c] sm:$0x1]
      %v1408 = vld [vmem:[#allocation2 + $0x20] sm:$0xe]
      %v1409 = vld [vmem:[#allocation2 + $0x24] sm:$0x1]
      %v1410 = vld [vmem:[#allocation2 + $0x28] sm:$0xe]
      %v1411 = vld [vmem:[#allocation2 + $0x2c] sm:$0x1]
      %v1412 = vld [vmem:[#allocation2 + $0x30] sm:$0xe]
      %v1413 = vld [vmem:[#allocation2 + $0x34] sm:$0x1]
      %v1414 = vld [vmem:[#allocation2 + $0x38] sm:$0xe]
      %v1415 = vld [vmem:[#allocation2 + $0x3c] sm:$0x1]
      %vm1432 = vcmask 1042432
      %vm1433 = vcmask 1046532
      %vm1434 = vmor %vm1432, %vm1433
      %v1435 = vrot.slane %v1400, 5
      %v1436 = vrot.slane %v1435, 4
      %v1437 = vrot.slane %v1401, 5
      %v1438 = vsel %vm1434, %v1436, %v1437
      %v1439 = vrot.slane %v1402, 5
      %v1440 = vrot.slane %v1439, 4
      %v1441 = vrot.slane %v1403, 5
      %v1442 = vsel %vm1434, %v1440, %v1441
      %v1443 = vrot.slane %v1404, 5
      %v1444 = vrot.slane %v1443, 4
      %v1445 = vrot.slane %v1405, 5
      %v1446 = vsel %vm1434, %v1444, %v1445
      %v1447 = vrot.slane %v1406, 5
      %v1448 = vrot.slane %v1447, 4
      %v1449 = vrot.slane %v1407, 5
      %v1450 = vsel %vm1434, %v1448, %v1449
      %v1451 = vrot.slane %v1408, 5
      %v1452 = vrot.slane %v1451, 4
      %v1453 = vrot.slane %v1409, 5
      %v1454 = vsel %vm1434, %v1452, %v1453
      %v1455 = vrot.slane %v1410, 5
      %v1456 = vrot.slane %v1455, 4
      %v1457 = vrot.slane %v1411, 5
      %v1458 = vsel %vm1434, %v1456, %v1457
      %v1459 = vrot.slane %v1412, 5
      %v1460 = vrot.slane %v1459, 4
      %v1461 = vrot.slane %v1413, 5
      %v1462 = vsel %vm1434, %v1460, %v1461
      %v1463 = vrot.slane %v1414, 5
      %v1464 = vrot.slane %v1463, 4
      %v1465 = vrot.slane %v1415, 5
      %v1466 = vsel %vm1434, %v1464, %v1465
      %1467 = vrot.lane.b32.xlu0 %v1438, 16
      %v1468 = vpop.permute.xlu0 %1467
      %1469 = vrot.lane.b32.xlu0 %v1442, 16
      %v1470 = vpop.permute.xlu0 %1469
      %1471 = vrot.lane.b32.xlu0 %v1446, 16
      %v1472 = vpop.permute.xlu0 %1471
      %1473 = vrot.lane.b32.xlu0 %v1450, 16
      %v1474 = vpop.permute.xlu0 %1473
      %1475 = vrot.lane.b32.xlu0 %v1454, 16
      %v1476 = vpop.permute.xlu0 %1475
      %1477 = vrot.lane.b32.xlu0 %v1458, 16
      %v1478 = vpop.permute.xlu0 %1477
      %1479 = vrot.lane.b32.xlu0 %v1462, 16
      %v1480 = vpop.permute.xlu0 %1479
      %1481 = vrot.lane.b32.xlu0 %v1466, 16
      %v1482 = vpop.permute.xlu0 %1481
      %vm1491 = vcmask 191616
      %1492 = vst.msk [vmem:[#allocation4] sm:$0xf] %vm1491, %v1468
      %1493 = vst.msk [vmem:[#allocation4 + $0x4] sm:$0xf] %vm1491, %v1470
      %1494 = vst.msk [vmem:[#allocation4 + $0x8] sm:$0xf] %vm1491, %v1472
      %1495 = vst.msk [vmem:[#allocation4 + $0xc] sm:$0xf] %vm1491, %v1474
      %1496 = vst.msk [vmem:[#allocation4 + $0x10] sm:$0xf] %vm1491, %v1476
      %1497 = vst.msk [vmem:[#allocation4 + $0x14] sm:$0xf] %vm1491, %v1478
      %1498 = vst.msk [vmem:[#allocation4 + $0x18] sm:$0xf] %vm1491, %v1480
      %1499 = vst.msk [vmem:[#allocation4 + $0x1c] sm:$0xf] %vm1491, %v1482
      %v1500 = vld [vmem:[%s1172] sm:$0xf]
      %v1501 = vld [vmem:[%s1172 + $0x8] sm:$0xf]
      %v1502 = vld [vmem:[%s1172 + $0x10] sm:$0xf]
      %v1503 = vld [vmem:[%s1172 + $0x18] sm:$0xf]
      %v1504 = vld [vmem:[%s1172 + $0x20] sm:$0xf]
      %v1505 = vld [vmem:[%s1172 + $0x28] sm:$0xf]
      %v1506 = vld [vmem:[%s1172 + $0x30] sm:$0xf]
      %v1507 = vld [vmem:[%s1172 + $0x38] sm:$0xf]
      %1516 = vrot.lane.b32.xlu0 %v1500, 24
      %v1517 = vpop.permute.xlu0 %1516
      %1518 = vrot.lane.b32.xlu0 %v1501, 24
      %v1519 = vpop.permute.xlu0 %1518
      %1520 = vrot.lane.b32.xlu0 %v1502, 24
      %v1521 = vpop.permute.xlu0 %1520
      %1522 = vrot.lane.b32.xlu0 %v1503, 24
      %v1523 = vpop.permute.xlu0 %1522
      %1524 = vrot.lane.b32.xlu0 %v1504, 24
      %v1525 = vpop.permute.xlu0 %1524
      %1526 = vrot.lane.b32.xlu0 %v1505, 24
      %v1527 = vpop.permute.xlu0 %1526
      %1528 = vrot.lane.b32.xlu0 %v1506, 24
      %v1529 = vpop.permute.xlu0 %1528
      %1530 = vrot.lane.b32.xlu0 %v1507, 24
      %v1531 = vpop.permute.xlu0 %1530
      %vm1540 = vcmask 257216
      %1541 = vst.msk [vmem:[#allocation4] sm:$0xf] %vm1540, %v1517
      %1542 = vst.msk [vmem:[#allocation4 + $0x4] sm:$0xf] %vm1540, %v1519
      %1543 = vst.msk [vmem:[#allocation4 + $0x8] sm:$0xf] %vm1540, %v1521
      %1544 = vst.msk [vmem:[#allocation4 + $0xc] sm:$0xf] %vm1540, %v1523
      %1545 = vst.msk [vmem:[#allocation4 + $0x10] sm:$0xf] %vm1540, %v1525
      %1546 = vst.msk [vmem:[#allocation4 + $0x14] sm:$0xf] %vm1540, %v1527
      %1547 = vst.msk [vmem:[#allocation4 + $0x18] sm:$0xf] %vm1540, %v1529
      %1548 = vst.msk [vmem:[#allocation4 + $0x1c] sm:$0xf] %vm1540, %v1531
      %v1549 = vld [vmem:[%s1172] sm:$0xf]
      %v1550 = vld [vmem:[%s1172 + $0x4] sm:$0x1]
      %v1551 = vld [vmem:[%s1172 + $0x8] sm:$0xf]
      %v1552 = vld [vmem:[%s1172 + $0xc] sm:$0x1]
      %v1553 = vld [vmem:[%s1172 + $0x10] sm:$0xf]
      %v1554 = vld [vmem:[%s1172 + $0x14] sm:$0x1]
      %v1555 = vld [vmem:[%s1172 + $0x18] sm:$0xf]
      %v1556 = vld [vmem:[%s1172 + $0x1c] sm:$0x1]
      %v1557 = vld [vmem:[%s1172 + $0x20] sm:$0xf]
      %v1558 = vld [vmem:[%s1172 + $0x24] sm:$0x1]
      %v1559 = vld [vmem:[%s1172 + $0x28] sm:$0xf]
      %v1560 = vld [vmem:[%s1172 + $0x2c] sm:$0x1]
      %v1561 = vld [vmem:[%s1172 + $0x30] sm:$0xf]
      %v1562 = vld [vmem:[%s1172 + $0x34] sm:$0x1]
      %v1563 = vld [vmem:[%s1172 + $0x38] sm:$0xf]
      %v1564 = vld [vmem:[%s1172 + $0x3c] sm:$0x1]
      %v1566 = vshrl.u32 %v1549, 16
      %v1568 = vrot.slane %v1566, 4
      %v1569 = vshll.u32 %v1549, 16
      %v1571 = vrot.slane %v1569, 5
      %v1572 = vor.u32 %v1568, %v1571
      %v1573 = vrot.slane %v1572, 4
      %v1575 = vshll.u32 %v1550, 16
      %v1577 = vrot.slane %v1575, 5
      %v1578 = vsel %vm356, %v1573, %v1577
      %v1580 = vshrl.u32 %v1551, 16
      %v1582 = vrot.slane %v1580, 4
      %v1583 = vshll.u32 %v1551, 16
      %v1585 = vrot.slane %v1583, 5
      %v1586 = vor.u32 %v1582, %v1585
      %v1587 = vrot.slane %v1586, 4
      %v1589 = vshll.u32 %v1552, 16
      %v1591 = vrot.slane %v1589, 5
      %v1592 = vsel %vm356, %v1587, %v1591
      %v1594 = vshrl.u32 %v1553, 16
      %v1596 = vrot.slane %v1594, 4
      %v1597 = vshll.u32 %v1553, 16
      %v1599 = vrot.slane %v1597, 5
      %v1600 = vor.u32 %v1596, %v1599
      %v1601 = vrot.slane %v1600, 4
      %v1603 = vshll.u32 %v1554, 16
      %v1605 = vrot.slane %v1603, 5
      %v1606 = vsel %vm356, %v1601, %v1605
      %v1608 = vshrl.u32 %v1555, 16
      %v1610 = vrot.slane %v1608, 4
      %v1611 = vshll.u32 %v1555, 16
      %v1613 = vrot.slane %v1611, 5
      %v1614 = vor.u32 %v1610, %v1613
      %v1615 = vrot.slane %v1614, 4
      %v1617 = vshll.u32 %v1556, 16
      %v1619 = vrot.slane %v1617, 5
      %v1620 = vsel %vm356, %v1615, %v1619
      %v1622 = vshrl.u32 %v1557, 16
      %v1624 = vrot.slane %v1622, 4
      %v1625 = vshll.u32 %v1557, 16
      %v1627 = vrot.slane %v1625, 5
      %v1628 = vor.u32 %v1624, %v1627
      %v1629 = vrot.slane %v1628, 4
      %v1631 = vshll.u32 %v1558, 16
      %v1633 = vrot.slane %v1631, 5
      %v1634 = vsel %vm356, %v1629, %v1633
      %v1636 = vshrl.u32 %v1559, 16
      %v1638 = vrot.slane %v1636, 4
      %v1639 = vshll.u32 %v1559, 16
      %v1641 = vrot.slane %v1639, 5
      %v1642 = vor.u32 %v1638, %v1641
      %v1643 = vrot.slane %v1642, 4
      %v1645 = vshll.u32 %v1560, 16
      %v1647 = vrot.slane %v1645, 5
      %v1648 = vsel %vm356, %v1643, %v1647
      %v1650 = vshrl.u32 %v1561, 16
      %v1652 = vrot.slane %v1650, 4
      %v1653 = vshll.u32 %v1561, 16
      %v1655 = vrot.slane %v1653, 5
      %v1656 = vor.u32 %v1652, %v1655
      %v1657 = vrot.slane %v1656, 4
      %v1659 = vshll.u32 %v1562, 16
      %v1661 = vrot.slane %v1659, 5
      %v1662 = vsel %vm356, %v1657, %v1661
      %v1664 = vshrl.u32 %v1563, 16
      %v1666 = vrot.slane %v1664, 4
      %v1667 = vshll.u32 %v1563, 16
      %v1669 = vrot.slane %v1667, 5
      %v1670 = vor.u32 %v1666, %v1669
      %v1671 = vrot.slane %v1670, 4
      %v1673 = vshll.u32 %v1564, 16
      %v1675 = vrot.slane %v1673, 5
      %v1676 = vsel %vm356, %v1671, %v1675
      %1677 = vrot.lane.b32.xlu0 %v1578, 32
      %v1678 = vpop.permute.xlu0 %1677
      %1679 = vrot.lane.b32.xlu0 %v1592, 32
      %v1680 = vpop.permute.xlu0 %1679
      %1681 = vrot.lane.b32.xlu0 %v1606, 32
      %v1682 = vpop.permute.xlu0 %1681
      %1683 = vrot.lane.b32.xlu0 %v1620, 32
      %v1684 = vpop.permute.xlu0 %1683
      %1685 = vrot.lane.b32.xlu0 %v1634, 32
      %v1686 = vpop.permute.xlu0 %1685
      %1687 = vrot.lane.b32.xlu0 %v1648, 32
      %v1688 = vpop.permute.xlu0 %1687
      %1689 = vrot.lane.b32.xlu0 %v1662, 32
      %v1690 = vpop.permute.xlu0 %1689
      %1691 = vrot.lane.b32.xlu0 %v1676, 32
      %v1692 = vpop.permute.xlu0 %1691
      %vm1701 = vcmask 322816
      %1702 = vst.msk [vmem:[#allocation4] sm:$0xf] %vm1701, %v1678
      %1703 = vst.msk [vmem:[#allocation4 + $0x4] sm:$0xf] %vm1701, %v1680
      %1704 = vst.msk [vmem:[#allocation4 + $0x8] sm:$0xf] %vm1701, %v1682
      %1705 = vst.msk [vmem:[#allocation4 + $0xc] sm:$0xf] %vm1701, %v1684
      %1706 = vst.msk [vmem:[#allocation4 + $0x10] sm:$0xf] %vm1701, %v1686
      %1707 = vst.msk [vmem:[#allocation4 + $0x14] sm:$0xf] %vm1701, %v1688
      %1708 = vst.msk [vmem:[#allocation4 + $0x18] sm:$0xf] %vm1701, %v1690
      %1709 = vst.msk [vmem:[#allocation4 + $0x1c] sm:$0xf] %vm1701, %v1692
      %v1710 = vld [vmem:[%s1172] sm:$0xe]
      %v1711 = vld [vmem:[%s1172 + $0x4] sm:$0x1]
      %v1712 = vld [vmem:[%s1172 + $0x8] sm:$0xe]
      %v1713 = vld [vmem:[%s1172 + $0xc] sm:$0x1]
      %v1714 = vld [vmem:[%s1172 + $0x10] sm:$0xe]
      %v1715 = vld [vmem:[%s1172 + $0x14] sm:$0x1]
      %v1716 = vld [vmem:[%s1172 + $0x18] sm:$0xe]
      %v1717 = vld [vmem:[%s1172 + $0x1c] sm:$0x1]
      %v1718 = vld [vmem:[%s1172 + $0x20] sm:$0xe]
      %v1719 = vld [vmem:[%s1172 + $0x24] sm:$0x1]
      %v1720 = vld [vmem:[%s1172 + $0x28] sm:$0xe]
      %v1721 = vld [vmem:[%s1172 + $0x2c] sm:$0x1]
      %v1722 = vld [vmem:[%s1172 + $0x30] sm:$0xe]
      %v1723 = vld [vmem:[%s1172 + $0x34] sm:$0x1]
      %v1724 = vld [vmem:[%s1172 + $0x38] sm:$0xe]
      %v1725 = vld [vmem:[%s1172 + $0x3c] sm:$0x1]
      %v1742 = vrot.slane %v1710, 5
      %v1743 = vrot.slane %v1742, 4
      %v1744 = vrot.slane %v1711, 5
      %v1745 = vsel %vm1434, %v1743, %v1744
      %v1746 = vrot.slane %v1712, 5
      %v1747 = vrot.slane %v1746, 4
      %v1748 = vrot.slane %v1713, 5
      %v1749 = vsel %vm1434, %v1747, %v1748
      %v1750 = vrot.slane %v1714, 5
      %v1751 = vrot.slane %v1750, 4
      %v1752 = vrot.slane %v1715, 5
      %v1753 = vsel %vm1434, %v1751, %v1752
      %v1754 = vrot.slane %v1716, 5
      %v1755 = vrot.slane %v1754, 4
      %v1756 = vrot.slane %v1717, 5
      %v1757 = vsel %vm1434, %v1755, %v1756
      %v1758 = vrot.slane %v1718, 5
      %v1759 = vrot.slane %v1758, 4
      %v1760 = vrot.slane %v1719, 5
      %v1761 = vsel %vm1434, %v1759, %v1760
      %v1762 = vrot.slane %v1720, 5
      %v1763 = vrot.slane %v1762, 4
      %v1764 = vrot.slane %v1721, 5
      %v1765 = vsel %vm1434, %v1763, %v1764
      %v1766 = vrot.slane %v1722, 5
      %v1767 = vrot.slane %v1766, 4
      %v1768 = vrot.slane %v1723, 5
      %v1769 = vsel %vm1434, %v1767, %v1768
      %v1770 = vrot.slane %v1724, 5
      %v1771 = vrot.slane %v1770, 4
      %v1772 = vrot.slane %v1725, 5
      %v1773 = vsel %vm1434, %v1771, %v1772
      %1774 = vrot.lane.b32.xlu0 %v1745, 40
      %v1775 = vpop.permute.xlu0 %1774
      %1776 = vrot.lane.b32.xlu0 %v1749, 40
      %v1777 = vpop.permute.xlu0 %1776
      %1778 = vrot.lane.b32.xlu0 %v1753, 40
      %v1779 = vpop.permute.xlu0 %1778
      %1780 = vrot.lane.b32.xlu0 %v1757, 40
      %v1781 = vpop.permute.xlu0 %1780
      %1782 = vrot.lane.b32.xlu0 %v1761, 40
      %v1783 = vpop.permute.xlu0 %1782
      %1784 = vrot.lane.b32.xlu0 %v1765, 40
      %v1785 = vpop.permute.xlu0 %1784
      %1786 = vrot.lane.b32.xlu0 %v1769, 40
      %v1787 = vpop.permute.xlu0 %1786
      %1788 = vrot.lane.b32.xlu0 %v1773, 40
      %v1789 = vpop.permute.xlu0 %1788
      %vm1798 = vcmask 388416
      %1799 = vst.msk [vmem:[#allocation4] sm:$0xf] %vm1798, %v1775
      %1800 = vst.msk [vmem:[#allocation4 + $0x4] sm:$0xf] %vm1798, %v1777
      %1801 = vst.msk [vmem:[#allocation4 + $0x8] sm:$0xf] %vm1798, %v1779
      %1802 = vst.msk [vmem:[#allocation4 + $0xc] sm:$0xf] %vm1798, %v1781
      %1803 = vst.msk [vmem:[#allocation4 + $0x10] sm:$0xf] %vm1798, %v1783
      %1804 = vst.msk [vmem:[#allocation4 + $0x14] sm:$0xf] %vm1798, %v1785
      %1805 = vst.msk [vmem:[#allocation4 + $0x18] sm:$0xf] %vm1798, %v1787
      %1806 = vst.msk [vmem:[#allocation4 + $0x1c] sm:$0xf] %vm1798, %v1789
      %s1807 = scalar_lea.vmem [#allocation2], 16
      %v1808 = vld [vmem:[%s1807] sm:$0xf]
      %v1809 = vld [vmem:[%s1807 + $0x8] sm:$0xf]
      %v1810 = vld [vmem:[%s1807 + $0x10] sm:$0xf]
      %v1811 = vld [vmem:[%s1807 + $0x18] sm:$0xf]
      %v1812 = vld [vmem:[%s1807 + $0x20] sm:$0xf]
      %v1813 = vld [vmem:[%s1807 + $0x28] sm:$0xf]
      %v1814 = vld [vmem:[%s1807 + $0x30] sm:$0xf]
      %v1815 = vld [vmem:[%s1807 + $0x38] sm:$0xf]
      %1824 = vrot.lane.b32.xlu0 %v1808, 48
      %v1825 = vpop.permute.xlu0 %1824
      %1826 = vrot.lane.b32.xlu0 %v1809, 48
      %v1827 = vpop.permute.xlu0 %1826
      %1828 = vrot.lane.b32.xlu0 %v1810, 48
      %v1829 = vpop.permute.xlu0 %1828
      %1830 = vrot.lane.b32.xlu0 %v1811, 48
      %v1831 = vpop.permute.xlu0 %1830
      %1832 = vrot.lane.b32.xlu0 %v1812, 48
      %v1833 = vpop.permute.xlu0 %1832
      %1834 = vrot.lane.b32.xlu0 %v1813, 48
      %v1835 = vpop.permute.xlu0 %1834
      %1836 = vrot.lane.b32.xlu0 %v1814, 48
      %v1837 = vpop.permute.xlu0 %1836
      %1838 = vrot.lane.b32.xlu0 %v1815, 48
      %v1839 = vpop.permute.xlu0 %1838
      %vm1848 = vcmask 454016
      %1849 = vst.msk [vmem:[#allocation4] sm:$0xf] %vm1848, %v1825
      %1850 = vst.msk [vmem:[#allocation4 + $0x4] sm:$0xf] %vm1848, %v1827
      %1851 = vst.msk [vmem:[#allocation4 + $0x8] sm:$0xf] %vm1848, %v1829
      %1852 = vst.msk [vmem:[#allocation4 + $0xc] sm:$0xf] %vm1848, %v1831
      %1853 = vst.msk [vmem:[#allocation4 + $0x10] sm:$0xf] %vm1848, %v1833
      %1854 = vst.msk [vmem:[#allocation4 + $0x14] sm:$0xf] %vm1848, %v1835
      %1855 = vst.msk [vmem:[#allocation4 + $0x18] sm:$0xf] %vm1848, %v1837
      %1856 = vst.msk [vmem:[#allocation4 + $0x1c] sm:$0xf] %vm1848, %v1839
      %v1857 = vld [vmem:[%s1807] sm:$0xf]
      %v1858 = vld [vmem:[%s1807 + $0x4] sm:$0x1]
      %v1859 = vld [vmem:[%s1807 + $0x8] sm:$0xf]
      %v1860 = vld [vmem:[%s1807 + $0xc] sm:$0x1]
      %v1861 = vld [vmem:[%s1807 + $0x10] sm:$0xf]
      %v1862 = vld [vmem:[%s1807 + $0x14] sm:$0x1]
      %v1863 = vld [vmem:[%s1807 + $0x18] sm:$0xf]
      %v1864 = vld [vmem:[%s1807 + $0x1c] sm:$0x1]
      %v1865 = vld [vmem:[%s1807 + $0x20] sm:$0xf]
      %v1866 = vld [vmem:[%s1807 + $0x24] sm:$0x1]
      %v1867 = vld [vmem:[%s1807 + $0x28] sm:$0xf]
      %v1868 = vld [vmem:[%s1807 + $0x2c] sm:$0x1]
      %v1869 = vld [vmem:[%s1807 + $0x30] sm:$0xf]
      %v1870 = vld [vmem:[%s1807 + $0x34] sm:$0x1]
      %v1871 = vld [vmem:[%s1807 + $0x38] sm:$0xf]
      %v1872 = vld [vmem:[%s1807 + $0x3c] sm:$0x1]
      %v1874 = vshrl.u32 %v1857, 16
      %v1876 = vrot.slane %v1874, 4
      %v1877 = vshll.u32 %v1857, 16
      %v1879 = vrot.slane %v1877, 5
      %v1880 = vor.u32 %v1876, %v1879
      %v1881 = vrot.slane %v1880, 4
      %v1883 = vshll.u32 %v1858, 16
      %v1885 = vrot.slane %v1883, 5
      %v1886 = vsel %vm356, %v1881, %v1885
      %v1888 = vshrl.u32 %v1859, 16
      %v1890 = vrot.slane %v1888, 4
      %v1891 = vshll.u32 %v1859, 16
      %v1893 = vrot.slane %v1891, 5
      %v1894 = vor.u32 %v1890, %v1893
      %v1895 = vrot.slane %v1894, 4
      %v1897 = vshll.u32 %v1860, 16
      %v1899 = vrot.slane %v1897, 5
      %v1900 = vsel %vm356, %v1895, %v1899
      %v1902 = vshrl.u32 %v1861, 16
      %v1904 = vrot.slane %v1902, 4
      %v1905 = vshll.u32 %v1861, 16
      %v1907 = vrot.slane %v1905, 5
      %v1908 = vor.u32 %v1904, %v1907
      %v1909 = vrot.slane %v1908, 4
      %v1911 = vshll.u32 %v1862, 16
      %v1913 = vrot.slane %v1911, 5
      %v1914 = vsel %vm356, %v1909, %v1913
      %v1916 = vshrl.u32 %v1863, 16
      %v1918 = vrot.slane %v1916, 4
      %v1919 = vshll.u32 %v1863, 16
      %v1921 = vrot.slane %v1919, 5
      %v1922 = vor.u32 %v1918, %v1921
      %v1923 = vrot.slane %v1922, 4
      %v1925 = vshll.u32 %v1864, 16
      %v1927 = vrot.slane %v1925, 5
      %v1928 = vsel %vm356, %v1923, %v1927
      %v1930 = vshrl.u32 %v1865, 16
      %v1932 = vrot.slane %v1930, 4
      %v1933 = vshll.u32 %v1865, 16
      %v1935 = vrot.slane %v1933, 5
      %v1936 = vor.u32 %v1932, %v1935
      %v1937 = vrot.slane %v1936, 4
      %v1939 = vshll.u32 %v1866, 16
      %v1941 = vrot.slane %v1939, 5
      %v1942 = vsel %vm356, %v1937, %v1941
      %v1944 = vshrl.u32 %v1867, 16
      %v1946 = vrot.slane %v1944, 4
      %v1947 = vshll.u32 %v1867, 16
      %v1949 = vrot.slane %v1947, 5
      %v1950 = vor.u32 %v1946, %v1949
      %v1951 = vrot.slane %v1950, 4
      %v1953 = vshll.u32 %v1868, 16
      %v1955 = vrot.slane %v1953, 5
      %v1956 = vsel %vm356, %v1951, %v1955
      %v1958 = vshrl.u32 %v1869, 16
      %v1960 = vrot.slane %v1958, 4
      %v1961 = vshll.u32 %v1869, 16
      %v1963 = vrot.slane %v1961, 5
      %v1964 = vor.u32 %v1960, %v1963
      %v1965 = vrot.slane %v1964, 4
      %v1967 = vshll.u32 %v1870, 16
      %v1969 = vrot.slane %v1967, 5
      %v1970 = vsel %vm356, %v1965, %v1969
      %v1972 = vshrl.u32 %v1871, 16
      %v1974 = vrot.slane %v1972, 4
      %v1975 = vshll.u32 %v1871, 16
      %v1977 = vrot.slane %v1975, 5
      %v1978 = vor.u32 %v1974, %v1977
      %v1979 = vrot.slane %v1978, 4
      %v1981 = vshll.u32 %v1872, 16
      %v1983 = vrot.slane %v1981, 5
      %v1984 = vsel %vm356, %v1979, %v1983
      %1985 = vrot.lane.b32.xlu0 %v1886, 56
      %v1986 = vpop.permute.xlu0 %1985
      %1987 = vrot.lane.b32.xlu0 %v1900, 56
      %v1988 = vpop.permute.xlu0 %1987
      %1989 = vrot.lane.b32.xlu0 %v1914, 56
      %v1990 = vpop.permute.xlu0 %1989
      %1991 = vrot.lane.b32.xlu0 %v1928, 56
      %v1992 = vpop.permute.xlu0 %1991
      %1993 = vrot.lane.b32.xlu0 %v1942, 56
      %v1994 = vpop.permute.xlu0 %1993
      %1995 = vrot.lane.b32.xlu0 %v1956, 56
      %v1996 = vpop.permute.xlu0 %1995
      %1997 = vrot.lane.b32.xlu0 %v1970, 56
      %v1998 = vpop.permute.xlu0 %1997
      %1999 = vrot.lane.b32.xlu0 %v1984, 56
      %v2000 = vpop.permute.xlu0 %1999
      %vm2009 = vcmask 519616
      %2010 = vst.msk [vmem:[#allocation4] sm:$0xf] %vm2009, %v1986
      %2011 = vst.msk [vmem:[#allocation4 + $0x4] sm:$0xf] %vm2009, %v1988
      %2012 = vst.msk [vmem:[#allocation4 + $0x8] sm:$0xf] %vm2009, %v1990
      %2013 = vst.msk [vmem:[#allocation4 + $0xc] sm:$0xf] %vm2009, %v1992
      %2014 = vst.msk [vmem:[#allocation4 + $0x10] sm:$0xf] %vm2009, %v1994
      %2015 = vst.msk [vmem:[#allocation4 + $0x14] sm:$0xf] %vm2009, %v1996
      %2016 = vst.msk [vmem:[#allocation4 + $0x18] sm:$0xf] %vm2009, %v1998
      %2017 = vst.msk [vmem:[#allocation4 + $0x1c] sm:$0xf] %vm2009, %v2000
      %v2018 = vld [vmem:[%s1807] sm:$0xe]
      %v2019 = vld [vmem:[%s1807 + $0x4] sm:$0x1]
      %v2020 = vld [vmem:[%s1807 + $0x8] sm:$0xe]
      %v2021 = vld [vmem:[%s1807 + $0xc] sm:$0x1]
      %v2022 = vld [vmem:[%s1807 + $0x10] sm:$0xe]
      %v2023 = vld [vmem:[%s1807 + $0x14] sm:$0x1]
      %v2024 = vld [vmem:[%s1807 + $0x18] sm:$0xe]
      %v2025 = vld [vmem:[%s1807 + $0x1c] sm:$0x1]
      %v2026 = vld [vmem:[%s1807 + $0x20] sm:$0xe]
      %v2027 = vld [vmem:[%s1807 + $0x24] sm:$0x1]
      %v2028 = vld [vmem:[%s1807 + $0x28] sm:$0xe]
      %v2029 = vld [vmem:[%s1807 + $0x2c] sm:$0x1]
      %v2030 = vld [vmem:[%s1807 + $0x30] sm:$0xe]
      %v2031 = vld [vmem:[%s1807 + $0x34] sm:$0x1]
      %v2032 = vld [vmem:[%s1807 + $0x38] sm:$0xe]
      %v2033 = vld [vmem:[%s1807 + $0x3c] sm:$0x1]
      %v2050 = vrot.slane %v2018, 5
      %v2051 = vrot.slane %v2050, 4
      %v2052 = vrot.slane %v2019, 5
      %v2053 = vsel %vm1434, %v2051, %v2052
      %v2054 = vrot.slane %v2020, 5
      %v2055 = vrot.slane %v2054, 4
      %v2056 = vrot.slane %v2021, 5
      %v2057 = vsel %vm1434, %v2055, %v2056
      %v2058 = vrot.slane %v2022, 5
      %v2059 = vrot.slane %v2058, 4
      %v2060 = vrot.slane %v2023, 5
      %v2061 = vsel %vm1434, %v2059, %v2060
      %v2062 = vrot.slane %v2024, 5
      %v2063 = vrot.slane %v2062, 4
      %v2064 = vrot.slane %v2025, 5
      %v2065 = vsel %vm1434, %v2063, %v2064
      %v2066 = vrot.slane %v2026, 5
      %v2067 = vrot.slane %v2066, 4
      %v2068 = vrot.slane %v2027, 5
      %v2069 = vsel %vm1434, %v2067, %v2068
      %v2070 = vrot.slane %v2028, 5
      %v2071 = vrot.slane %v2070, 4
      %v2072 = vrot.slane %v2029, 5
      %v2073 = vsel %vm1434, %v2071, %v2072
      %v2074 = vrot.slane %v2030, 5
      %v2075 = vrot.slane %v2074, 4
      %v2076 = vrot.slane %v2031, 5
      %v2077 = vsel %vm1434, %v2075, %v2076
      %v2078 = vrot.slane %v2032, 5
      %v2079 = vrot.slane %v2078, 4
      %v2080 = vrot.slane %v2033, 5
      %v2081 = vsel %vm1434, %v2079, %v2080
      %2082 = vrot.lane.b32.xlu0 %v2053, 64
      %v2083 = vpop.permute.xlu0 %2082
      %2084 = vrot.lane.b32.xlu0 %v2057, 64
      %v2085 = vpop.permute.xlu0 %2084
      %2086 = vrot.lane.b32.xlu0 %v2061, 64
      %v2087 = vpop.permute.xlu0 %2086
      %2088 = vrot.lane.b32.xlu0 %v2065, 64
      %v2089 = vpop.permute.xlu0 %2088
      %2090 = vrot.lane.b32.xlu0 %v2069, 64
      %v2091 = vpop.permute.xlu0 %2090
      %2092 = vrot.lane.b32.xlu0 %v2073, 64
      %v2093 = vpop.permute.xlu0 %2092
      %2094 = vrot.lane.b32.xlu0 %v2077, 64
      %v2095 = vpop.permute.xlu0 %2094
      %2096 = vrot.lane.b32.xlu0 %v2081, 64
      %v2097 = vpop.permute.xlu0 %2096
      %vm2106 = vcmask 585216
      %2107 = vst.msk [vmem:[#allocation4] sm:$0xf] %vm2106, %v2083
      %2108 = vst.msk [vmem:[#allocation4 + $0x4] sm:$0xf] %vm2106, %v2085
      %2109 = vst.msk [vmem:[#allocation4 + $0x8] sm:$0xf] %vm2106, %v2087
      %2110 = vst.msk [vmem:[#allocation4 + $0xc] sm:$0xf] %vm2106, %v2089
      %2111 = vst.msk [vmem:[#allocation4 + $0x10] sm:$0xf] %vm2106, %v2091
      %2112 = vst.msk [vmem:[#allocation4 + $0x14] sm:$0xf] %vm2106, %v2093
      %2113 = vst.msk [vmem:[#allocation4 + $0x18] sm:$0xf] %vm2106, %v2095
      %2114 = vst.msk [vmem:[#allocation4 + $0x1c] sm:$0xf] %vm2106, %v2097
      %v2115 = vld [vmem:[#allocation4] sm:$0xf]
      %v2116 = vld [vmem:[#allocation4 + $0x4] sm:$0xf]
      %v2117 = vld [vmem:[#allocation4 + $0x8] sm:$0xf]
      %v2118 = vld [vmem:[#allocation4 + $0xc] sm:$0xf]
      %v2119 = vld [vmem:[#allocation4 + $0x10] sm:$0xf]
      %v2120 = vld [vmem:[#allocation4 + $0x14] sm:$0xf]
      %v2121 = vld [vmem:[#allocation4 + $0x18] sm:$0xf]
      %v2122 = vld [vmem:[#allocation4 + $0x1c] sm:$0xf]
      %v2123 = vld [vmem:[%s3] sm:$0xf]
      %v2124 = vld [vmem:[%s3 + $0x4] sm:$0xf]
      %v2125 = vld [vmem:[%s3 + $0x8] sm:$0xf]
      %v2126 = vld [vmem:[%s3 + $0xc] sm:$0xf]
      %v2127 = vld [vmem:[%s3 + $0x10] sm:$0xf]
      %v2128 = vld [vmem:[%s3 + $0x14] sm:$0xf]
      %v2129 = vld [vmem:[%s3 + $0x18] sm:$0xf]
      %v2130 = vld [vmem:[%s3 + $0x1c] sm:$0xf]
      %v2131 = vld [vmem:[%s3 + $0x20] sm:$0xf]
      %v2132 = vld [vmem:[%s4] sm:$0x1]
      %v2134 = vlaneseq
      %v2135 = vshrl.u32 %v2134, 7
      %v2136 = vsub.s32 0, %v2135
      %v2137 = vrot.slane %v2132, %v2136
      %v2147 = vunpack.c.l.b16 %v2115
      %v2148 = vunpack.c.l.b16 %v2116
      %v2149 = vunpack.c.l.b16 %v2117
      %v2150 = vunpack.c.l.b16 %v2118
      %v2151 = vunpack.c.l.b16 %v2119
      %v2152 = vunpack.c.l.b16 %v2120
      %v2153 = vunpack.c.l.b16 %v2121
      %v2154 = vunpack.c.l.b16 %v2122
      %v2155 = vpack.c.b16 %v2148, %v2147
      %v2156 = vpack.c.b16 %v2150, %v2149
      %v2157 = vpack.c.b16 %v2152, %v2151
      %v2158 = vpack.c.b16 %v2154, %v2153
      %v2168 = vunpack.c.l.b16 %v2123
      %v2169 = vunpack.c.l.b16 %v2124
      %v2170 = vunpack.c.l.b16 %v2125
      %v2171 = vunpack.c.l.b16 %v2126
      %v2172 = vunpack.c.l.b16 %v2127
      %v2173 = vunpack.c.l.b16 %v2128
      %v2174 = vunpack.c.l.b16 %v2129
      %v2175 = vunpack.c.l.b16 %v2130
      %v2176 = vunpack.c.l.b16 %v2131
      %v2177 = vpack.c.b16 %v2169, %v2168
      %v2178 = vpack.c.b16 %v2171, %v2170
      %v2179 = vpack.c.b16 %v2173, %v2172
      %v2180 = vpack.c.b16 %v2175, %v2174
      %v2181 = vpack.c.b16 %v2176, %v2176
      %vm2186 = vcmask 588800
      %v2188 = vsel %vm2186, %v2155, 0
      %v2191 = vsel %vm2186, %v2156, 0
      %v2194 = vsel %vm2186, %v2157, 0
      %v2197 = vsel %vm2186, %v2158, 0
      %vm2199 = vcmask 1043456
      %v2201 = vsel %vm2199, %v2181, 0
      %2203 = vmatprep.subr.bf16.mxu0 0
      %2204 = vmatpush1.bf16.msra.mxu0 %v2177
      %2205 = vmatprep.subr.bf16.mxu0 0
      %2206 = vmatpush1.bf16.msra.mxu0 %v2178
      %2207 = vmatprep.subr.bf16.mxu0 0
      %2208 = vmatpush1.bf16.msra.mxu0 %v2179
      %2209 = vmatprep.subr.bf16.mxu0 0
      %2210 = vmatpush1.bf16.msra.mxu0 %v2180
      %2211 = vmatprep.subr.bf16.mxu0 0
      %2212 = vmatpush1.bf16.msra.mxu0 %v2201
      %2213 = vmatprep.subr.bf16.mxu0 0
      %2214 = vmatpush1.bf16.msra.mxu0 0
      %2215 = vmatprep.subr.bf16.mxu0 0
      %2216 = vmatpush1.bf16.msra.mxu0 0
      %2217 = vmatprep.subr.bf16.mxu0 0
      %2218 = vmatpush1.bf16.msra.mxu0 0
      %2219 = vmatprep.subr.bf16.mxu0 0
      %2220 = vmatpush1.bf16.msra.mxu0 0
      %2221 = vmatprep.subr.bf16.mxu0 0
      %2222 = vmatpush1.bf16.msra.mxu0 0
      %2223 = vmatprep.subr.bf16.mxu0 0
      %2224 = vmatpush1.bf16.msra.mxu0 0
      %2225 = vmatprep.subr.bf16.mxu0 0
      %2226 = vmatpush1.bf16.msra.mxu0 0
      %2227 = vmatprep.subr.bf16.mxu0 0
      %2228 = vmatpush1.bf16.msra.mxu0 0
      %2229 = vmatprep.subr.bf16.mxu0 0
      %2230 = vmatpush1.bf16.msra.mxu0 0
      %2231 = vmatprep.subr.bf16.mxu0 0
      %2232 = vmatpush1.bf16.msra.mxu0 0
      %2233 = vmatprep.subr.bf16.mxu0 0
      %2234 = vmatpush1.bf16.msra.mxu0 0
      %2235 = vmatprep.mubr.bf16.mxu0 0
      %2236 = vmatmul.mubr.bf16.gmra.mrb[0].mxu0 %v2188
      %v2237 = vpop.f32.mrb[0].mxu0
      %v2238 = vadd.f32 %v2137, %v2237
      %v2239 = vpop.f32.mrb[0].mxu0
      %v2240 = vpop.f32.mrb[0].mxu0
      %v2241 = vadd.f32 %v2137, %v2240
      %v2242 = vpop.f32.mrb[0].mxu0
      %2243 = vmatprep.mubr.bf16.mxu0 0
      %2244 = vmatmul.mubr.bf16.gmra.mrb[0].mxu0 %v2191
      %v2245 = vpop.f32.mrb[0].mxu0
      %v2246 = vadd.f32 %v2137, %v2245
      %v2247 = vpop.f32.mrb[0].mxu0
      %v2248 = vpop.f32.mrb[0].mxu0
      %v2249 = vadd.f32 %v2137, %v2248
      %v2250 = vpop.f32.mrb[0].mxu0
      %2251 = vmatprep.mubr.bf16.mxu0 0
      %2252 = vmatmul.mubr.bf16.gmra.mrb[0].mxu0 %v2194
      %v2253 = vpop.f32.mrb[0].mxu0
      %v2254 = vadd.f32 %v2137, %v2253
      %v2255 = vpop.f32.mrb[0].mxu0
      %v2256 = vpop.f32.mrb[0].mxu0
      %v2257 = vadd.f32 %v2137, %v2256
      %v2258 = vpop.f32.mrb[0].mxu0
      %2259 = vmatprep.mubr.bf16.mxu0 0
      %2260 = vmatmul.mubr.bf16.gmra.mrb[0].mxu0 %v2197
      %v2261 = vpop.f32.mrb[0].mxu0
      %v2262 = vadd.f32 %v2137, %v2261
      %v2263 = vpop.f32.mrb[0].mxu0
      %v2264 = vpop.f32.mrb[0].mxu0
      %v2265 = vadd.f32 %v2137, %v2264
      %v2266 = vpop.f32.mrb[0].mxu0
      %2267 = vdwg.mxu0
      %v2268 = vld [vmem:[%s5] sm:$0x3]
      %v2269 = vunpack.c.l.b16 %v296
      %v2270 = vunpack.c.l.b16 %v297
      %v2271 = vunpack.c.l.b16 %v298
      %v2272 = vunpack.c.l.b16 %v299
      %v2273 = vunpack.c.l.b16 %v300
      %v2274 = vunpack.c.l.b16 %v301
      %v2275 = vunpack.c.l.b16 %v302
      %v2276 = vunpack.c.l.b16 %v303
      %v2277 = vpack.c.b16 %v2270, %v2269
      %v2278 = vpack.c.b16 %v2272, %v2271
      %v2279 = vpack.c.b16 %v2274, %v2273
      %v2280 = vpack.c.b16 %v2276, %v2275
      %vm2281 = vcmask 31744
      %v2283 = vsel %vm2281, %v2277, 0
      %v2286 = vsel %vm2281, %v2278, 0
      %v2289 = vsel %vm2281, %v2279, 0
      %v2292 = vsel %vm2281, %v2280, 0
      %v2295 = vsel %vm919, %v2268, 0
      %2297 = vmatprep.subr.bf16.mxu0 0
      %2298 = vmatpush1.bf16.msra.mxu0 %v2295
      %2299 = vmatprep.subr.bf16.mxu0 0
      %2300 = vmatpush1.bf16.msra.mxu0 0
      %2301 = vmatprep.subr.bf16.mxu0 0
      %2302 = vmatpush1.bf16.msra.mxu0 0
      %2303 = vmatprep.subr.bf16.mxu0 0
      %2304 = vmatpush1.bf16.msra.mxu0 0
      %2305 = vmatprep.subr.bf16.mxu0 0
      %2306 = vmatpush1.bf16.msra.mxu0 0
      %2307 = vmatprep.subr.bf16.mxu0 0
      %2308 = vmatpush1.bf16.msra.mxu0 0
      %2309 = vmatprep.subr.bf16.mxu0 0
      %2310 = vmatpush1.bf16.msra.mxu0 0
      %2311 = vmatprep.subr.bf16.mxu0 0
      %2312 = vmatpush1.bf16.msra.mxu0 0
      %2313 = vmatprep.subr.bf16.mxu0 0
      %2314 = vmatpush1.bf16.msra.mxu0 0
      %2315 = vmatprep.subr.bf16.mxu0 0
      %2316 = vmatpush1.bf16.msra.mxu0 0
      %2317 = vmatprep.subr.bf16.mxu0 0
      %2318 = vmatpush1.bf16.msra.mxu0 0
      %2319 = vmatprep.subr.bf16.mxu0 0
      %2320 = vmatpush1.bf16.msra.mxu0 0
      %2321 = vmatprep.subr.bf16.mxu0 0
      %2322 = vmatpush1.bf16.msra.mxu0 0
      %2323 = vmatprep.subr.bf16.mxu0 0
      %2324 = vmatpush1.bf16.msra.mxu0 0
      %2325 = vmatprep.subr.bf16.mxu0 0
      %2326 = vmatpush1.bf16.msra.mxu0 0
      %2327 = vmatprep.subr.bf16.mxu0 0
      %2328 = vmatpush1.bf16.msra.mxu0 0
      %2329 = vmatprep.mubr.bf16.mxu0 0
      %2330 = vmatmul.mubr.bf16.gmra.mrb[0].mxu0 %v2283
      %v2331 = vpop.f32.mrb[0].mxu0
      %v2332 = vadd.f32 0.0, %v2331
      %v2333 = vpop.f32.mrb[0].mxu0
      %v2334 = vpop.f32.mrb[0].mxu0
      %v2335 = vadd.f32 0.0, %v2334
      %v2336 = vpop.f32.mrb[0].mxu0
      %2337 = vmatprep.mubr.bf16.mxu0 0
      %2338 = vmatmul.mubr.bf16.gmra.mrb[0].mxu0 %v2286
      %v2339 = vpop.f32.mrb[0].mxu0
      %v2340 = vadd.f32 0.0, %v2339
      %v2341 = vpop.f32.mrb[0].mxu0
      %v2342 = vpop.f32.mrb[0].mxu0
      %v2343 = vadd.f32 0.0, %v2342
      %v2344 = vpop.f32.mrb[0].mxu0
      %2345 = vmatprep.mubr.bf16.mxu0 0
      %2346 = vmatmul.mubr.bf16.gmra.mrb[0].mxu0 %v2289
      %v2347 = vpop.f32.mrb[0].mxu0
      %v2348 = vadd.f32 0.0, %v2347
      %v2349 = vpop.f32.mrb[0].mxu0
      %v2350 = vpop.f32.mrb[0].mxu0
      %v2351 = vadd.f32 0.0, %v2350
      %v2352 = vpop.f32.mrb[0].mxu0
      %2353 = vmatprep.mubr.bf16.mxu0 0
      %2354 = vmatmul.mubr.bf16.gmra.mrb[0].mxu0 %v2292
      %v2355 = vpop.f32.mrb[0].mxu0
      %v2356 = vadd.f32 0.0, %v2355
      %v2357 = vpop.f32.mrb[0].mxu0
      %v2358 = vpop.f32.mrb[0].mxu0
      %v2359 = vadd.f32 0.0, %v2358
      %v2360 = vpop.f32.mrb[0].mxu0
      %2361 = vdwg.mxu0
      %v2362 = vadd.f32 %v2238, %v2332
      %v2363 = vadd.f32 %v2241, %v2335
      %v2364 = vadd.f32 %v2246, %v2340
      %v2365 = vadd.f32 %v2249, %v2343
      %v2366 = vadd.f32 %v2254, %v2348
      %v2367 = vadd.f32 %v2257, %v2351
      %v2368 = vadd.f32 %v2262, %v2356
      %v2369 = vadd.f32 %v2265, %v2359
      %v2370 = vmax.f32 %v2362, 0.0
      %v2371 = vmax.f32 %v2363, 0.0
      %v2372 = vmax.f32 %v2364, 0.0
      %v2373 = vmax.f32 %v2365, 0.0
      %v2374 = vmax.f32 %v2366, 0.0
      %v2375 = vmax.f32 %v2367, 0.0
      %v2376 = vmax.f32 %v2368, 0.0
      %v2377 = vmax.f32 %v2369, 0.0
      %v2378 = vpack.c.bf16 %v2370, %v2370
      %v2379 = vpack.c.bf16 %v2371, %v2371
      %v2380 = vpack.c.bf16 %v2372, %v2372
      %v2381 = vpack.c.bf16 %v2373, %v2373
      %v2382 = vpack.c.bf16 %v2374, %v2374
      %v2383 = vpack.c.bf16 %v2375, %v2375
      %v2384 = vpack.c.bf16 %v2376, %v2376
      %v2385 = vpack.c.bf16 %v2377, %v2377
      %2386 = vst.msk [vmem:[%s251] sm:$0xf] %vm1000, %v2378
      %2387 = vst.msk [vmem:[%s251 + $0x4] sm:$0xf] %vm1000, %v2379
      %2388 = vst.msk [vmem:[%s251 + $0x8] sm:$0xf] %vm1000, %v2380
      %2389 = vst.msk [vmem:[%s251 + $0xc] sm:$0xf] %vm1000, %v2381
      %2390 = vst.msk [vmem:[%s251 + $0x10] sm:$0xf] %vm1000, %v2382
      %2391 = vst.msk [vmem:[%s251 + $0x14] sm:$0xf] %vm1000, %v2383
      %2392 = vst.msk [vmem:[%s251 + $0x18] sm:$0xf] %vm1000, %v2384
      %2393 = vst.msk [vmem:[%s251 + $0x1c] sm:$0xf] %vm1000, %v2385
      %p2394 = scmp.lt.s32.totalorder %s17, 1
      %s2395 = scalar_select %p2394, %s17, 1
      %s2396 = smul.addr %s2395, 8
      %s2397 = smul.addr %s2396, 4
      %s2398 = scalar_lea.vmem %s6, %s2397
      // Predicated region
      $region45: #{a_call__.2} parent=43 // pred_check
        %p2399 = pneg %p166
      $region46: #{a_call__.2} parent=43 // pred_check_branch
        %2401 = sbr.rel (%p2399) target = $region48
      $region47: #{a_call__.2} parent=43 // pred_region
        _
      $region48: #{a_call__.2} parent=43 // pred_fallthru
        _
    $region44: #{a_call__.2} parent=5 // pred_fallthru
      _
    %p2402 = scmp.le.s32.totalorder 2, %s12
    // Predicated region
    $region49: #{a_call__.2} parent=5 // pred_check
      %p2403 = pneg %p2402
    $region50: #{a_call__.2} parent=5 // pred_check_branch
      %2405 = sbr.rel (%p2403) target = $region52
    $region51: #{a_call__.2} parent=5 // pred_region
      %s2406 = ssub.s32 %s12, 2
      // Predicated region
      $region53: #{a_call__.2} parent=51 // pred_check
        %p2407 = pneg %p172
      $region54: #{a_call__.2} parent=51 // pred_check_branch
        %2409 = sbr.rel (%p2407) target = $region56
      $region55: #{a_call__.2} parent=51 // pred_region
        %p2410 = scmp.lt.s32.totalorder %s18, 1
        %s2411 = scalar_select %p2410, %s18, 1
        %s2412 = smul.addr %s2411, 8
        %s2413 = smul.addr %s2412, 4
        %s2414 = scalar_lea.vmem %s6, %s2413
      $region56: #{a_call__.2} parent=51 // pred_fallthru
        _
    $region52: #{a_call__.2} parent=5 // pred_fallthru
      _
  $region6: #{a_call__.2} parent=0 // loop_footer
    %s16 = sadd.s32 1, %s12
  $region7: #{a_call__.2} parent=0 // loop_footer_branch
    %11 = sbr.rel target = $region3
  $region8: #{a_call__.2} parent=0 // loop_exit
    _

// kernel: a_call__.3
$region0: #{a_call__.3}
  #allocation0 [shape = 'u32[]', space=smem, size = 0x4, offset = 0x4, fixed_abs, tag = 'smem constant byte address 0x4 - core index']
  #allocation1 [shape = 'u32[144,128]{1,0:T(1,128)}', space=vmem, size = 0x12000, scoped, tag = 'internal scratch']
  #allocation2 [shape = 'bf16[10,10,8]{2,1,0:T(8,128)(2,1)}', space=vmem, size = 0xa000, scoped, tag = 'scratch operand']
  #allocation3 [shape = 'bf16[10,10,8]{2,1,0:T(8,128)(2,1)}', space=vmem, size = 0xa000, scoped, tag = 'scratch operand']
  #allocation4 [shape = 'bf16[8,8,72]{2,1,0:T(8,128)(2,1)}', space=vmem, size = 0x4000, scoped, tag = 'scratch operand']
  #allocation5 [shape = 'bf16[8,8,72]{2,1,0:T(8,128)(2,1)}', space=vmem, size = 0x4000, scoped, tag = 'scratch operand']
  %s0 = inlined_call_operand.vmem [shape: bf16[2,8,8,8], index: 0, kind: input, shape index: {}]
  %s1 = inlined_call_operand.vmem [shape: bf16[72,8], index: 1, kind: input, shape index: {}]
  %s2 = inlined_call_operand.vmem [shape: f32[1,8], index: 2, kind: input, shape index: {}, may-alias: {2,4}]
  %s3 = inlined_call_operand.vmem [shape: bf16[72,8], index: 3, kind: input, shape index: {}]
  %s4 = inlined_call_operand.vmem [shape: f32[1,8], index: 4, kind: input, shape index: {}, may-alias: {2,4}]
  %s5 = inlined_call_operand.vmem [shape: bf16[2,8,8,8], index: 5, kind: output, shape index: {}]
  %s6 = sld [smem:[#allocation0]]
  $region53: #{a_call__.3} parent=0
    _
  %s8 = ssub.s32 1, %s6
  %s9 = scalar_select 0, %s8, %s6
  loop: start=0, step=1, limit=4
  $region2: #{a_call__.3} parent=0 // loop_pre_header
    _
  $region3: #{a_call__.3} parent=0 // loop_header
    %s11 = sphi 0, %s15
    %p12 = scmp.ge.s32.totalorder %s11, 4
    %s21 = sphi 0, %s23
    %s24 = sphi 0, %s21
    %s25 = sphi 0, %s24
    %s41 = sphi 0, %s25
    %s45 = sphi 0, %s45
    %s47 = sphi 0, %s45
    %s48 = sphi 0, %s47
    %s62 = sphi 0, %s48
    %s66 = sphi 0, %s66
    %s68 = sphi 0, %s66
    %s69 = sphi 0, %s68
    %s83 = sphi 0, %s69
    %s87 = sphi 0, %s87
    %s89 = sphi 0, %s87
    %s90 = sphi 0, %s89
    %s104 = sphi 0, %s90
    %s108 = sphi 0, %s108
    %s110 = sphi 0, %s108
    %s111 = sphi 0, %s110
    %s125 = sphi 0, %s111
    %s131 = sphi 0, %s133
    %s134 = sphi 0, %s131
    %s135 = sphi 0, %s134
    %s151 = sphi 0, %s135
  $region4: #{a_call__.3} parent=0 // loop_header_branch
    %14 = sbr.rel (%p12) target = $region8
  $region5: #{a_call__.3} parent=0 // loop_body
    %s16 = ssub.s32 %s11, 1
    %s17 = ssub.s32 %s11, 2
    %s18 = sadd.s32 %s11, 1
    %s19 = ssub.s32 %s11, %s18
    %p20 = scmp.eq.s32.totalorder %s19, 0
    %s22 = sadd.s32 %s21, 1
    %s23 = scalar_select %p20, %s21, %s22
    %p26 = pneg %p20
    %p27 = scmp.eq.s32.totalorder %s11, 1
    %p28 = por %p26, %p27
    %p29 = scmp.ne.s32.totalorder %s21, %s24
    %p30 = scmp.eq.s32.totalorder %s11, 0
    %p31 = por %p29, %p30
    %p32 = scmp.ne.s32.totalorder %s21, %s24
    %p33 = scmp.eq.s32.totalorder %s16, 1
    %p34 = por %p32, %p33
    %p35 = scmp.ne.s32.totalorder %s24, %s25
    %p36 = scmp.eq.s32.totalorder %s16, 0
    %p37 = por %p35, %p36
    %p38 = scmp.ne.s32.totalorder %s24, %s25
    %p39 = scmp.eq.s32.totalorder %s17, 1
    %p40 = por %p38, %p39
    %p42 = scmp.ne.s32.totalorder %s25, %s41
    %p43 = scmp.eq.s32.totalorder %s17, 0
    %p44 = por %p42, %p43
    %s46 = sadd.s32 %s45, 1
    %p49 = scmp.eq.s32.totalorder %s11, 1
    %p50 = scmp.ne.s32.totalorder %s45, %s47
    %p51 = scmp.eq.s32.totalorder %s11, 0
    %p52 = por %p50, %p51
    %p53 = scmp.ne.s32.totalorder %s45, %s47
    %p54 = scmp.eq.s32.totalorder %s16, 1
    %p55 = por %p53, %p54
    %p56 = scmp.ne.s32.totalorder %s47, %s48
    %p57 = scmp.eq.s32.totalorder %s16, 0
    %p58 = por %p56, %p57
    %p59 = scmp.ne.s32.totalorder %s47, %s48
    %p60 = scmp.eq.s32.totalorder %s17, 1
    %p61 = por %p59, %p60
    %p63 = scmp.ne.s32.totalorder %s48, %s62
    %p64 = scmp.eq.s32.totalorder %s17, 0
    %p65 = por %p63, %p64
    %s67 = sadd.s32 %s66, 1
    %p70 = scmp.eq.s32.totalorder %s11, 1
    %p71 = scmp.ne.s32.totalorder %s66, %s68
    %p72 = scmp.eq.s32.totalorder %s11, 0
    %p73 = por %p71, %p72
    %p74 = scmp.ne.s32.totalorder %s66, %s68
    %p75 = scmp.eq.s32.totalorder %s16, 1
    %p76 = por %p74, %p75
    %p77 = scmp.ne.s32.totalorder %s68, %s69
    %p78 = scmp.eq.s32.totalorder %s16, 0
    %p79 = por %p77, %p78
    %p80 = scmp.ne.s32.totalorder %s68, %s69
    %p81 = scmp.eq.s32.totalorder %s17, 1
    %p82 = por %p80, %p81
    %p84 = scmp.ne.s32.totalorder %s69, %s83
    %p85 = scmp.eq.s32.totalorder %s17, 0
    %p86 = por %p84, %p85
    %s88 = sadd.s32 %s87, 1
    %p91 = scmp.eq.s32.totalorder %s11, 1
    %p92 = scmp.ne.s32.totalorder %s87, %s89
    %p93 = scmp.eq.s32.totalorder %s11, 0
    %p94 = por %p92, %p93
    %p95 = scmp.ne.s32.totalorder %s87, %s89
    %p96 = scmp.eq.s32.totalorder %s16, 1
    %p97 = por %p95, %p96
    %p98 = scmp.ne.s32.totalorder %s89, %s90
    %p99 = scmp.eq.s32.totalorder %s16, 0
    %p100 = por %p98, %p99
    %p101 = scmp.ne.s32.totalorder %s89, %s90
    %p102 = scmp.eq.s32.totalorder %s17, 1
    %p103 = por %p101, %p102
    %p105 = scmp.ne.s32.totalorder %s90, %s104
    %p106 = scmp.eq.s32.totalorder %s17, 0
    %p107 = por %p105, %p106
    %s109 = sadd.s32 %s108, 1
    %p112 = scmp.eq.s32.totalorder %s11, 1
    %p113 = scmp.ne.s32.totalorder %s108, %s110
    %p114 = scmp.eq.s32.totalorder %s11, 0
    %p115 = por %p113, %p114
    %p116 = scmp.ne.s32.totalorder %s108, %s110
    %p117 = scmp.eq.s32.totalorder %s16, 1
    %p118 = por %p116, %p117
    %p119 = scmp.ne.s32.totalorder %s110, %s111
    %p120 = scmp.eq.s32.totalorder %s16, 0
    %p121 = por %p119, %p120
    %p122 = scmp.ne.s32.totalorder %s110, %s111
    %p123 = scmp.eq.s32.totalorder %s17, 1
    %p124 = por %p122, %p123
    %p126 = scmp.ne.s32.totalorder %s111, %s125
    %p127 = scmp.eq.s32.totalorder %s17, 0
    %p128 = por %p126, %p127
    %s129 = ssub.s32 %s11, %s18
    %p130 = scmp.eq.s32.totalorder %s129, 0
    %s132 = sadd.s32 %s131, 1
    %s133 = scalar_select %p130, %s131, %s132
    %p136 = pneg %p130
    %p137 = scmp.eq.s32.totalorder %s11, 1
    %p138 = por %p136, %p137
    %p139 = scmp.ne.s32.totalorder %s131, %s134
    %p140 = scmp.eq.s32.totalorder %s11, 0
    %p141 = por %p139, %p140
    %p142 = scmp.ne.s32.totalorder %s131, %s134
    %p143 = scmp.eq.s32.totalorder %s16, 1
    %p144 = por %p142, %p143
    %p145 = scmp.ne.s32.totalorder %s134, %s135
    %p146 = scmp.eq.s32.totalorder %s16, 0
    %p147 = por %p145, %p146
    %p148 = scmp.ne.s32.totalorder %s134, %s135
    %p149 = scmp.eq.s32.totalorder %s17, 1
    %p150 = por %p148, %p149
    %p152 = scmp.ne.s32.totalorder %s135, %s151
    %p153 = scmp.eq.s32.totalorder %s17, 0
    %p154 = por %p152, %p153
    %p155 = scmp.le.s32.totalorder 1, %s11
    %p156 = scmp.lt.s32.totalorder %s11, 3
    %p157 = pnand %p155, %p156
    %p158 = pneg %p157
    // Predicated region
    $region9: #{a_call__.3} parent=5 // pred_check
      _
    $region10: #{a_call__.3} parent=5 // pred_check_branch
      %160 = sbr.rel (%p157) target = $region12
    $region11: #{a_call__.3} parent=5 // pred_region
      %s161 = ssub.s32 %s11, 1
      // Predicated region
      $region13: #{a_call__.3} parent=11 // pred_check
        %p162 = pneg %p58
      $region14: #{a_call__.3} parent=11 // pred_check_branch
        %164 = sbr.rel (%p162) target = $region16
      $region15: #{a_call__.3} parent=11 // pred_region
        _
      $region16: #{a_call__.3} parent=11 // pred_fallthru
        _
      // Predicated region
      $region17: #{a_call__.3} parent=11 // pred_check
        %p165 = pneg %p79
      $region18: #{a_call__.3} parent=11 // pred_check_branch
        %167 = sbr.rel (%p165) target = $region20
      $region19: #{a_call__.3} parent=11 // pred_region
        _
      $region20: #{a_call__.3} parent=11 // pred_fallthru
        _
      // Predicated region
      $region21: #{a_call__.3} parent=11 // pred_check
        %p168 = pneg %p100
      $region22: #{a_call__.3} parent=11 // pred_check_branch
        %170 = sbr.rel (%p168) target = $region24
      $region23: #{a_call__.3} parent=11 // pred_region
        _
      $region24: #{a_call__.3} parent=11 // pred_fallthru
        _
      // Predicated region
      $region25: #{a_call__.3} parent=11 // pred_check
        %p171 = pneg %p121
      $region26: #{a_call__.3} parent=11 // pred_check_branch
        %173 = sbr.rel (%p171) target = $region28
      $region27: #{a_call__.3} parent=11 // pred_region
        _
      $region28: #{a_call__.3} parent=11 // pred_fallthru
        _
    $region12: #{a_call__.3} parent=5 // pred_fallthru
      _
    %p174 = scmp.lt.s32.totalorder %s11, 2
    // Predicated region
    $region29: #{a_call__.3} parent=5 // pred_check
      %p175 = pneg %p174
    $region30: #{a_call__.3} parent=5 // pred_check_branch
      %177 = sbr.rel (%p175) target = $region32
    $region31: #{a_call__.3} parent=5 // pred_region
      // Predicated region
      $region33: #{a_call__.3} parent=31 // pred_check
        %p178 = pneg %p31
      $region34: #{a_call__.3} parent=31 // pred_check_branch
        %180 = sbr.rel (%p178) target = $region36
      $region35: #{a_call__.3} parent=31 // pred_region
        %p181 = scmp.lt.s32.totalorder %s11, 1
        %s182 = scalar_select %p181, %s11, 1
        %s183 = smul.addr %s182, 8
        %s184 = smul.addr %s183, 4
        %s185 = scalar_lea.vmem %s0, %s184
      $region36: #{a_call__.3} parent=31 // pred_fallthru
        _
    $region32: #{a_call__.3} parent=5 // pred_fallthru
      _
    %p186 = scmp.le.s32.totalorder 1, %s11
    %p187 = scmp.lt.s32.totalorder %s11, 3
    %p188 = pnand %p186, %p187
    %p189 = pneg %p188
    // Predicated region
    $region37: #{a_call__.3} parent=5 // pred_check
      _
    $region38: #{a_call__.3} parent=5 // pred_check_branch
      %191 = sbr.rel (%p188) target = $region40
    $region39: #{a_call__.3} parent=5 // pred_region
      %s192 = ssub.s32 %s11, 1
      %p193 = scmp.lt.s32.totalorder %s16, 1
      %s194 = scalar_select %p193, %s16, 1
      %s195 = smul.addr %s194, 8
      %s196 = smul.addr %s195, 4
      %s197 = scalar_lea.vmem %s0, %s196
      %p198 = pneg %p37
      %p199 = pneg %p34
      %p200 = pneg %p58
      %p201 = pneg %p55
      %p202 = pneg %p79
      %p203 = pneg %p76
      %p204 = pneg %p100
      %p205 = pneg %p97
      %p206 = pneg %p121
      %p207 = pneg %p118
      %p208 = pneg %p147
      %p209 = pneg %p144
      %p210 = scmp.lt.s32.totalorder %s16, 1
      %s211 = scalar_select %p210, %s16, 1
      %s212 = smul.addr %s211, 8
      %s213 = smul.addr %s212, 4
      %s214 = scalar_lea.vmem %s5, %s213
      %p215 = scmp.lt.s32.totalorder %s16, 1
      %s216 = scalar_select %p215, %s16, 1
      %s217 = smul.addr %s216, 8
      %s218 = smul.addr %s217, 4
      %s219 = scalar_lea.vmem %s0, %s218
      %p220 = scmp.lt.s32.totalorder %s16, 1
      %s221 = scalar_select %p220, %s16, 1
      %s222 = smul.addr %s221, 8
      %s223 = smul.addr %s222, 4
      %s224 = scalar_lea.vmem %s5, %s223
      %vm226 = vcmask 60416
      %227 = vst.msk [vmem:[#allocation2] sm:$0xf] %vm226, 0
      %vm228 = vcmask 57344
      %229 = vst.msk [vmem:[#allocation2 + $0x4] sm:$0x1] %vm228, 0
      %s230 = scalar_lea.vmem [#allocation2], 72
      %231 = vst.msk [vmem:[%s230] sm:$0xf] %vm226, 0
      %232 = vst.msk [vmem:[%s230 + $0x4] sm:$0x1] %vm228, 0
      %vm233 = vcmask 57344
      %vm234 = vsmask.f32 256
      %vm235 = vmand %vm233, %vm234
      %v236 = vld [vmem:[#allocation2] sm:$0x1]
      %v237 = vsel %vm235, 0, %v236
      %238 = vst [vmem:[#allocation2] sm:$0x1] %v237
      %v239 = vld [vmem:[#allocation2 + $0x8] sm:$0x1]
      %v240 = vsel %vm235, 0, %v239
      %241 = vst [vmem:[#allocation2 + $0x8] sm:$0x1] %v240
      %v242 = vld [vmem:[#allocation2 + $0x10] sm:$0x1]
      %v243 = vsel %vm235, 0, %v242
      %244 = vst [vmem:[#allocation2 + $0x10] sm:$0x1] %v243
      %v245 = vld [vmem:[#allocation2 + $0x18] sm:$0x1]
      %v246 = vsel %vm235, 0, %v245
      %247 = vst [vmem:[#allocation2 + $0x18] sm:$0x1] %v246
      %v248 = vld [vmem:[#allocation2 + $0x20] sm:$0x1]
      %v249 = vsel %vm235, 0, %v248
      %250 = vst [vmem:[#allocation2 + $0x20] sm:$0x1] %v249
      %v251 = vld [vmem:[#allocation2 + $0x28] sm:$0x1]
      %v252 = vsel %vm235, 0, %v251
      %253 = vst [vmem:[#allocation2 + $0x28] sm:$0x1] %v252
      %v254 = vld [vmem:[#allocation2 + $0x30] sm:$0x1]
      %v255 = vsel %vm235, 0, %v254
      %256 = vst [vmem:[#allocation2 + $0x30] sm:$0x1] %v255
      %v257 = vld [vmem:[#allocation2 + $0x38] sm:$0x1]
      %v258 = vsel %vm235, 0, %v257
      %259 = vst [vmem:[#allocation2 + $0x38] sm:$0x1] %v258
      %v260 = vld [vmem:[#allocation2 + $0x40] sm:$0x1]
      %v261 = vsel %vm235, 0, %v260
      %262 = vst [vmem:[#allocation2 + $0x40] sm:$0x1] %v261
      %v263 = vld [vmem:[#allocation2 + $0x48] sm:$0x1]
      %v264 = vsel %vm235, 0, %v263
      %265 = vst [vmem:[#allocation2 + $0x48] sm:$0x1] %v264
      %vm266 = vsmask.f32 7938
      %vm267 = vmand %vm233, %vm266
      %v268 = vld [vmem:[#allocation2 + $0x4] sm:$0x1]
      %v269 = vsel %vm267, 0, %v268
      %270 = vst [vmem:[#allocation2 + $0x4] sm:$0x1] %v269
      %v271 = vld [vmem:[#allocation2 + $0xc] sm:$0x1]
      %v272 = vsel %vm267, 0, %v271
      %273 = vst [vmem:[#allocation2 + $0xc] sm:$0x1] %v272
      %v274 = vld [vmem:[#allocation2 + $0x14] sm:$0x1]
      %v275 = vsel %vm267, 0, %v274
      %276 = vst [vmem:[#allocation2 + $0x14] sm:$0x1] %v275
      %v277 = vld [vmem:[#allocation2 + $0x1c] sm:$0x1]
      %v278 = vsel %vm267, 0, %v277
      %279 = vst [vmem:[#allocation2 + $0x1c] sm:$0x1] %v278
      %v280 = vld [vmem:[#allocation2 + $0x24] sm:$0x1]
      %v281 = vsel %vm267, 0, %v280
      %282 = vst [vmem:[#allocation2 + $0x24] sm:$0x1] %v281
      %v283 = vld [vmem:[#allocation2 + $0x2c] sm:$0x1]
      %v284 = vsel %vm267, 0, %v283
      %285 = vst [vmem:[#allocation2 + $0x2c] sm:$0x1] %v284
      %v286 = vld [vmem:[#allocation2 + $0x34] sm:$0x1]
      %v287 = vsel %vm267, 0, %v286
      %288 = vst [vmem:[#allocation2 + $0x34] sm:$0x1] %v287
      %v289 = vld [vmem:[#allocation2 + $0x3c] sm:$0x1]
      %v290 = vsel %vm267, 0, %v289
      %291 = vst [vmem:[#allocation2 + $0x3c] sm:$0x1] %v290
      %v292 = vld [vmem:[#allocation2 + $0x44] sm:$0x1]
      %v293 = vsel %vm267, 0, %v292
      %294 = vst [vmem:[#allocation2 + $0x44] sm:$0x1] %v293
      %v295 = vld [vmem:[#allocation2 + $0x4c] sm:$0x1]
      %v296 = vsel %vm267, 0, %v295
      %297 = vst [vmem:[#allocation2 + $0x4c] sm:$0x1] %v296
      %v298 = vld [vmem:[%s219] sm:$0xf]
      %v299 = vld [vmem:[%s219 + $0x4] sm:$0xf]
      %v300 = vld [vmem:[%s219 + $0x8] sm:$0xf]
      %v301 = vld [vmem:[%s219 + $0xc] sm:$0xf]
      %v302 = vld [vmem:[%s219 + $0x10] sm:$0xf]
      %v303 = vld [vmem:[%s219 + $0x14] sm:$0xf]
      %v304 = vld [vmem:[%s219 + $0x18] sm:$0xf]
      %v305 = vld [vmem:[%s219 + $0x1c] sm:$0xf]
      %v307 = vshrl.u32 %v298, 16
      %v309 = vrot.slane %v307, 7
      %v310 = vshll.u32 %v298, 16
      %v312 = vor.u32 %v309, %v310
      %v313 = vrot.slane %v309, 4
      %v315 = vshrl.u32 %v299, 16
      %v317 = vrot.slane %v315, 7
      %v318 = vshll.u32 %v299, 16
      %v320 = vor.u32 %v317, %v318
      %v321 = vrot.slane %v317, 4
      %v323 = vshrl.u32 %v300, 16
      %v325 = vrot.slane %v323, 7
      %v326 = vshll.u32 %v300, 16
      %v328 = vor.u32 %v325, %v326
      %v329 = vrot.slane %v325, 4
      %v331 = vshrl.u32 %v301, 16
      %v333 = vrot.slane %v331, 7
      %v334 = vshll.u32 %v301, 16
      %v336 = vor.u32 %v333, %v334
      %v337 = vrot.slane %v333, 4
      %v339 = vshrl.u32 %v302, 16
      %v341 = vrot.slane %v339, 7
      %v342 = vshll.u32 %v302, 16
      %v344 = vor.u32 %v341, %v342
      %v345 = vrot.slane %v341, 4
      %v347 = vshrl.u32 %v303, 16
      %v349 = vrot.slane %v347, 7
      %v350 = vshll.u32 %v303, 16
      %v352 = vor.u32 %v349, %v350
      %v353 = vrot.slane %v349, 4
      %v355 = vshrl.u32 %v304, 16
      %v357 = vrot.slane %v355, 7
      %v358 = vshll.u32 %v304, 16
      %v360 = vor.u32 %v357, %v358
      %v361 = vrot.slane %v357, 4
      %v363 = vshrl.u32 %v305, 16
      %v365 = vrot.slane %v363, 7
      %v366 = vshll.u32 %v305, 16
      %v368 = vor.u32 %v365, %v366
      %v369 = vrot.slane %v365, 4
      %s386 = scalar_lea.vmem [#allocation2], 8
      %vm387 = vcmask 60416
      %vm388 = vmand %vm387, %vm266
      %v389 = vld [vmem:[%s386] sm:$0xf]
      %v390 = vsel %vm388, %v312, %v389
      %391 = vst [vmem:[%s386] sm:$0xf] %v390
      %v392 = vld [vmem:[%s386 + $0x4] sm:$0x1]
      %v393 = vsel %vm235, %v313, %v392
      %394 = vst [vmem:[%s386 + $0x4] sm:$0x1] %v393
      %v395 = vld [vmem:[%s386 + $0x8] sm:$0xf]
      %v396 = vsel %vm388, %v320, %v395
      %397 = vst [vmem:[%s386 + $0x8] sm:$0xf] %v396
      %v398 = vld [vmem:[%s386 + $0xc] sm:$0x1]
      %v399 = vsel %vm235, %v321, %v398
      %400 = vst [vmem:[%s386 + $0xc] sm:$0x1] %v399
      %v401 = vld [vmem:[%s386 + $0x10] sm:$0xf]
      %v402 = vsel %vm388, %v328, %v401
      %403 = vst [vmem:[%s386 + $0x10] sm:$0xf] %v402
      %v404 = vld [vmem:[%s386 + $0x14] sm:$0x1]
      %v405 = vsel %vm235, %v329, %v404
      %406 = vst [vmem:[%s386 + $0x14] sm:$0x1] %v405
      %v407 = vld [vmem:[%s386 + $0x18] sm:$0xf]
      %v408 = vsel %vm388, %v336, %v407
      %409 = vst [vmem:[%s386 + $0x18] sm:$0xf] %v408
      %v410 = vld [vmem:[%s386 + $0x1c] sm:$0x1]
      %v411 = vsel %vm235, %v337, %v410
      %412 = vst [vmem:[%s386 + $0x1c] sm:$0x1] %v411
      %v413 = vld [vmem:[%s386 + $0x20] sm:$0xf]
      %v414 = vsel %vm388, %v344, %v413
      %415 = vst [vmem:[%s386 + $0x20] sm:$0xf] %v414
      %v416 = vld [vmem:[%s386 + $0x24] sm:$0x1]
      %v417 = vsel %vm235, %v345, %v416
      %418 = vst [vmem:[%s386 + $0x24] sm:$0x1] %v417
      %v419 = vld [vmem:[%s386 + $0x28] sm:$0xf]
      %v420 = vsel %vm388, %v352, %v419
      %421 = vst [vmem:[%s386 + $0x28] sm:$0xf] %v420
      %v422 = vld [vmem:[%s386 + $0x2c] sm:$0x1]
      %v423 = vsel %vm235, %v353, %v422
      %424 = vst [vmem:[%s386 + $0x2c] sm:$0x1] %v423
      %v425 = vld [vmem:[%s386 + $0x30] sm:$0xf]
      %v426 = vsel %vm388, %v360, %v425
      %427 = vst [vmem:[%s386 + $0x30] sm:$0xf] %v426
      %v428 = vld [vmem:[%s386 + $0x34] sm:$0x1]
      %v429 = vsel %vm235, %v361, %v428
      %430 = vst [vmem:[%s386 + $0x34] sm:$0x1] %v429
      %v431 = vld [vmem:[%s386 + $0x38] sm:$0xf]
      %v432 = vsel %vm388, %v368, %v431
      %433 = vst [vmem:[%s386 + $0x38] sm:$0xf] %v432
      %v434 = vld [vmem:[%s386 + $0x3c] sm:$0x1]
      %v435 = vsel %vm235, %v369, %v434
      %436 = vst [vmem:[%s386 + $0x3c] sm:$0x1] %v435
      %v437 = vld [vmem:[#allocation2] sm:$0xf]
      %v438 = vld [vmem:[#allocation2 + $0x8] sm:$0xf]
      %v439 = vld [vmem:[#allocation2 + $0x10] sm:$0xf]
      %v440 = vld [vmem:[#allocation2 + $0x18] sm:$0xf]
      %v441 = vld [vmem:[#allocation2 + $0x20] sm:$0xf]
      %v442 = vld [vmem:[#allocation2 + $0x28] sm:$0xf]
      %v443 = vld [vmem:[#allocation2 + $0x30] sm:$0xf]
      %v444 = vld [vmem:[#allocation2 + $0x38] sm:$0xf]
      %445 = vst.msk [vmem:[#allocation4] sm:$0xf] %vm226, %v437
      %446 = vst.msk [vmem:[#allocation4 + $0x4] sm:$0xf] %vm226, %v438
      %447 = vst.msk [vmem:[#allocation4 + $0x8] sm:$0xf] %vm226, %v439
      %448 = vst.msk [vmem:[#allocation4 + $0xc] sm:$0xf] %vm226, %v440
      %449 = vst.msk [vmem:[#allocation4 + $0x10] sm:$0xf] %vm226, %v441
      %450 = vst.msk [vmem:[#allocation4 + $0x14] sm:$0xf] %vm226, %v442
      %451 = vst.msk [vmem:[#allocation4 + $0x18] sm:$0xf] %vm226, %v443
      %452 = vst.msk [vmem:[#allocation4 + $0x1c] sm:$0xf] %vm226, %v444
      %v453 = vld [vmem:[#allocation2] sm:$0xf]
      %v454 = vld [vmem:[#allocation2 + $0x4] sm:$0x1]
      %v455 = vld [vmem:[#allocation2 + $0x8] sm:$0xf]
      %v456 = vld [vmem:[#allocation2 + $0xc] sm:$0x1]
      %v457 = vld [vmem:[#allocation2 + $0x10] sm:$0xf]
      %v458 = vld [vmem:[#allocation2 + $0x14] sm:$0x1]
      %v459 = vld [vmem:[#allocation2 + $0x18] sm:$0xf]
      %v460 = vld [vmem:[#allocation2 + $0x1c] sm:$0x1]
      %v461 = vld [vmem:[#allocation2 + $0x20] sm:$0xf]
      %v462 = vld [vmem:[#allocation2 + $0x24] sm:$0x1]
      %v463 = vld [vmem:[#allocation2 + $0x28] sm:$0xf]
      %v464 = vld [vmem:[#allocation2 + $0x2c] sm:$0x1]
      %v465 = vld [vmem:[#allocation2 + $0x30] sm:$0xf]
      %v466 = vld [vmem:[#allocation2 + $0x34] sm:$0x1]
      %v467 = vld [vmem:[#allocation2 + $0x38] sm:$0xf]
      %v468 = vld [vmem:[#allocation2 + $0x3c] sm:$0x1]
      %vm469 = vsmask.f32 3328
      %vm470 = vsmask.f32 7440
      %vm471 = vmor %vm469, %vm470
      %v473 = vshrl.u32 %v453, 16
      %v475 = vrot.slane %v473, 4
      %v476 = vshll.u32 %v453, 16
      %v478 = vrot.slane %v476, 5
      %v479 = vor.u32 %v475, %v478
      %v480 = vrot.slane %v479, 4
      %v482 = vshll.u32 %v454, 16
      %v484 = vrot.slane %v482, 5
      %v485 = vsel %vm471, %v480, %v484
      %v487 = vshrl.u32 %v455, 16
      %v489 = vrot.slane %v487, 4
      %v490 = vshll.u32 %v455, 16
      %v492 = vrot.slane %v490, 5
      %v493 = vor.u32 %v489, %v492
      %v494 = vrot.slane %v493, 4
      %v496 = vshll.u32 %v456, 16
      %v498 = vrot.slane %v496, 5
      %v499 = vsel %vm471, %v494, %v498
      %v501 = vshrl.u32 %v457, 16
      %v503 = vrot.slane %v501, 4
      %v504 = vshll.u32 %v457, 16
      %v506 = vrot.slane %v504, 5
      %v507 = vor.u32 %v503, %v506
      %v508 = vrot.slane %v507, 4
      %v510 = vshll.u32 %v458, 16
      %v512 = vrot.slane %v510, 5
      %v513 = vsel %vm471, %v508, %v512
      %v515 = vshrl.u32 %v459, 16
      %v517 = vrot.slane %v515, 4
      %v518 = vshll.u32 %v459, 16
      %v520 = vrot.slane %v518, 5
      %v521 = vor.u32 %v517, %v520
      %v522 = vrot.slane %v521, 4
      %v524 = vshll.u32 %v460, 16
      %v526 = vrot.slane %v524, 5
      %v527 = vsel %vm471, %v522, %v526
      %v529 = vshrl.u32 %v461, 16
      %v531 = vrot.slane %v529, 4
      %v532 = vshll.u32 %v461, 16
      %v534 = vrot.slane %v532, 5
      %v535 = vor.u32 %v531, %v534
      %v536 = vrot.slane %v535, 4
      %v538 = vshll.u32 %v462, 16
      %v540 = vrot.slane %v538, 5
      %v541 = vsel %vm471, %v536, %v540
      %v543 = vshrl.u32 %v463, 16
      %v545 = vrot.slane %v543, 4
      %v546 = vshll.u32 %v463, 16
      %v548 = vrot.slane %v546, 5
      %v549 = vor.u32 %v545, %v548
      %v550 = vrot.slane %v549, 4
      %v552 = vshll.u32 %v464, 16
      %v554 = vrot.slane %v552, 5
      %v555 = vsel %vm471, %v550, %v554
      %v557 = vshrl.u32 %v465, 16
      %v559 = vrot.slane %v557, 4
      %v560 = vshll.u32 %v465, 16
      %v562 = vrot.slane %v560, 5
      %v563 = vor.u32 %v559, %v562
      %v564 = vrot.slane %v563, 4
      %v566 = vshll.u32 %v466, 16
      %v568 = vrot.slane %v566, 5
      %v569 = vsel %vm471, %v564, %v568
      %v571 = vshrl.u32 %v467, 16
      %v573 = vrot.slane %v571, 4
      %v574 = vshll.u32 %v467, 16
      %v576 = vrot.slane %v574, 5
      %v577 = vor.u32 %v573, %v576
      %v578 = vrot.slane %v577, 4
      %v580 = vshll.u32 %v468, 16
      %v582 = vrot.slane %v580, 5
      %v583 = vsel %vm471, %v578, %v582
      %584 = vrot.lane.b32.xlu0 %v485, 8
      %v585 = vpop.permute.xlu0 %584
      %586 = vrot.lane.b32.xlu0 %v499, 8
      %v587 = vpop.permute.xlu0 %586
      %588 = vrot.lane.b32.xlu0 %v513, 8
      %v589 = vpop.permute.xlu0 %588
      %590 = vrot.lane.b32.xlu0 %v527, 8
      %v591 = vpop.permute.xlu0 %590
      %592 = vrot.lane.b32.xlu0 %v541, 8
      %v593 = vpop.permute.xlu0 %592
      %594 = vrot.lane.b32.xlu0 %v555, 8
      %v595 = vpop.permute.xlu0 %594
      %596 = vrot.lane.b32.xlu0 %v569, 8
      %v597 = vpop.permute.xlu0 %596
      %598 = vrot.lane.b32.xlu0 %v583, 8
      %v599 = vpop.permute.xlu0 %598
      %vm608 = vcmask 126016
      %609 = vst.msk [vmem:[#allocation4] sm:$0xf] %vm608, %v585
      %610 = vst.msk [vmem:[#allocation4 + $0x4] sm:$0xf] %vm608, %v587
      %611 = vst.msk [vmem:[#allocation4 + $0x8] sm:$0xf] %vm608, %v589
      %612 = vst.msk [vmem:[#allocation4 + $0xc] sm:$0xf] %vm608, %v591
      %613 = vst.msk [vmem:[#allocation4 + $0x10] sm:$0xf] %vm608, %v593
      %614 = vst.msk [vmem:[#allocation4 + $0x14] sm:$0xf] %vm608, %v595
      %615 = vst.msk [vmem:[#allocation4 + $0x18] sm:$0xf] %vm608, %v597
      %616 = vst.msk [vmem:[#allocation4 + $0x1c] sm:$0xf] %vm608, %v599
      %v617 = vld [vmem:[#allocation2] sm:$0xe]
      %v618 = vld [vmem:[#allocation2 + $0x4] sm:$0x1]
      %v619 = vld [vmem:[#allocation2 + $0x8] sm:$0xe]
      %v620 = vld [vmem:[#allocation2 + $0xc] sm:$0x1]
      %v621 = vld [vmem:[#allocation2 + $0x10] sm:$0xe]
      %v622 = vld [vmem:[#allocation2 + $0x14] sm:$0x1]
      %v623 = vld [vmem:[#allocation2 + $0x18] sm:$0xe]
      %v624 = vld [vmem:[#allocation2 + $0x1c] sm:$0x1]
      %v625 = vld [vmem:[#allocation2 + $0x20] sm:$0xe]
      %v626 = vld [vmem:[#allocation2 + $0x24] sm:$0x1]
      %v627 = vld [vmem:[#allocation2 + $0x28] sm:$0xe]
      %v628 = vld [vmem:[#allocation2 + $0x2c] sm:$0x1]
      %v629 = vld [vmem:[#allocation2 + $0x30] sm:$0xe]
      %v630 = vld [vmem:[#allocation2 + $0x34] sm:$0x1]
      %v631 = vld [vmem:[#allocation2 + $0x38] sm:$0xe]
      %v632 = vld [vmem:[#allocation2 + $0x3c] sm:$0x1]
      %vm649 = vcmask 1042432
      %vm650 = vcmask 1046532
      %vm651 = vmor %vm649, %vm650
      %v652 = vrot.slane %v617, 5
      %v653 = vrot.slane %v652, 4
      %v654 = vrot.slane %v618, 5
      %v655 = vsel %vm651, %v653, %v654
      %v656 = vrot.slane %v619, 5
      %v657 = vrot.slane %v656, 4
      %v658 = vrot.slane %v620, 5
      %v659 = vsel %vm651, %v657, %v658
      %v660 = vrot.slane %v621, 5
      %v661 = vrot.slane %v660, 4
      %v662 = vrot.slane %v622, 5
      %v663 = vsel %vm651, %v661, %v662
      %v664 = vrot.slane %v623, 5
      %v665 = vrot.slane %v664, 4
      %v666 = vrot.slane %v624, 5
      %v667 = vsel %vm651, %v665, %v666
      %v668 = vrot.slane %v625, 5
      %v669 = vrot.slane %v668, 4
      %v670 = vrot.slane %v626, 5
      %v671 = vsel %vm651, %v669, %v670
      %v672 = vrot.slane %v627, 5
      %v673 = vrot.slane %v672, 4
      %v674 = vrot.slane %v628, 5
      %v675 = vsel %vm651, %v673, %v674
      %v676 = vrot.slane %v629, 5
      %v677 = vrot.slane %v676, 4
      %v678 = vrot.slane %v630, 5
      %v679 = vsel %vm651, %v677, %v678
      %v680 = vrot.slane %v631, 5
      %v681 = vrot.slane %v680, 4
      %v682 = vrot.slane %v632, 5
      %v683 = vsel %vm651, %v681, %v682
      %684 = vrot.lane.b32.xlu0 %v655, 16
      %v685 = vpop.permute.xlu0 %684
      %686 = vrot.lane.b32.xlu0 %v659, 16
      %v687 = vpop.permute.xlu0 %686
      %688 = vrot.lane.b32.xlu0 %v663, 16
      %v689 = vpop.permute.xlu0 %688
      %690 = vrot.lane.b32.xlu0 %v667, 16
      %v691 = vpop.permute.xlu0 %690
      %692 = vrot.lane.b32.xlu0 %v671, 16
      %v693 = vpop.permute.xlu0 %692
      %694 = vrot.lane.b32.xlu0 %v675, 16
      %v695 = vpop.permute.xlu0 %694
      %696 = vrot.lane.b32.xlu0 %v679, 16
      %v697 = vpop.permute.xlu0 %696
      %698 = vrot.lane.b32.xlu0 %v683, 16
      %v699 = vpop.permute.xlu0 %698
      %vm708 = vcmask 191616
      %709 = vst.msk [vmem:[#allocation4] sm:$0xf] %vm708, %v685
      %710 = vst.msk [vmem:[#allocation4 + $0x4] sm:$0xf] %vm708, %v687
      %711 = vst.msk [vmem:[#allocation4 + $0x8] sm:$0xf] %vm708, %v689
      %712 = vst.msk [vmem:[#allocation4 + $0xc] sm:$0xf] %vm708, %v691
      %713 = vst.msk [vmem:[#allocation4 + $0x10] sm:$0xf] %vm708, %v693
      %714 = vst.msk [vmem:[#allocation4 + $0x14] sm:$0xf] %vm708, %v695
      %715 = vst.msk [vmem:[#allocation4 + $0x18] sm:$0xf] %vm708, %v697
      %716 = vst.msk [vmem:[#allocation4 + $0x1c] sm:$0xf] %vm708, %v699
      %v717 = vld [vmem:[%s386] sm:$0xf]
      %v718 = vld [vmem:[%s386 + $0x8] sm:$0xf]
      %v719 = vld [vmem:[%s386 + $0x10] sm:$0xf]
      %v720 = vld [vmem:[%s386 + $0x18] sm:$0xf]
      %v721 = vld [vmem:[%s386 + $0x20] sm:$0xf]
      %v722 = vld [vmem:[%s386 + $0x28] sm:$0xf]
      %v723 = vld [vmem:[%s386 + $0x30] sm:$0xf]
      %v724 = vld [vmem:[%s386 + $0x38] sm:$0xf]
      %733 = vrot.lane.b32.xlu0 %v717, 24
      %v734 = vpop.permute.xlu0 %733
      %735 = vrot.lane.b32.xlu0 %v718, 24
      %v736 = vpop.permute.xlu0 %735
      %737 = vrot.lane.b32.xlu0 %v719, 24
      %v738 = vpop.permute.xlu0 %737
      %739 = vrot.lane.b32.xlu0 %v720, 24
      %v740 = vpop.permute.xlu0 %739
      %741 = vrot.lane.b32.xlu0 %v721, 24
      %v742 = vpop.permute.xlu0 %741
      %743 = vrot.lane.b32.xlu0 %v722, 24
      %v744 = vpop.permute.xlu0 %743
      %745 = vrot.lane.b32.xlu0 %v723, 24
      %v746 = vpop.permute.xlu0 %745
      %747 = vrot.lane.b32.xlu0 %v724, 24
      %v748 = vpop.permute.xlu0 %747
      %vm757 = vcmask 257216
      %758 = vst.msk [vmem:[#allocation4] sm:$0xf] %vm757, %v734
      %759 = vst.msk [vmem:[#allocation4 + $0x4] sm:$0xf] %vm757, %v736
      %760 = vst.msk [vmem:[#allocation4 + $0x8] sm:$0xf] %vm757, %v738
      %761 = vst.msk [vmem:[#allocation4 + $0xc] sm:$0xf] %vm757, %v740
      %762 = vst.msk [vmem:[#allocation4 + $0x10] sm:$0xf] %vm757, %v742
      %763 = vst.msk [vmem:[#allocation4 + $0x14] sm:$0xf] %vm757, %v744
      %764 = vst.msk [vmem:[#allocation4 + $0x18] sm:$0xf] %vm757, %v746
      %765 = vst.msk [vmem:[#allocation4 + $0x1c] sm:$0xf] %vm757, %v748
      %v766 = vld [vmem:[%s386] sm:$0xf]
      %v767 = vld [vmem:[%s386 + $0x4] sm:$0x1]
      %v768 = vld [vmem:[%s386 + $0x8] sm:$0xf]
      %v769 = vld [vmem:[%s386 + $0xc] sm:$0x1]
      %v770 = vld [vmem:[%s386 + $0x10] sm:$0xf]
      %v771 = vld [vmem:[%s386 + $0x14] sm:$0x1]
      %v772 = vld [vmem:[%s386 + $0x18] sm:$0xf]
      %v773 = vld [vmem:[%s386 + $0x1c] sm:$0x1]
      %v774 = vld [vmem:[%s386 + $0x20] sm:$0xf]
      %v775 = vld [vmem:[%s386 + $0x24] sm:$0x1]
      %v776 = vld [vmem:[%s386 + $0x28] sm:$0xf]
      %v777 = vld [vmem:[%s386 + $0x2c] sm:$0x1]
      %v778 = vld [vmem:[%s386 + $0x30] sm:$0xf]
      %v779 = vld [vmem:[%s386 + $0x34] sm:$0x1]
      %v780 = vld [vmem:[%s386 + $0x38] sm:$0xf]
      %v781 = vld [vmem:[%s386 + $0x3c] sm:$0x1]
      %v783 = vshrl.u32 %v766, 16
      %v785 = vrot.slane %v783, 4
      %v786 = vshll.u32 %v766, 16
      %v788 = vrot.slane %v786, 5
      %v789 = vor.u32 %v785, %v788
      %v790 = vrot.slane %v789, 4
      %v792 = vshll.u32 %v767, 16
      %v794 = vrot.slane %v792, 5
      %v795 = vsel %vm471, %v790, %v794
      %v797 = vshrl.u32 %v768, 16
      %v799 = vrot.slane %v797, 4
      %v800 = vshll.u32 %v768, 16
      %v802 = vrot.slane %v800, 5
      %v803 = vor.u32 %v799, %v802
      %v804 = vrot.slane %v803, 4
      %v806 = vshll.u32 %v769, 16
      %v808 = vrot.slane %v806, 5
      %v809 = vsel %vm471, %v804, %v808
      %v811 = vshrl.u32 %v770, 16
      %v813 = vrot.slane %v811, 4
      %v814 = vshll.u32 %v770, 16
      %v816 = vrot.slane %v814, 5
      %v817 = vor.u32 %v813, %v816
      %v818 = vrot.slane %v817, 4
      %v820 = vshll.u32 %v771, 16
      %v822 = vrot.slane %v820, 5
      %v823 = vsel %vm471, %v818, %v822
      %v825 = vshrl.u32 %v772, 16
      %v827 = vrot.slane %v825, 4
      %v828 = vshll.u32 %v772, 16
      %v830 = vrot.slane %v828, 5
      %v831 = vor.u32 %v827, %v830
      %v832 = vrot.slane %v831, 4
      %v834 = vshll.u32 %v773, 16
      %v836 = vrot.slane %v834, 5
      %v837 = vsel %vm471, %v832, %v836
      %v839 = vshrl.u32 %v774, 16
      %v841 = vrot.slane %v839, 4
      %v842 = vshll.u32 %v774, 16
      %v844 = vrot.slane %v842, 5
      %v845 = vor.u32 %v841, %v844
      %v846 = vrot.slane %v845, 4
      %v848 = vshll.u32 %v775, 16
      %v850 = vrot.slane %v848, 5
      %v851 = vsel %vm471, %v846, %v850
      %v853 = vshrl.u32 %v776, 16
      %v855 = vrot.slane %v853, 4
      %v856 = vshll.u32 %v776, 16
      %v858 = vrot.slane %v856, 5
      %v859 = vor.u32 %v855, %v858
      %v860 = vrot.slane %v859, 4
      %v862 = vshll.u32 %v777, 16
      %v864 = vrot.slane %v862, 5
      %v865 = vsel %vm471, %v860, %v864
      %v867 = vshrl.u32 %v778, 16
      %v869 = vrot.slane %v867, 4
      %v870 = vshll.u32 %v778, 16
      %v872 = vrot.slane %v870, 5
      %v873 = vor.u32 %v869, %v872
      %v874 = vrot.slane %v873, 4
      %v876 = vshll.u32 %v779, 16
      %v878 = vrot.slane %v876, 5
      %v879 = vsel %vm471, %v874, %v878
      %v881 = vshrl.u32 %v780, 16
      %v883 = vrot.slane %v881, 4
      %v884 = vshll.u32 %v780, 16
      %v886 = vrot.slane %v884, 5
      %v887 = vor.u32 %v883, %v886
      %v888 = vrot.slane %v887, 4
      %v890 = vshll.u32 %v781, 16
      %v892 = vrot.slane %v890, 5
      %v893 = vsel %vm471, %v888, %v892
      %894 = vrot.lane.b32.xlu0 %v795, 32
      %v895 = vpop.permute.xlu0 %894
      %896 = vrot.lane.b32.xlu0 %v809, 32
      %v897 = vpop.permute.xlu0 %896
      %898 = vrot.lane.b32.xlu0 %v823, 32
      %v899 = vpop.permute.xlu0 %898
      %900 = vrot.lane.b32.xlu0 %v837, 32
      %v901 = vpop.permute.xlu0 %900
      %902 = vrot.lane.b32.xlu0 %v851, 32
      %v903 = vpop.permute.xlu0 %902
      %904 = vrot.lane.b32.xlu0 %v865, 32
      %v905 = vpop.permute.xlu0 %904
      %906 = vrot.lane.b32.xlu0 %v879, 32
      %v907 = vpop.permute.xlu0 %906
      %908 = vrot.lane.b32.xlu0 %v893, 32
      %v909 = vpop.permute.xlu0 %908
      %vm918 = vcmask 322816
      %919 = vst.msk [vmem:[#allocation4] sm:$0xf] %vm918, %v895
      %920 = vst.msk [vmem:[#allocation4 + $0x4] sm:$0xf] %vm918, %v897
      %921 = vst.msk [vmem:[#allocation4 + $0x8] sm:$0xf] %vm918, %v899
      %922 = vst.msk [vmem:[#allocation4 + $0xc] sm:$0xf] %vm918, %v901
      %923 = vst.msk [vmem:[#allocation4 + $0x10] sm:$0xf] %vm918, %v903
      %924 = vst.msk [vmem:[#allocation4 + $0x14] sm:$0xf] %vm918, %v905
      %925 = vst.msk [vmem:[#allocation4 + $0x18] sm:$0xf] %vm918, %v907
      %926 = vst.msk [vmem:[#allocation4 + $0x1c] sm:$0xf] %vm918, %v909
      %v927 = vld [vmem:[%s386] sm:$0xe]
      %v928 = vld [vmem:[%s386 + $0x4] sm:$0x1]
      %v929 = vld [vmem:[%s386 + $0x8] sm:$0xe]
      %v930 = vld [vmem:[%s386 + $0xc] sm:$0x1]
      %v931 = vld [vmem:[%s386 + $0x10] sm:$0xe]
      %v932 = vld [vmem:[%s386 + $0x14] sm:$0x1]
      %v933 = vld [vmem:[%s386 + $0x18] sm:$0xe]
      %v934 = vld [vmem:[%s386 + $0x1c] sm:$0x1]
      %v935 = vld [vmem:[%s386 + $0x20] sm:$0xe]
      %v936 = vld [vmem:[%s386 + $0x24] sm:$0x1]
      %v937 = vld [vmem:[%s386 + $0x28] sm:$0xe]
      %v938 = vld [vmem:[%s386 + $0x2c] sm:$0x1]
      %v939 = vld [vmem:[%s386 + $0x30] sm:$0xe]
      %v940 = vld [vmem:[%s386 + $0x34] sm:$0x1]
      %v941 = vld [vmem:[%s386 + $0x38] sm:$0xe]
      %v942 = vld [vmem:[%s386 + $0x3c] sm:$0x1]
      %v959 = vrot.slane %v927, 5
      %v960 = vrot.slane %v959, 4
      %v961 = vrot.slane %v928, 5
      %v962 = vsel %vm651, %v960, %v961
      %v963 = vrot.slane %v929, 5
      %v964 = vrot.slane %v963, 4
      %v965 = vrot.slane %v930, 5
      %v966 = vsel %vm651, %v964, %v965
      %v967 = vrot.slane %v931, 5
      %v968 = vrot.slane %v967, 4
      %v969 = vrot.slane %v932, 5
      %v970 = vsel %vm651, %v968, %v969
      %v971 = vrot.slane %v933, 5
      %v972 = vrot.slane %v971, 4
      %v973 = vrot.slane %v934, 5
      %v974 = vsel %vm651, %v972, %v973
      %v975 = vrot.slane %v935, 5
      %v976 = vrot.slane %v975, 4
      %v977 = vrot.slane %v936, 5
      %v978 = vsel %vm651, %v976, %v977
      %v979 = vrot.slane %v937, 5
      %v980 = vrot.slane %v979, 4
      %v981 = vrot.slane %v938, 5
      %v982 = vsel %vm651, %v980, %v981
      %v983 = vrot.slane %v939, 5
      %v984 = vrot.slane %v983, 4
      %v985 = vrot.slane %v940, 5
      %v986 = vsel %vm651, %v984, %v985
      %v987 = vrot.slane %v941, 5
      %v988 = vrot.slane %v987, 4
      %v989 = vrot.slane %v942, 5
      %v990 = vsel %vm651, %v988, %v989
      %991 = vrot.lane.b32.xlu0 %v962, 40
      %v992 = vpop.permute.xlu0 %991
      %993 = vrot.lane.b32.xlu0 %v966, 40
      %v994 = vpop.permute.xlu0 %993
      %995 = vrot.lane.b32.xlu0 %v970, 40
      %v996 = vpop.permute.xlu0 %995
      %997 = vrot.lane.b32.xlu0 %v974, 40
      %v998 = vpop.permute.xlu0 %997
      %999 = vrot.lane.b32.xlu0 %v978, 40
      %v1000 = vpop.permute.xlu0 %999
      %1001 = vrot.lane.b32.xlu0 %v982, 40
      %v1002 = vpop.permute.xlu0 %1001
      %1003 = vrot.lane.b32.xlu0 %v986, 40
      %v1004 = vpop.permute.xlu0 %1003
      %1005 = vrot.lane.b32.xlu0 %v990, 40
      %v1006 = vpop.permute.xlu0 %1005
      %vm1015 = vcmask 388416
      %1016 = vst.msk [vmem:[#allocation4] sm:$0xf] %vm1015, %v992
      %1017 = vst.msk [vmem:[#allocation4 + $0x4] sm:$0xf] %vm1015, %v994
      %1018 = vst.msk [vmem:[#allocation4 + $0x8] sm:$0xf] %vm1015, %v996
      %1019 = vst.msk [vmem:[#allocation4 + $0xc] sm:$0xf] %vm1015, %v998
      %1020 = vst.msk [vmem:[#allocation4 + $0x10] sm:$0xf] %vm1015, %v1000
      %1021 = vst.msk [vmem:[#allocation4 + $0x14] sm:$0xf] %vm1015, %v1002
      %1022 = vst.msk [vmem:[#allocation4 + $0x18] sm:$0xf] %vm1015, %v1004
      %1023 = vst.msk [vmem:[#allocation4 + $0x1c] sm:$0xf] %vm1015, %v1006
      %s1024 = scalar_lea.vmem [#allocation2], 16
      %v1025 = vld [vmem:[%s1024] sm:$0xf]
      %v1026 = vld [vmem:[%s1024 + $0x8] sm:$0xf]
      %v1027 = vld [vmem:[%s1024 + $0x10] sm:$0xf]
      %v1028 = vld [vmem:[%s1024 + $0x18] sm:$0xf]
      %v1029 = vld [vmem:[%s1024 + $0x20] sm:$0xf]
      %v1030 = vld [vmem:[%s1024 + $0x28] sm:$0xf]
      %v1031 = vld [vmem:[%s1024 + $0x30] sm:$0xf]
      %v1032 = vld [vmem:[%s1024 + $0x38] sm:$0xf]
      %1041 = vrot.lane.b32.xlu0 %v1025, 48
      %v1042 = vpop.permute.xlu0 %1041
      %1043 = vrot.lane.b32.xlu0 %v1026, 48
      %v1044 = vpop.permute.xlu0 %1043
      %1045 = vrot.lane.b32.xlu0 %v1027, 48
      %v1046 = vpop.permute.xlu0 %1045
      %1047 = vrot.lane.b32.xlu0 %v1028, 48
      %v1048 = vpop.permute.xlu0 %1047
      %1049 = vrot.lane.b32.xlu0 %v1029, 48
      %v1050 = vpop.permute.xlu0 %1049
      %1051 = vrot.lane.b32.xlu0 %v1030, 48
      %v1052 = vpop.permute.xlu0 %1051
      %1053 = vrot.lane.b32.xlu0 %v1031, 48
      %v1054 = vpop.permute.xlu0 %1053
      %1055 = vrot.lane.b32.xlu0 %v1032, 48
      %v1056 = vpop.permute.xlu0 %1055
      %vm1065 = vcmask 454016
      %1066 = vst.msk [vmem:[#allocation4] sm:$0xf] %vm1065, %v1042
      %1067 = vst.msk [vmem:[#allocation4 + $0x4] sm:$0xf] %vm1065, %v1044
      %1068 = vst.msk [vmem:[#allocation4 + $0x8] sm:$0xf] %vm1065, %v1046
      %1069 = vst.msk [vmem:[#allocation4 + $0xc] sm:$0xf] %vm1065, %v1048
      %1070 = vst.msk [vmem:[#allocation4 + $0x10] sm:$0xf] %vm1065, %v1050
      %1071 = vst.msk [vmem:[#allocation4 + $0x14] sm:$0xf] %vm1065, %v1052
      %1072 = vst.msk [vmem:[#allocation4 + $0x18] sm:$0xf] %vm1065, %v1054
      %1073 = vst.msk [vmem:[#allocation4 + $0x1c] sm:$0xf] %vm1065, %v1056
      %v1074 = vld [vmem:[%s1024] sm:$0xf]
      %v1075 = vld [vmem:[%s1024 + $0x4] sm:$0x1]
      %v1076 = vld [vmem:[%s1024 + $0x8] sm:$0xf]
      %v1077 = vld [vmem:[%s1024 + $0xc] sm:$0x1]
      %v1078 = vld [vmem:[%s1024 + $0x10] sm:$0xf]
      %v1079 = vld [vmem:[%s1024 + $0x14] sm:$0x1]
      %v1080 = vld [vmem:[%s1024 + $0x18] sm:$0xf]
      %v1081 = vld [vmem:[%s1024 + $0x1c] sm:$0x1]
      %v1082 = vld [vmem:[%s1024 + $0x20] sm:$0xf]
      %v1083 = vld [vmem:[%s1024 + $0x24] sm:$0x1]
      %v1084 = vld [vmem:[%s1024 + $0x28] sm:$0xf]
      %v1085 = vld [vmem:[%s1024 + $0x2c] sm:$0x1]
      %v1086 = vld [vmem:[%s1024 + $0x30] sm:$0xf]
      %v1087 = vld [vmem:[%s1024 + $0x34] sm:$0x1]
      %v1088 = vld [vmem:[%s1024 + $0x38] sm:$0xf]
      %v1089 = vld [vmem:[%s1024 + $0x3c] sm:$0x1]
      %v1091 = vshrl.u32 %v1074, 16
      %v1093 = vrot.slane %v1091, 4
      %v1094 = vshll.u32 %v1074, 16
      %v1096 = vrot.slane %v1094, 5
      %v1097 = vor.u32 %v1093, %v1096
      %v1098 = vrot.slane %v1097, 4
      %v1100 = vshll.u32 %v1075, 16
      %v1102 = vrot.slane %v1100, 5
      %v1103 = vsel %vm471, %v1098, %v1102
      %v1105 = vshrl.u32 %v1076, 16
      %v1107 = vrot.slane %v1105, 4
      %v1108 = vshll.u32 %v1076, 16
      %v1110 = vrot.slane %v1108, 5
      %v1111 = vor.u32 %v1107, %v1110
      %v1112 = vrot.slane %v1111, 4
      %v1114 = vshll.u32 %v1077, 16
      %v1116 = vrot.slane %v1114, 5
      %v1117 = vsel %vm471, %v1112, %v1116
      %v1119 = vshrl.u32 %v1078, 16
      %v1121 = vrot.slane %v1119, 4
      %v1122 = vshll.u32 %v1078, 16
      %v1124 = vrot.slane %v1122, 5
      %v1125 = vor.u32 %v1121, %v1124
      %v1126 = vrot.slane %v1125, 4
      %v1128 = vshll.u32 %v1079, 16
      %v1130 = vrot.slane %v1128, 5
      %v1131 = vsel %vm471, %v1126, %v1130
      %v1133 = vshrl.u32 %v1080, 16
      %v1135 = vrot.slane %v1133, 4
      %v1136 = vshll.u32 %v1080, 16
      %v1138 = vrot.slane %v1136, 5
      %v1139 = vor.u32 %v1135, %v1138
      %v1140 = vrot.slane %v1139, 4
      %v1142 = vshll.u32 %v1081, 16
      %v1144 = vrot.slane %v1142, 5
      %v1145 = vsel %vm471, %v1140, %v1144
      %v1147 = vshrl.u32 %v1082, 16
      %v1149 = vrot.slane %v1147, 4
      %v1150 = vshll.u32 %v1082, 16
      %v1152 = vrot.slane %v1150, 5
      %v1153 = vor.u32 %v1149, %v1152
      %v1154 = vrot.slane %v1153, 4
      %v1156 = vshll.u32 %v1083, 16
      %v1158 = vrot.slane %v1156, 5
      %v1159 = vsel %vm471, %v1154, %v1158
      %v1161 = vshrl.u32 %v1084, 16
      %v1163 = vrot.slane %v1161, 4
      %v1164 = vshll.u32 %v1084, 16
      %v1166 = vrot.slane %v1164, 5
      %v1167 = vor.u32 %v1163, %v1166
      %v1168 = vrot.slane %v1167, 4
      %v1170 = vshll.u32 %v1085, 16
      %v1172 = vrot.slane %v1170, 5
      %v1173 = vsel %vm471, %v1168, %v1172
      %v1175 = vshrl.u32 %v1086, 16
      %v1177 = vrot.slane %v1175, 4
      %v1178 = vshll.u32 %v1086, 16
      %v1180 = vrot.slane %v1178, 5
      %v1181 = vor.u32 %v1177, %v1180
      %v1182 = vrot.slane %v1181, 4
      %v1184 = vshll.u32 %v1087, 16
      %v1186 = vrot.slane %v1184, 5
      %v1187 = vsel %vm471, %v1182, %v1186
      %v1189 = vshrl.u32 %v1088, 16
      %v1191 = vrot.slane %v1189, 4
      %v1192 = vshll.u32 %v1088, 16
      %v1194 = vrot.slane %v1192, 5
      %v1195 = vor.u32 %v1191, %v1194
      %v1196 = vrot.slane %v1195, 4
      %v1198 = vshll.u32 %v1089, 16
      %v1200 = vrot.slane %v1198, 5
      %v1201 = vsel %vm471, %v1196, %v1200
      %1202 = vrot.lane.b32.xlu0 %v1103, 56
      %v1203 = vpop.permute.xlu0 %1202
      %1204 = vrot.lane.b32.xlu0 %v1117, 56
      %v1205 = vpop.permute.xlu0 %1204
      %1206 = vrot.lane.b32.xlu0 %v1131, 56
      %v1207 = vpop.permute.xlu0 %1206
      %1208 = vrot.lane.b32.xlu0 %v1145, 56
      %v1209 = vpop.permute.xlu0 %1208
      %1210 = vrot.lane.b32.xlu0 %v1159, 56
      %v1211 = vpop.permute.xlu0 %1210
      %1212 = vrot.lane.b32.xlu0 %v1173, 56
      %v1213 = vpop.permute.xlu0 %1212
      %1214 = vrot.lane.b32.xlu0 %v1187, 56
      %v1215 = vpop.permute.xlu0 %1214
      %1216 = vrot.lane.b32.xlu0 %v1201, 56
      %v1217 = vpop.permute.xlu0 %1216
      %vm1226 = vcmask 519616
      %1227 = vst.msk [vmem:[#allocation4] sm:$0xf] %vm1226, %v1203
      %1228 = vst.msk [vmem:[#allocation4 + $0x4] sm:$0xf] %vm1226, %v1205
      %1229 = vst.msk [vmem:[#allocation4 + $0x8] sm:$0xf] %vm1226, %v1207
      %1230 = vst.msk [vmem:[#allocation4 + $0xc] sm:$0xf] %vm1226, %v1209
      %1231 = vst.msk [vmem:[#allocation4 + $0x10] sm:$0xf] %vm1226, %v1211
      %1232 = vst.msk [vmem:[#allocation4 + $0x14] sm:$0xf] %vm1226, %v1213
      %1233 = vst.msk [vmem:[#allocation4 + $0x18] sm:$0xf] %vm1226, %v1215
      %1234 = vst.msk [vmem:[#allocation4 + $0x1c] sm:$0xf] %vm1226, %v1217
      %v1235 = vld [vmem:[%s1024] sm:$0xe]
      %v1236 = vld [vmem:[%s1024 + $0x4] sm:$0x1]
      %v1237 = vld [vmem:[%s1024 + $0x8] sm:$0xe]
      %v1238 = vld [vmem:[%s1024 + $0xc] sm:$0x1]
      %v1239 = vld [vmem:[%s1024 + $0x10] sm:$0xe]
      %v1240 = vld [vmem:[%s1024 + $0x14] sm:$0x1]
      %v1241 = vld [vmem:[%s1024 + $0x18] sm:$0xe]
      %v1242 = vld [vmem:[%s1024 + $0x1c] sm:$0x1]
      %v1243 = vld [vmem:[%s1024 + $0x20] sm:$0xe]
      %v1244 = vld [vmem:[%s1024 + $0x24] sm:$0x1]
      %v1245 = vld [vmem:[%s1024 + $0x28] sm:$0xe]
      %v1246 = vld [vmem:[%s1024 + $0x2c] sm:$0x1]
      %v1247 = vld [vmem:[%s1024 + $0x30] sm:$0xe]
      %v1248 = vld [vmem:[%s1024 + $0x34] sm:$0x1]
      %v1249 = vld [vmem:[%s1024 + $0x38] sm:$0xe]
      %v1250 = vld [vmem:[%s1024 + $0x3c] sm:$0x1]
      %v1267 = vrot.slane %v1235, 5
      %v1268 = vrot.slane %v1267, 4
      %v1269 = vrot.slane %v1236, 5
      %v1270 = vsel %vm651, %v1268, %v1269
      %v1271 = vrot.slane %v1237, 5
      %v1272 = vrot.slane %v1271, 4
      %v1273 = vrot.slane %v1238, 5
      %v1274 = vsel %vm651, %v1272, %v1273
      %v1275 = vrot.slane %v1239, 5
      %v1276 = vrot.slane %v1275, 4
      %v1277 = vrot.slane %v1240, 5
      %v1278 = vsel %vm651, %v1276, %v1277
      %v1279 = vrot.slane %v1241, 5
      %v1280 = vrot.slane %v1279, 4
      %v1281 = vrot.slane %v1242, 5
      %v1282 = vsel %vm651, %v1280, %v1281
      %v1283 = vrot.slane %v1243, 5
      %v1284 = vrot.slane %v1283, 4
      %v1285 = vrot.slane %v1244, 5
      %v1286 = vsel %vm651, %v1284, %v1285
      %v1287 = vrot.slane %v1245, 5
      %v1288 = vrot.slane %v1287, 4
      %v1289 = vrot.slane %v1246, 5
      %v1290 = vsel %vm651, %v1288, %v1289
      %v1291 = vrot.slane %v1247, 5
      %v1292 = vrot.slane %v1291, 4
      %v1293 = vrot.slane %v1248, 5
      %v1294 = vsel %vm651, %v1292, %v1293
      %v1295 = vrot.slane %v1249, 5
      %v1296 = vrot.slane %v1295, 4
      %v1297 = vrot.slane %v1250, 5
      %v1298 = vsel %vm651, %v1296, %v1297
      %1299 = vrot.lane.b32.xlu0 %v1270, 64
      %v1300 = vpop.permute.xlu0 %1299
      %1301 = vrot.lane.b32.xlu0 %v1274, 64
      %v1302 = vpop.permute.xlu0 %1301
      %1303 = vrot.lane.b32.xlu0 %v1278, 64
      %v1304 = vpop.permute.xlu0 %1303
      %1305 = vrot.lane.b32.xlu0 %v1282, 64
      %v1306 = vpop.permute.xlu0 %1305
      %1307 = vrot.lane.b32.xlu0 %v1286, 64
      %v1308 = vpop.permute.xlu0 %1307
      %1309 = vrot.lane.b32.xlu0 %v1290, 64
      %v1310 = vpop.permute.xlu0 %1309
      %1311 = vrot.lane.b32.xlu0 %v1294, 64
      %v1312 = vpop.permute.xlu0 %1311
      %1313 = vrot.lane.b32.xlu0 %v1298, 64
      %v1314 = vpop.permute.xlu0 %1313
      %vm1323 = vcmask 585216
      %1324 = vst.msk [vmem:[#allocation4] sm:$0xf] %vm1323, %v1300
      %1325 = vst.msk [vmem:[#allocation4 + $0x4] sm:$0xf] %vm1323, %v1302
      %1326 = vst.msk [vmem:[#allocation4 + $0x8] sm:$0xf] %vm1323, %v1304
      %1327 = vst.msk [vmem:[#allocation4 + $0xc] sm:$0xf] %vm1323, %v1306
      %1328 = vst.msk [vmem:[#allocation4 + $0x10] sm:$0xf] %vm1323, %v1308
      %1329 = vst.msk [vmem:[#allocation4 + $0x14] sm:$0xf] %vm1323, %v1310
      %1330 = vst.msk [vmem:[#allocation4 + $0x18] sm:$0xf] %vm1323, %v1312
      %1331 = vst.msk [vmem:[#allocation4 + $0x1c] sm:$0xf] %vm1323, %v1314
      %v1332 = vld [vmem:[#allocation4] sm:$0xf]
      %v1333 = vld [vmem:[#allocation4 + $0x4] sm:$0xf]
      %v1334 = vld [vmem:[#allocation4 + $0x8] sm:$0xf]
      %v1335 = vld [vmem:[#allocation4 + $0xc] sm:$0xf]
      %v1336 = vld [vmem:[#allocation4 + $0x10] sm:$0xf]
      %v1337 = vld [vmem:[#allocation4 + $0x14] sm:$0xf]
      %v1338 = vld [vmem:[#allocation4 + $0x18] sm:$0xf]
      %v1339 = vld [vmem:[#allocation4 + $0x1c] sm:$0xf]
      %v1340 = vld [vmem:[%s1] sm:$0xf]
      %v1341 = vld [vmem:[%s1 + $0x4] sm:$0xf]
      %v1342 = vld [vmem:[%s1 + $0x8] sm:$0xf]
      %v1343 = vld [vmem:[%s1 + $0xc] sm:$0xf]
      %v1344 = vld [vmem:[%s1 + $0x10] sm:$0xf]
      %v1345 = vld [vmem:[%s1 + $0x14] sm:$0xf]
      %v1346 = vld [vmem:[%s1 + $0x18] sm:$0xf]
      %v1347 = vld [vmem:[%s1 + $0x1c] sm:$0xf]
      %v1348 = vld [vmem:[%s1 + $0x20] sm:$0xf]
      %v1349 = vld [vmem:[%s2] sm:$0x1]
      %v1351 = vlaneseq
      %v1352 = vshrl.u32 %v1351, 7
      %v1353 = vsub.s32 0, %v1352
      %v1354 = vrot.slane %v1349, %v1353
      %v1364 = vunpack.c.l.b16 %v1332
      %v1365 = vunpack.c.l.b16 %v1333
      %v1366 = vunpack.c.l.b16 %v1334
      %v1367 = vunpack.c.l.b16 %v1335
      %v1368 = vunpack.c.l.b16 %v1336
      %v1369 = vunpack.c.l.b16 %v1337
      %v1370 = vunpack.c.l.b16 %v1338
      %v1371 = vunpack.c.l.b16 %v1339
      %v1372 = vpack.c.b16 %v1365, %v1364
      %v1373 = vpack.c.b16 %v1367, %v1366
      %v1374 = vpack.c.b16 %v1369, %v1368
      %v1375 = vpack.c.b16 %v1371, %v1370
      %v1385 = vunpack.c.l.b16 %v1340
      %v1386 = vunpack.c.l.b16 %v1341
      %v1387 = vunpack.c.l.b16 %v1342
      %v1388 = vunpack.c.l.b16 %v1343
      %v1389 = vunpack.c.l.b16 %v1344
      %v1390 = vunpack.c.l.b16 %v1345
      %v1391 = vunpack.c.l.b16 %v1346
      %v1392 = vunpack.c.l.b16 %v1347
      %v1393 = vunpack.c.l.b16 %v1348
      %v1394 = vpack.c.b16 %v1386, %v1385
      %v1395 = vpack.c.b16 %v1388, %v1387
      %v1396 = vpack.c.b16 %v1390, %v1389
      %v1397 = vpack.c.b16 %v1392, %v1391
      %v1398 = vpack.c.b16 %v1393, %v1393
      %vm1403 = vcmask 588800
      %v1405 = vsel %vm1403, %v1372, 0
      %v1408 = vsel %vm1403, %v1373, 0
      %v1411 = vsel %vm1403, %v1374, 0
      %v1414 = vsel %vm1403, %v1375, 0
      %vm1416 = vcmask 1043456
      %v1418 = vsel %vm1416, %v1398, 0
      %1420 = vmatprep.subr.bf16.mxu0 0
      %1421 = vmatpush1.bf16.msra.mxu0 %v1394
      %1422 = vmatprep.subr.bf16.mxu0 0
      %1423 = vmatpush1.bf16.msra.mxu0 %v1395
      %1424 = vmatprep.subr.bf16.mxu0 0
      %1425 = vmatpush1.bf16.msra.mxu0 %v1396
      %1426 = vmatprep.subr.bf16.mxu0 0
      %1427 = vmatpush1.bf16.msra.mxu0 %v1397
      %1428 = vmatprep.subr.bf16.mxu0 0
      %1429 = vmatpush1.bf16.msra.mxu0 %v1418
      %1430 = vmatprep.subr.bf16.mxu0 0
      %1431 = vmatpush1.bf16.msra.mxu0 0
      %1432 = vmatprep.subr.bf16.mxu0 0
      %1433 = vmatpush1.bf16.msra.mxu0 0
      %1434 = vmatprep.subr.bf16.mxu0 0
      %1435 = vmatpush1.bf16.msra.mxu0 0
      %1436 = vmatprep.subr.bf16.mxu0 0
      %1437 = vmatpush1.bf16.msra.mxu0 0
      %1438 = vmatprep.subr.bf16.mxu0 0
      %1439 = vmatpush1.bf16.msra.mxu0 0
      %1440 = vmatprep.subr.bf16.mxu0 0
      %1441 = vmatpush1.bf16.msra.mxu0 0
      %1442 = vmatprep.subr.bf16.mxu0 0
      %1443 = vmatpush1.bf16.msra.mxu0 0
      %1444 = vmatprep.subr.bf16.mxu0 0
      %1445 = vmatpush1.bf16.msra.mxu0 0
      %1446 = vmatprep.subr.bf16.mxu0 0
      %1447 = vmatpush1.bf16.msra.mxu0 0
      %1448 = vmatprep.subr.bf16.mxu0 0
      %1449 = vmatpush1.bf16.msra.mxu0 0
      %1450 = vmatprep.subr.bf16.mxu0 0
      %1451 = vmatpush1.bf16.msra.mxu0 0
      %1452 = vmatprep.mubr.bf16.mxu0 0
      %1453 = vmatmul.mubr.bf16.gmra.mrb[0].mxu0 %v1405
      %v1454 = vpop.f32.mrb[0].mxu0
      %v1455 = vadd.f32 %v1354, %v1454
      %v1456 = vpop.f32.mrb[0].mxu0
      %v1457 = vpop.f32.mrb[0].mxu0
      %v1458 = vadd.f32 %v1354, %v1457
      %v1459 = vpop.f32.mrb[0].mxu0
      %1460 = vmatprep.mubr.bf16.mxu0 0
      %1461 = vmatmul.mubr.bf16.gmra.mrb[0].mxu0 %v1408
      %v1462 = vpop.f32.mrb[0].mxu0
      %v1463 = vadd.f32 %v1354, %v1462
      %v1464 = vpop.f32.mrb[0].mxu0
      %v1465 = vpop.f32.mrb[0].mxu0
      %v1466 = vadd.f32 %v1354, %v1465
      %v1467 = vpop.f32.mrb[0].mxu0
      %1468 = vmatprep.mubr.bf16.mxu0 0
      %1469 = vmatmul.mubr.bf16.gmra.mrb[0].mxu0 %v1411
      %v1470 = vpop.f32.mrb[0].mxu0
      %v1471 = vadd.f32 %v1354, %v1470
      %v1472 = vpop.f32.mrb[0].mxu0
      %v1473 = vpop.f32.mrb[0].mxu0
      %v1474 = vadd.f32 %v1354, %v1473
      %v1475 = vpop.f32.mrb[0].mxu0
      %1476 = vmatprep.mubr.bf16.mxu0 0
      %1477 = vmatmul.mubr.bf16.gmra.mrb[0].mxu0 %v1414
      %v1478 = vpop.f32.mrb[0].mxu0
      %v1479 = vadd.f32 %v1354, %v1478
      %v1480 = vpop.f32.mrb[0].mxu0
      %v1481 = vpop.f32.mrb[0].mxu0
      %v1482 = vadd.f32 %v1354, %v1481
      %v1483 = vpop.f32.mrb[0].mxu0
      %1484 = vdwg.mxu0
      %v1485 = vmax.f32 %v1455, 0.0
      %v1486 = vmax.f32 %v1458, 0.0
      %v1487 = vmax.f32 %v1463, 0.0
      %v1488 = vmax.f32 %v1466, 0.0
      %v1489 = vmax.f32 %v1471, 0.0
      %v1490 = vmax.f32 %v1474, 0.0
      %v1491 = vmax.f32 %v1479, 0.0
      %v1492 = vmax.f32 %v1482, 0.0
      %v1493 = vpack.c.bf16 %v1486, %v1485
      %v1494 = vpack.c.bf16 %v1488, %v1487
      %v1495 = vpack.c.bf16 %v1490, %v1489
      %v1496 = vpack.c.bf16 %v1492, %v1491
      %1497 = vst.msk [vmem:[#allocation3] sm:$0xf] %vm226, 0
      %1498 = vst.msk [vmem:[#allocation3 + $0x4] sm:$0x1] %vm228, 0
      %s1499 = scalar_lea.vmem [#allocation3], 72
      %1500 = vst.msk [vmem:[%s1499] sm:$0xf] %vm226, 0
      %1501 = vst.msk [vmem:[%s1499 + $0x4] sm:$0x1] %vm228, 0
      %v1502 = vld [vmem:[#allocation3] sm:$0x1]
      %v1503 = vsel %vm235, 0, %v1502
      %1504 = vst [vmem:[#allocation3] sm:$0x1] %v1503
      %v1505 = vld [vmem:[#allocation3 + $0x8] sm:$0x1]
      %v1506 = vsel %vm235, 0, %v1505
      %1507 = vst [vmem:[#allocation3 + $0x8] sm:$0x1] %v1506
      %v1508 = vld [vmem:[#allocation3 + $0x10] sm:$0x1]
      %v1509 = vsel %vm235, 0, %v1508
      %1510 = vst [vmem:[#allocation3 + $0x10] sm:$0x1] %v1509
      %v1511 = vld [vmem:[#allocation3 + $0x18] sm:$0x1]
      %v1512 = vsel %vm235, 0, %v1511
      %1513 = vst [vmem:[#allocation3 + $0x18] sm:$0x1] %v1512
      %v1514 = vld [vmem:[#allocation3 + $0x20] sm:$0x1]
      %v1515 = vsel %vm235, 0, %v1514
      %1516 = vst [vmem:[#allocation3 + $0x20] sm:$0x1] %v1515
      %v1517 = vld [vmem:[#allocation3 + $0x28] sm:$0x1]
      %v1518 = vsel %vm235, 0, %v1517
      %1519 = vst [vmem:[#allocation3 + $0x28] sm:$0x1] %v1518
      %v1520 = vld [vmem:[#allocation3 + $0x30] sm:$0x1]
      %v1521 = vsel %vm235, 0, %v1520
      %1522 = vst [vmem:[#allocation3 + $0x30] sm:$0x1] %v1521
      %v1523 = vld [vmem:[#allocation3 + $0x38] sm:$0x1]
      %v1524 = vsel %vm235, 0, %v1523
      %1525 = vst [vmem:[#allocation3 + $0x38] sm:$0x1] %v1524
      %v1526 = vld [vmem:[#allocation3 + $0x40] sm:$0x1]
      %v1527 = vsel %vm235, 0, %v1526
      %1528 = vst [vmem:[#allocation3 + $0x40] sm:$0x1] %v1527
      %v1529 = vld [vmem:[#allocation3 + $0x48] sm:$0x1]
      %v1530 = vsel %vm235, 0, %v1529
      %1531 = vst [vmem:[#allocation3 + $0x48] sm:$0x1] %v1530
      %v1532 = vld [vmem:[#allocation3 + $0x4] sm:$0x1]
      %v1533 = vsel %vm267, 0, %v1532
      %1534 = vst [vmem:[#allocation3 + $0x4] sm:$0x1] %v1533
      %v1535 = vld [vmem:[#allocation3 + $0xc] sm:$0x1]
      %v1536 = vsel %vm267, 0, %v1535
      %1537 = vst [vmem:[#allocation3 + $0xc] sm:$0x1] %v1536
      %v1538 = vld [vmem:[#allocation3 + $0x14] sm:$0x1]
      %v1539 = vsel %vm267, 0, %v1538
      %1540 = vst [vmem:[#allocation3 + $0x14] sm:$0x1] %v1539
      %v1541 = vld [vmem:[#allocation3 + $0x1c] sm:$0x1]
      %v1542 = vsel %vm267, 0, %v1541
      %1543 = vst [vmem:[#allocation3 + $0x1c] sm:$0x1] %v1542
      %v1544 = vld [vmem:[#allocation3 + $0x24] sm:$0x1]
      %v1545 = vsel %vm267, 0, %v1544
      %1546 = vst [vmem:[#allocation3 + $0x24] sm:$0x1] %v1545
      %v1547 = vld [vmem:[#allocation3 + $0x2c] sm:$0x1]
      %v1548 = vsel %vm267, 0, %v1547
      %1549 = vst [vmem:[#allocation3 + $0x2c] sm:$0x1] %v1548
      %v1550 = vld [vmem:[#allocation3 + $0x34] sm:$0x1]
      %v1551 = vsel %vm267, 0, %v1550
      %1552 = vst [vmem:[#allocation3 + $0x34] sm:$0x1] %v1551
      %v1553 = vld [vmem:[#allocation3 + $0x3c] sm:$0x1]
      %v1554 = vsel %vm267, 0, %v1553
      %1555 = vst [vmem:[#allocation3 + $0x3c] sm:$0x1] %v1554
      %v1556 = vld [vmem:[#allocation3 + $0x44] sm:$0x1]
      %v1557 = vsel %vm267, 0, %v1556
      %1558 = vst [vmem:[#allocation3 + $0x44] sm:$0x1] %v1557
      %v1559 = vld [vmem:[#allocation3 + $0x4c] sm:$0x1]
      %v1560 = vsel %vm267, 0, %v1559
      %1561 = vst [vmem:[#allocation3 + $0x4c] sm:$0x1] %v1560
      %v1566 = vunpack.c.l.b16 %v1493
      %v1567 = vunpack.c.h.b16 %v1493
      %v1568 = vunpack.c.l.b16 %v1494
      %v1569 = vunpack.c.h.b16 %v1494
      %v1570 = vunpack.c.l.b16 %v1495
      %v1571 = vunpack.c.h.b16 %v1495
      %v1572 = vunpack.c.l.b16 %v1496
      %v1573 = vunpack.c.h.b16 %v1496
      %v1574 = vpack.c.b16 %v1566, %v1566
      %v1575 = vpack.c.b16 %v1567, %v1567
      %v1576 = vpack.c.b16 %v1568, %v1568
      %v1577 = vpack.c.b16 %v1569, %v1569
      %v1578 = vpack.c.b16 %v1570, %v1570
      %v1579 = vpack.c.b16 %v1571, %v1571
      %v1580 = vpack.c.b16 %v1572, %v1572
      %v1581 = vpack.c.b16 %v1573, %v1573
      %v1583 = vshrl.u32 %v1574, 16
      %v1585 = vrot.slane %v1583, 7
      %v1586 = vshll.u32 %v1574, 16
      %v1588 = vor.u32 %v1585, %v1586
      %v1589 = vrot.slane %v1585, 4
      %v1591 = vshrl.u32 %v1575, 16
      %v1593 = vrot.slane %v1591, 7
      %v1594 = vshll.u32 %v1575, 16
      %v1596 = vor.u32 %v1593, %v1594
      %v1597 = vrot.slane %v1593, 4
      %v1599 = vshrl.u32 %v1576, 16
      %v1601 = vrot.slane %v1599, 7
      %v1602 = vshll.u32 %v1576, 16
      %v1604 = vor.u32 %v1601, %v1602
      %v1605 = vrot.slane %v1601, 4
      %v1607 = vshrl.u32 %v1577, 16
      %v1609 = vrot.slane %v1607, 7
      %v1610 = vshll.u32 %v1577, 16
      %v1612 = vor.u32 %v1609, %v1610
      %v1613 = vrot.slane %v1609, 4
      %v1615 = vshrl.u32 %v1578, 16
      %v1617 = vrot.slane %v1615, 7
      %v1618 = vshll.u32 %v1578, 16
      %v1620 = vor.u32 %v1617, %v1618
      %v1621 = vrot.slane %v1617, 4
      %v1623 = vshrl.u32 %v1579, 16
      %v1625 = vrot.slane %v1623, 7
      %v1626 = vshll.u32 %v1579, 16
      %v1628 = vor.u32 %v1625, %v1626
      %v1629 = vrot.slane %v1625, 4
      %v1631 = vshrl.u32 %v1580, 16
      %v1633 = vrot.slane %v1631, 7
      %v1634 = vshll.u32 %v1580, 16
      %v1636 = vor.u32 %v1633, %v1634
      %v1637 = vrot.slane %v1633, 4
      %v1639 = vshrl.u32 %v1581, 16
      %v1641 = vrot.slane %v1639, 7
      %v1642 = vshll.u32 %v1581, 16
      %v1644 = vor.u32 %v1641, %v1642
      %v1645 = vrot.slane %v1641, 4
      %s1662 = scalar_lea.vmem [#allocation3], 8
      %v1663 = vld [vmem:[%s1662] sm:$0xf]
      %v1664 = vsel %vm388, %v1588, %v1663
      %1665 = vst [vmem:[%s1662] sm:$0xf] %v1664
      %v1666 = vld [vmem:[%s1662 + $0x4] sm:$0x1]
      %v1667 = vsel %vm235, %v1589, %v1666
      %1668 = vst [vmem:[%s1662 + $0x4] sm:$0x1] %v1667
      %v1669 = vld [vmem:[%s1662 + $0x8] sm:$0xf]
      %v1670 = vsel %vm388, %v1596, %v1669
      %1671 = vst [vmem:[%s1662 + $0x8] sm:$0xf] %v1670
      %v1672 = vld [vmem:[%s1662 + $0xc] sm:$0x1]
      %v1673 = vsel %vm235, %v1597, %v1672
      %1674 = vst [vmem:[%s1662 + $0xc] sm:$0x1] %v1673
      %v1675 = vld [vmem:[%s1662 + $0x10] sm:$0xf]
      %v1676 = vsel %vm388, %v1604, %v1675
      %1677 = vst [vmem:[%s1662 + $0x10] sm:$0xf] %v1676
      %v1678 = vld [vmem:[%s1662 + $0x14] sm:$0x1]
      %v1679 = vsel %vm235, %v1605, %v1678
      %1680 = vst [vmem:[%s1662 + $0x14] sm:$0x1] %v1679
      %v1681 = vld [vmem:[%s1662 + $0x18] sm:$0xf]
      %v1682 = vsel %vm388, %v1612, %v1681
      %1683 = vst [vmem:[%s1662 + $0x18] sm:$0xf] %v1682
      %v1684 = vld [vmem:[%s1662 + $0x1c] sm:$0x1]
      %v1685 = vsel %vm235, %v1613, %v1684
      %1686 = vst [vmem:[%s1662 + $0x1c] sm:$0x1] %v1685
      %v1687 = vld [vmem:[%s1662 + $0x20] sm:$0xf]
      %v1688 = vsel %vm388, %v1620, %v1687
      %1689 = vst [vmem:[%s1662 + $0x20] sm:$0xf] %v1688
      %v1690 = vld [vmem:[%s1662 + $0x24] sm:$0x1]
      %v1691 = vsel %vm235, %v1621, %v1690
      %1692 = vst [vmem:[%s1662 + $0x24] sm:$0x1] %v1691
      %v1693 = vld [vmem:[%s1662 + $0x28] sm:$0xf]
      %v1694 = vsel %vm388, %v1628, %v1693
      %1695 = vst [vmem:[%s1662 + $0x28] sm:$0xf] %v1694
      %v1696 = vld [vmem:[%s1662 + $0x2c] sm:$0x1]
      %v1697 = vsel %vm235, %v1629, %v1696
      %1698 = vst [vmem:[%s1662 + $0x2c] sm:$0x1] %v1697
      %v1699 = vld [vmem:[%s1662 + $0x30] sm:$0xf]
      %v1700 = vsel %vm388, %v1636, %v1699
      %1701 = vst [vmem:[%s1662 + $0x30] sm:$0xf] %v1700
      %v1702 = vld [vmem:[%s1662 + $0x34] sm:$0x1]
      %v1703 = vsel %vm235, %v1637, %v1702
      %1704 = vst [vmem:[%s1662 + $0x34] sm:$0x1] %v1703
      %v1705 = vld [vmem:[%s1662 + $0x38] sm:$0xf]
      %v1706 = vsel %vm388, %v1644, %v1705
      %1707 = vst [vmem:[%s1662 + $0x38] sm:$0xf] %v1706
      %v1708 = vld [vmem:[%s1662 + $0x3c] sm:$0x1]
      %v1709 = vsel %vm235, %v1645, %v1708
      %1710 = vst [vmem:[%s1662 + $0x3c] sm:$0x1] %v1709
      %v1711 = vld [vmem:[#allocation3] sm:$0xf]
      %v1712 = vld [vmem:[#allocation3 + $0x8] sm:$0xf]
      %v1713 = vld [vmem:[#allocation3 + $0x10] sm:$0xf]
      %v1714 = vld [vmem:[#allocation3 + $0x18] sm:$0xf]
      %v1715 = vld [vmem:[#allocation3 + $0x20] sm:$0xf]
      %v1716 = vld [vmem:[#allocation3 + $0x28] sm:$0xf]
      %v1717 = vld [vmem:[#allocation3 + $0x30] sm:$0xf]
      %v1718 = vld [vmem:[#allocation3 + $0x38] sm:$0xf]
      %1719 = vst.msk [vmem:[#allocation5] sm:$0xf] %vm226, %v1711
      %1720 = vst.msk [vmem:[#allocation5 + $0x4] sm:$0xf] %vm226, %v1712
      %1721 = vst.msk [vmem:[#allocation5 + $0x8] sm:$0xf] %vm226, %v1713
      %1722 = vst.msk [vmem:[#allocation5 + $0xc] sm:$0xf] %vm226, %v1714
      %1723 = vst.msk [vmem:[#allocation5 + $0x10] sm:$0xf] %vm226, %v1715
      %1724 = vst.msk [vmem:[#allocation5 + $0x14] sm:$0xf] %vm226, %v1716
      %1725 = vst.msk [vmem:[#allocation5 + $0x18] sm:$0xf] %vm226, %v1717
      %1726 = vst.msk [vmem:[#allocation5 + $0x1c] sm:$0xf] %vm226, %v1718
      %v1727 = vld [vmem:[#allocation3] sm:$0xf]
      %v1728 = vld [vmem:[#allocation3 + $0x4] sm:$0x1]
      %v1729 = vld [vmem:[#allocation3 + $0x8] sm:$0xf]
      %v1730 = vld [vmem:[#allocation3 + $0xc] sm:$0x1]
      %v1731 = vld [vmem:[#allocation3 + $0x10] sm:$0xf]
      %v1732 = vld [vmem:[#allocation3 + $0x14] sm:$0x1]
      %v1733 = vld [vmem:[#allocation3 + $0x18] sm:$0xf]
      %v1734 = vld [vmem:[#allocation3 + $0x1c] sm:$0x1]
      %v1735 = vld [vmem:[#allocation3 + $0x20] sm:$0xf]
      %v1736 = vld [vmem:[#allocation3 + $0x24] sm:$0x1]
      %v1737 = vld [vmem:[#allocation3 + $0x28] sm:$0xf]
      %v1738 = vld [vmem:[#allocation3 + $0x2c] sm:$0x1]
      %v1739 = vld [vmem:[#allocation3 + $0x30] sm:$0xf]
      %v1740 = vld [vmem:[#allocation3 + $0x34] sm:$0x1]
      %v1741 = vld [vmem:[#allocation3 + $0x38] sm:$0xf]
      %v1742 = vld [vmem:[#allocation3 + $0x3c] sm:$0x1]
      %v1744 = vshrl.u32 %v1727, 16
      %v1746 = vrot.slane %v1744, 4
      %v1747 = vshll.u32 %v1727, 16
      %v1749 = vrot.slane %v1747, 5
      %v1750 = vor.u32 %v1746, %v1749
      %v1751 = vrot.slane %v1750, 4
      %v1753 = vshll.u32 %v1728, 16
      %v1755 = vrot.slane %v1753, 5
      %v1756 = vsel %vm471, %v1751, %v1755
      %v1758 = vshrl.u32 %v1729, 16
      %v1760 = vrot.slane %v1758, 4
      %v1761 = vshll.u32 %v1729, 16
      %v1763 = vrot.slane %v1761, 5
      %v1764 = vor.u32 %v1760, %v1763
      %v1765 = vrot.slane %v1764, 4
      %v1767 = vshll.u32 %v1730, 16
      %v1769 = vrot.slane %v1767, 5
      %v1770 = vsel %vm471, %v1765, %v1769
      %v1772 = vshrl.u32 %v1731, 16
      %v1774 = vrot.slane %v1772, 4
      %v1775 = vshll.u32 %v1731, 16
      %v1777 = vrot.slane %v1775, 5
      %v1778 = vor.u32 %v1774, %v1777
      %v1779 = vrot.slane %v1778, 4
      %v1781 = vshll.u32 %v1732, 16
      %v1783 = vrot.slane %v1781, 5
      %v1784 = vsel %vm471, %v1779, %v1783
      %v1786 = vshrl.u32 %v1733, 16
      %v1788 = vrot.slane %v1786, 4
      %v1789 = vshll.u32 %v1733, 16
      %v1791 = vrot.slane %v1789, 5
      %v1792 = vor.u32 %v1788, %v1791
      %v1793 = vrot.slane %v1792, 4
      %v1795 = vshll.u32 %v1734, 16
      %v1797 = vrot.slane %v1795, 5
      %v1798 = vsel %vm471, %v1793, %v1797
      %v1800 = vshrl.u32 %v1735, 16
      %v1802 = vrot.slane %v1800, 4
      %v1803 = vshll.u32 %v1735, 16
      %v1805 = vrot.slane %v1803, 5
      %v1806 = vor.u32 %v1802, %v1805
      %v1807 = vrot.slane %v1806, 4
      %v1809 = vshll.u32 %v1736, 16
      %v1811 = vrot.slane %v1809, 5
      %v1812 = vsel %vm471, %v1807, %v1811
      %v1814 = vshrl.u32 %v1737, 16
      %v1816 = vrot.slane %v1814, 4
      %v1817 = vshll.u32 %v1737, 16
      %v1819 = vrot.slane %v1817, 5
      %v1820 = vor.u32 %v1816, %v1819
      %v1821 = vrot.slane %v1820, 4
      %v1823 = vshll.u32 %v1738, 16
      %v1825 = vrot.slane %v1823, 5
      %v1826 = vsel %vm471, %v1821, %v1825
      %v1828 = vshrl.u32 %v1739, 16
      %v1830 = vrot.slane %v1828, 4
      %v1831 = vshll.u32 %v1739, 16
      %v1833 = vrot.slane %v1831, 5
      %v1834 = vor.u32 %v1830, %v1833
      %v1835 = vrot.slane %v1834, 4
      %v1837 = vshll.u32 %v1740, 16
      %v1839 = vrot.slane %v1837, 5
      %v1840 = vsel %vm471, %v1835, %v1839
      %v1842 = vshrl.u32 %v1741, 16
      %v1844 = vrot.slane %v1842, 4
      %v1845 = vshll.u32 %v1741, 16
      %v1847 = vrot.slane %v1845, 5
      %v1848 = vor.u32 %v1844, %v1847
      %v1849 = vrot.slane %v1848, 4
      %v1851 = vshll.u32 %v1742, 16
      %v1853 = vrot.slane %v1851, 5
      %v1854 = vsel %vm471, %v1849, %v1853
      %1855 = vrot.lane.b32.xlu0 %v1756, 8
      %v1856 = vpop.permute.xlu0 %1855
      %1857 = vrot.lane.b32.xlu0 %v1770, 8
      %v1858 = vpop.permute.xlu0 %1857
      %1859 = vrot.lane.b32.xlu0 %v1784, 8
      %v1860 = vpop.permute.xlu0 %1859
      %1861 = vrot.lane.b32.xlu0 %v1798, 8
      %v1862 = vpop.permute.xlu0 %1861
      %1863 = vrot.lane.b32.xlu0 %v1812, 8
      %v1864 = vpop.permute.xlu0 %1863
      %1865 = vrot.lane.b32.xlu0 %v1826, 8
      %v1866 = vpop.permute.xlu0 %1865
      %1867 = vrot.lane.b32.xlu0 %v1840, 8
      %v1868 = vpop.permute.xlu0 %1867
      %1869 = vrot.lane.b32.xlu0 %v1854, 8
      %v1870 = vpop.permute.xlu0 %1869
      %1879 = vst.msk [vmem:[#allocation5] sm:$0xf] %vm608, %v1856
      %1880 = vst.msk [vmem:[#allocation5 + $0x4] sm:$0xf] %vm608, %v1858
      %1881 = vst.msk [vmem:[#allocation5 + $0x8] sm:$0xf] %vm608, %v1860
      %1882 = vst.msk [vmem:[#allocation5 + $0xc] sm:$0xf] %vm608, %v1862
      %1883 = vst.msk [vmem:[#allocation5 + $0x10] sm:$0xf] %vm608, %v1864
      %1884 = vst.msk [vmem:[#allocation5 + $0x14] sm:$0xf] %vm608, %v1866
      %1885 = vst.msk [vmem:[#allocation5 + $0x18] sm:$0xf] %vm608, %v1868
      %1886 = vst.msk [vmem:[#allocation5 + $0x1c] sm:$0xf] %vm608, %v1870
      %v1887 = vld [vmem:[#allocation3] sm:$0xe]
      %v1888 = vld [vmem:[#allocation3 + $0x4] sm:$0x1]
      %v1889 = vld [vmem:[#allocation3 + $0x8] sm:$0xe]
      %v1890 = vld [vmem:[#allocation3 + $0xc] sm:$0x1]
      %v1891 = vld [vmem:[#allocation3 + $0x10] sm:$0xe]
      %v1892 = vld [vmem:[#allocation3 + $0x14] sm:$0x1]
      %v1893 = vld [vmem:[#allocation3 + $0x18] sm:$0xe]
      %v1894 = vld [vmem:[#allocation3 + $0x1c] sm:$0x1]
      %v1895 = vld [vmem:[#allocation3 + $0x20] sm:$0xe]
      %v1896 = vld [vmem:[#allocation3 + $0x24] sm:$0x1]
      %v1897 = vld [vmem:[#allocation3 + $0x28] sm:$0xe]
      %v1898 = vld [vmem:[#allocation3 + $0x2c] sm:$0x1]
      %v1899 = vld [vmem:[#allocation3 + $0x30] sm:$0xe]
      %v1900 = vld [vmem:[#allocation3 + $0x34] sm:$0x1]
      %v1901 = vld [vmem:[#allocation3 + $0x38] sm:$0xe]
      %v1902 = vld [vmem:[#allocation3 + $0x3c] sm:$0x1]
      %v1919 = vrot.slane %v1887, 5
      %v1920 = vrot.slane %v1919, 4
      %v1921 = vrot.slane %v1888, 5
      %v1922 = vsel %vm651, %v1920, %v1921
      %v1923 = vrot.slane %v1889, 5
      %v1924 = vrot.slane %v1923, 4
      %v1925 = vrot.slane %v1890, 5
      %v1926 = vsel %vm651, %v1924, %v1925
      %v1927 = vrot.slane %v1891, 5
      %v1928 = vrot.slane %v1927, 4
      %v1929 = vrot.slane %v1892, 5
      %v1930 = vsel %vm651, %v1928, %v1929
      %v1931 = vrot.slane %v1893, 5
      %v1932 = vrot.slane %v1931, 4
      %v1933 = vrot.slane %v1894, 5
      %v1934 = vsel %vm651, %v1932, %v1933
      %v1935 = vrot.slane %v1895, 5
      %v1936 = vrot.slane %v1935, 4
      %v1937 = vrot.slane %v1896, 5
      %v1938 = vsel %vm651, %v1936, %v1937
      %v1939 = vrot.slane %v1897, 5
      %v1940 = vrot.slane %v1939, 4
      %v1941 = vrot.slane %v1898, 5
      %v1942 = vsel %vm651, %v1940, %v1941
      %v1943 = vrot.slane %v1899, 5
      %v1944 = vrot.slane %v1943, 4
      %v1945 = vrot.slane %v1900, 5
      %v1946 = vsel %vm651, %v1944, %v1945
      %v1947 = vrot.slane %v1901, 5
      %v1948 = vrot.slane %v1947, 4
      %v1949 = vrot.slane %v1902, 5
      %v1950 = vsel %vm651, %v1948, %v1949
      %1951 = vrot.lane.b32.xlu0 %v1922, 16
      %v1952 = vpop.permute.xlu0 %1951
      %1953 = vrot.lane.b32.xlu0 %v1926, 16
      %v1954 = vpop.permute.xlu0 %1953
      %1955 = vrot.lane.b32.xlu0 %v1930, 16
      %v1956 = vpop.permute.xlu0 %1955
      %1957 = vrot.lane.b32.xlu0 %v1934, 16
      %v1958 = vpop.permute.xlu0 %1957
      %1959 = vrot.lane.b32.xlu0 %v1938, 16
      %v1960 = vpop.permute.xlu0 %1959
      %1961 = vrot.lane.b32.xlu0 %v1942, 16
      %v1962 = vpop.permute.xlu0 %1961
      %1963 = vrot.lane.b32.xlu0 %v1946, 16
      %v1964 = vpop.permute.xlu0 %1963
      %1965 = vrot.lane.b32.xlu0 %v1950, 16
      %v1966 = vpop.permute.xlu0 %1965
      %1975 = vst.msk [vmem:[#allocation5] sm:$0xf] %vm708, %v1952
      %1976 = vst.msk [vmem:[#allocation5 + $0x4] sm:$0xf] %vm708, %v1954
      %1977 = vst.msk [vmem:[#allocation5 + $0x8] sm:$0xf] %vm708, %v1956
      %1978 = vst.msk [vmem:[#allocation5 + $0xc] sm:$0xf] %vm708, %v1958
      %1979 = vst.msk [vmem:[#allocation5 + $0x10] sm:$0xf] %vm708, %v1960
      %1980 = vst.msk [vmem:[#allocation5 + $0x14] sm:$0xf] %vm708, %v1962
      %1981 = vst.msk [vmem:[#allocation5 + $0x18] sm:$0xf] %vm708, %v1964
      %1982 = vst.msk [vmem:[#allocation5 + $0x1c] sm:$0xf] %vm708, %v1966
      %v1983 = vld [vmem:[%s1662] sm:$0xf]
      %v1984 = vld [vmem:[%s1662 + $0x8] sm:$0xf]
      %v1985 = vld [vmem:[%s1662 + $0x10] sm:$0xf]
      %v1986 = vld [vmem:[%s1662 + $0x18] sm:$0xf]
      %v1987 = vld [vmem:[%s1662 + $0x20] sm:$0xf]
      %v1988 = vld [vmem:[%s1662 + $0x28] sm:$0xf]
      %v1989 = vld [vmem:[%s1662 + $0x30] sm:$0xf]
      %v1990 = vld [vmem:[%s1662 + $0x38] sm:$0xf]
      %1999 = vrot.lane.b32.xlu0 %v1983, 24
      %v2000 = vpop.permute.xlu0 %1999
      %2001 = vrot.lane.b32.xlu0 %v1984, 24
      %v2002 = vpop.permute.xlu0 %2001
      %2003 = vrot.lane.b32.xlu0 %v1985, 24
      %v2004 = vpop.permute.xlu0 %2003
      %2005 = vrot.lane.b32.xlu0 %v1986, 24
      %v2006 = vpop.permute.xlu0 %2005
      %2007 = vrot.lane.b32.xlu0 %v1987, 24
      %v2008 = vpop.permute.xlu0 %2007
      %2009 = vrot.lane.b32.xlu0 %v1988, 24
      %v2010 = vpop.permute.xlu0 %2009
      %2011 = vrot.lane.b32.xlu0 %v1989, 24
      %v2012 = vpop.permute.xlu0 %2011
      %2013 = vrot.lane.b32.xlu0 %v1990, 24
      %v2014 = vpop.permute.xlu0 %2013
      %2023 = vst.msk [vmem:[#allocation5] sm:$0xf] %vm757, %v2000
      %2024 = vst.msk [vmem:[#allocation5 + $0x4] sm:$0xf] %vm757, %v2002
      %2025 = vst.msk [vmem:[#allocation5 + $0x8] sm:$0xf] %vm757, %v2004
      %2026 = vst.msk [vmem:[#allocation5 + $0xc] sm:$0xf] %vm757, %v2006
      %2027 = vst.msk [vmem:[#allocation5 + $0x10] sm:$0xf] %vm757, %v2008
      %2028 = vst.msk [vmem:[#allocation5 + $0x14] sm:$0xf] %vm757, %v2010
      %2029 = vst.msk [vmem:[#allocation5 + $0x18] sm:$0xf] %vm757, %v2012
      %2030 = vst.msk [vmem:[#allocation5 + $0x1c] sm:$0xf] %vm757, %v2014
      %v2031 = vld [vmem:[%s1662] sm:$0xf]
      %v2032 = vld [vmem:[%s1662 + $0x4] sm:$0x1]
      %v2033 = vld [vmem:[%s1662 + $0x8] sm:$0xf]
      %v2034 = vld [vmem:[%s1662 + $0xc] sm:$0x1]
      %v2035 = vld [vmem:[%s1662 + $0x10] sm:$0xf]
      %v2036 = vld [vmem:[%s1662 + $0x14] sm:$0x1]
      %v2037 = vld [vmem:[%s1662 + $0x18] sm:$0xf]
      %v2038 = vld [vmem:[%s1662 + $0x1c] sm:$0x1]
      %v2039 = vld [vmem:[%s1662 + $0x20] sm:$0xf]
      %v2040 = vld [vmem:[%s1662 + $0x24] sm:$0x1]
      %v2041 = vld [vmem:[%s1662 + $0x28] sm:$0xf]
      %v2042 = vld [vmem:[%s1662 + $0x2c] sm:$0x1]
      %v2043 = vld [vmem:[%s1662 + $0x30] sm:$0xf]
      %v2044 = vld [vmem:[%s1662 + $0x34] sm:$0x1]
      %v2045 = vld [vmem:[%s1662 + $0x38] sm:$0xf]
      %v2046 = vld [vmem:[%s1662 + $0x3c] sm:$0x1]
      %v2048 = vshrl.u32 %v2031, 16
      %v2050 = vrot.slane %v2048, 4
      %v2051 = vshll.u32 %v2031, 16
      %v2053 = vrot.slane %v2051, 5
      %v2054 = vor.u32 %v2050, %v2053
      %v2055 = vrot.slane %v2054, 4
      %v2057 = vshll.u32 %v2032, 16
      %v2059 = vrot.slane %v2057, 5
      %v2060 = vsel %vm471, %v2055, %v2059
      %v2062 = vshrl.u32 %v2033, 16
      %v2064 = vrot.slane %v2062, 4
      %v2065 = vshll.u32 %v2033, 16
      %v2067 = vrot.slane %v2065, 5
      %v2068 = vor.u32 %v2064, %v2067
      %v2069 = vrot.slane %v2068, 4
      %v2071 = vshll.u32 %v2034, 16
      %v2073 = vrot.slane %v2071, 5
      %v2074 = vsel %vm471, %v2069, %v2073
      %v2076 = vshrl.u32 %v2035, 16
      %v2078 = vrot.slane %v2076, 4
      %v2079 = vshll.u32 %v2035, 16
      %v2081 = vrot.slane %v2079, 5
      %v2082 = vor.u32 %v2078, %v2081
      %v2083 = vrot.slane %v2082, 4
      %v2085 = vshll.u32 %v2036, 16
      %v2087 = vrot.slane %v2085, 5
      %v2088 = vsel %vm471, %v2083, %v2087
      %v2090 = vshrl.u32 %v2037, 16
      %v2092 = vrot.slane %v2090, 4
      %v2093 = vshll.u32 %v2037, 16
      %v2095 = vrot.slane %v2093, 5
      %v2096 = vor.u32 %v2092, %v2095
      %v2097 = vrot.slane %v2096, 4
      %v2099 = vshll.u32 %v2038, 16
      %v2101 = vrot.slane %v2099, 5
      %v2102 = vsel %vm471, %v2097, %v2101
      %v2104 = vshrl.u32 %v2039, 16
      %v2106 = vrot.slane %v2104, 4
      %v2107 = vshll.u32 %v2039, 16
      %v2109 = vrot.slane %v2107, 5
      %v2110 = vor.u32 %v2106, %v2109
      %v2111 = vrot.slane %v2110, 4
      %v2113 = vshll.u32 %v2040, 16
      %v2115 = vrot.slane %v2113, 5
      %v2116 = vsel %vm471, %v2111, %v2115
      %v2118 = vshrl.u32 %v2041, 16
      %v2120 = vrot.slane %v2118, 4
      %v2121 = vshll.u32 %v2041, 16
      %v2123 = vrot.slane %v2121, 5
      %v2124 = vor.u32 %v2120, %v2123
      %v2125 = vrot.slane %v2124, 4
      %v2127 = vshll.u32 %v2042, 16
      %v2129 = vrot.slane %v2127, 5
      %v2130 = vsel %vm471, %v2125, %v2129
      %v2132 = vshrl.u32 %v2043, 16
      %v2134 = vrot.slane %v2132, 4
      %v2135 = vshll.u32 %v2043, 16
      %v2137 = vrot.slane %v2135, 5
      %v2138 = vor.u32 %v2134, %v2137
      %v2139 = vrot.slane %v2138, 4
      %v2141 = vshll.u32 %v2044, 16
      %v2143 = vrot.slane %v2141, 5
      %v2144 = vsel %vm471, %v2139, %v2143
      %v2146 = vshrl.u32 %v2045, 16
      %v2148 = vrot.slane %v2146, 4
      %v2149 = vshll.u32 %v2045, 16
      %v2151 = vrot.slane %v2149, 5
      %v2152 = vor.u32 %v2148, %v2151
      %v2153 = vrot.slane %v2152, 4
      %v2155 = vshll.u32 %v2046, 16
      %v2157 = vrot.slane %v2155, 5
      %v2158 = vsel %vm471, %v2153, %v2157
      %2159 = vrot.lane.b32.xlu0 %v2060, 32
      %v2160 = vpop.permute.xlu0 %2159
      %2161 = vrot.lane.b32.xlu0 %v2074, 32
      %v2162 = vpop.permute.xlu0 %2161
      %2163 = vrot.lane.b32.xlu0 %v2088, 32
      %v2164 = vpop.permute.xlu0 %2163
      %2165 = vrot.lane.b32.xlu0 %v2102, 32
      %v2166 = vpop.permute.xlu0 %2165
      %2167 = vrot.lane.b32.xlu0 %v2116, 32
      %v2168 = vpop.permute.xlu0 %2167
      %2169 = vrot.lane.b32.xlu0 %v2130, 32
      %v2170 = vpop.permute.xlu0 %2169
      %2171 = vrot.lane.b32.xlu0 %v2144, 32
      %v2172 = vpop.permute.xlu0 %2171
      %2173 = vrot.lane.b32.xlu0 %v2158, 32
      %v2174 = vpop.permute.xlu0 %2173
      %2183 = vst.msk [vmem:[#allocation5] sm:$0xf] %vm918, %v2160
      %2184 = vst.msk [vmem:[#allocation5 + $0x4] sm:$0xf] %vm918, %v2162
      %2185 = vst.msk [vmem:[#allocation5 + $0x8] sm:$0xf] %vm918, %v2164
      %2186 = vst.msk [vmem:[#allocation5 + $0xc] sm:$0xf] %vm918, %v2166
      %2187 = vst.msk [vmem:[#allocation5 + $0x10] sm:$0xf] %vm918, %v2168
      %2188 = vst.msk [vmem:[#allocation5 + $0x14] sm:$0xf] %vm918, %v2170
      %2189 = vst.msk [vmem:[#allocation5 + $0x18] sm:$0xf] %vm918, %v2172
      %2190 = vst.msk [vmem:[#allocation5 + $0x1c] sm:$0xf] %vm918, %v2174
      %v2191 = vld [vmem:[%s1662] sm:$0xe]
      %v2192 = vld [vmem:[%s1662 + $0x4] sm:$0x1]
      %v2193 = vld [vmem:[%s1662 + $0x8] sm:$0xe]
      %v2194 = vld [vmem:[%s1662 + $0xc] sm:$0x1]
      %v2195 = vld [vmem:[%s1662 + $0x10] sm:$0xe]
      %v2196 = vld [vmem:[%s1662 + $0x14] sm:$0x1]
      %v2197 = vld [vmem:[%s1662 + $0x18] sm:$0xe]
      %v2198 = vld [vmem:[%s1662 + $0x1c] sm:$0x1]
      %v2199 = vld [vmem:[%s1662 + $0x20] sm:$0xe]
      %v2200 = vld [vmem:[%s1662 + $0x24] sm:$0x1]
      %v2201 = vld [vmem:[%s1662 + $0x28] sm:$0xe]
      %v2202 = vld [vmem:[%s1662 + $0x2c] sm:$0x1]
      %v2203 = vld [vmem:[%s1662 + $0x30] sm:$0xe]
      %v2204 = vld [vmem:[%s1662 + $0x34] sm:$0x1]
      %v2205 = vld [vmem:[%s1662 + $0x38] sm:$0xe]
      %v2206 = vld [vmem:[%s1662 + $0x3c] sm:$0x1]
      %v2223 = vrot.slane %v2191, 5
      %v2224 = vrot.slane %v2223, 4
      %v2225 = vrot.slane %v2192, 5
      %v2226 = vsel %vm651, %v2224, %v2225
      %v2227 = vrot.slane %v2193, 5
      %v2228 = vrot.slane %v2227, 4
      %v2229 = vrot.slane %v2194, 5
      %v2230 = vsel %vm651, %v2228, %v2229
      %v2231 = vrot.slane %v2195, 5
      %v2232 = vrot.slane %v2231, 4
      %v2233 = vrot.slane %v2196, 5
      %v2234 = vsel %vm651, %v2232, %v2233
      %v2235 = vrot.slane %v2197, 5
      %v2236 = vrot.slane %v2235, 4
      %v2237 = vrot.slane %v2198, 5
      %v2238 = vsel %vm651, %v2236, %v2237
      %v2239 = vrot.slane %v2199, 5
      %v2240 = vrot.slane %v2239, 4
      %v2241 = vrot.slane %v2200, 5
      %v2242 = vsel %vm651, %v2240, %v2241
      %v2243 = vrot.slane %v2201, 5
      %v2244 = vrot.slane %v2243, 4
      %v2245 = vrot.slane %v2202, 5
      %v2246 = vsel %vm651, %v2244, %v2245
      %v2247 = vrot.slane %v2203, 5
      %v2248 = vrot.slane %v2247, 4
      %v2249 = vrot.slane %v2204, 5
      %v2250 = vsel %vm651, %v2248, %v2249
      %v2251 = vrot.slane %v2205, 5
      %v2252 = vrot.slane %v2251, 4
      %v2253 = vrot.slane %v2206, 5
      %v2254 = vsel %vm651, %v2252, %v2253
      %2255 = vrot.lane.b32.xlu0 %v2226, 40
      %v2256 = vpop.permute.xlu0 %2255
      %2257 = vrot.lane.b32.xlu0 %v2230, 40
      %v2258 = vpop.permute.xlu0 %2257
      %2259 = vrot.lane.b32.xlu0 %v2234, 40
      %v2260 = vpop.permute.xlu0 %2259
      %2261 = vrot.lane.b32.xlu0 %v2238, 40
      %v2262 = vpop.permute.xlu0 %2261
      %2263 = vrot.lane.b32.xlu0 %v2242, 40
      %v2264 = vpop.permute.xlu0 %2263
      %2265 = vrot.lane.b32.xlu0 %v2246, 40
      %v2266 = vpop.permute.xlu0 %2265
      %2267 = vrot.lane.b32.xlu0 %v2250, 40
      %v2268 = vpop.permute.xlu0 %2267
      %2269 = vrot.lane.b32.xlu0 %v2254, 40
      %v2270 = vpop.permute.xlu0 %2269
      %2279 = vst.msk [vmem:[#allocation5] sm:$0xf] %vm1015, %v2256
      %2280 = vst.msk [vmem:[#allocation5 + $0x4] sm:$0xf] %vm1015, %v2258
      %2281 = vst.msk [vmem:[#allocation5 + $0x8] sm:$0xf] %vm1015, %v2260
      %2282 = vst.msk [vmem:[#allocation5 + $0xc] sm:$0xf] %vm1015, %v2262
      %2283 = vst.msk [vmem:[#allocation5 + $0x10] sm:$0xf] %vm1015, %v2264
      %2284 = vst.msk [vmem:[#allocation5 + $0x14] sm:$0xf] %vm1015, %v2266
      %2285 = vst.msk [vmem:[#allocation5 + $0x18] sm:$0xf] %vm1015, %v2268
      %2286 = vst.msk [vmem:[#allocation5 + $0x1c] sm:$0xf] %vm1015, %v2270
      %s2287 = scalar_lea.vmem [#allocation3], 16
      %v2288 = vld [vmem:[%s2287] sm:$0xf]
      %v2289 = vld [vmem:[%s2287 + $0x8] sm:$0xf]
      %v2290 = vld [vmem:[%s2287 + $0x10] sm:$0xf]
      %v2291 = vld [vmem:[%s2287 + $0x18] sm:$0xf]
      %v2292 = vld [vmem:[%s2287 + $0x20] sm:$0xf]
      %v2293 = vld [vmem:[%s2287 + $0x28] sm:$0xf]
      %v2294 = vld [vmem:[%s2287 + $0x30] sm:$0xf]
      %v2295 = vld [vmem:[%s2287 + $0x38] sm:$0xf]
      %2304 = vrot.lane.b32.xlu0 %v2288, 48
      %v2305 = vpop.permute.xlu0 %2304
      %2306 = vrot.lane.b32.xlu0 %v2289, 48
      %v2307 = vpop.permute.xlu0 %2306
      %2308 = vrot.lane.b32.xlu0 %v2290, 48
      %v2309 = vpop.permute.xlu0 %2308
      %2310 = vrot.lane.b32.xlu0 %v2291, 48
      %v2311 = vpop.permute.xlu0 %2310
      %2312 = vrot.lane.b32.xlu0 %v2292, 48
      %v2313 = vpop.permute.xlu0 %2312
      %2314 = vrot.lane.b32.xlu0 %v2293, 48
      %v2315 = vpop.permute.xlu0 %2314
      %2316 = vrot.lane.b32.xlu0 %v2294, 48
      %v2317 = vpop.permute.xlu0 %2316
      %2318 = vrot.lane.b32.xlu0 %v2295, 48
      %v2319 = vpop.permute.xlu0 %2318
      %2328 = vst.msk [vmem:[#allocation5] sm:$0xf] %vm1065, %v2305
      %2329 = vst.msk [vmem:[#allocation5 + $0x4] sm:$0xf] %vm1065, %v2307
      %2330 = vst.msk [vmem:[#allocation5 + $0x8] sm:$0xf] %vm1065, %v2309
      %2331 = vst.msk [vmem:[#allocation5 + $0xc] sm:$0xf] %vm1065, %v2311
      %2332 = vst.msk [vmem:[#allocation5 + $0x10] sm:$0xf] %vm1065, %v2313
      %2333 = vst.msk [vmem:[#allocation5 + $0x14] sm:$0xf] %vm1065, %v2315
      %2334 = vst.msk [vmem:[#allocation5 + $0x18] sm:$0xf] %vm1065, %v2317
      %2335 = vst.msk [vmem:[#allocation5 + $0x1c] sm:$0xf] %vm1065, %v2319
      %v2336 = vld [vmem:[%s2287] sm:$0xf]
      %v2337 = vld [vmem:[%s2287 + $0x4] sm:$0x1]
      %v2338 = vld [vmem:[%s2287 + $0x8] sm:$0xf]
      %v2339 = vld [vmem:[%s2287 + $0xc] sm:$0x1]
      %v2340 = vld [vmem:[%s2287 + $0x10] sm:$0xf]
      %v2341 = vld [vmem:[%s2287 + $0x14] sm:$0x1]
      %v2342 = vld [vmem:[%s2287 + $0x18] sm:$0xf]
      %v2343 = vld [vmem:[%s2287 + $0x1c] sm:$0x1]
      %v2344 = vld [vmem:[%s2287 + $0x20] sm:$0xf]
      %v2345 = vld [vmem:[%s2287 + $0x24] sm:$0x1]
      %v2346 = vld [vmem:[%s2287 + $0x28] sm:$0xf]
      %v2347 = vld [vmem:[%s2287 + $0x2c] sm:$0x1]
      %v2348 = vld [vmem:[%s2287 + $0x30] sm:$0xf]
      %v2349 = vld [vmem:[%s2287 + $0x34] sm:$0x1]
      %v2350 = vld [vmem:[%s2287 + $0x38] sm:$0xf]
      %v2351 = vld [vmem:[%s2287 + $0x3c] sm:$0x1]
      %v2353 = vshrl.u32 %v2336, 16
      %v2355 = vrot.slane %v2353, 4
      %v2356 = vshll.u32 %v2336, 16
      %v2358 = vrot.slane %v2356, 5
      %v2359 = vor.u32 %v2355, %v2358
      %v2360 = vrot.slane %v2359, 4
      %v2362 = vshll.u32 %v2337, 16
      %v2364 = vrot.slane %v2362, 5
      %v2365 = vsel %vm471, %v2360, %v2364
      %v2367 = vshrl.u32 %v2338, 16
      %v2369 = vrot.slane %v2367, 4
      %v2370 = vshll.u32 %v2338, 16
      %v2372 = vrot.slane %v2370, 5
      %v2373 = vor.u32 %v2369, %v2372
      %v2374 = vrot.slane %v2373, 4
      %v2376 = vshll.u32 %v2339, 16
      %v2378 = vrot.slane %v2376, 5
      %v2379 = vsel %vm471, %v2374, %v2378
      %v2381 = vshrl.u32 %v2340, 16
      %v2383 = vrot.slane %v2381, 4
      %v2384 = vshll.u32 %v2340, 16
      %v2386 = vrot.slane %v2384, 5
      %v2387 = vor.u32 %v2383, %v2386
      %v2388 = vrot.slane %v2387, 4
      %v2390 = vshll.u32 %v2341, 16
      %v2392 = vrot.slane %v2390, 5
      %v2393 = vsel %vm471, %v2388, %v2392
      %v2395 = vshrl.u32 %v2342, 16
      %v2397 = vrot.slane %v2395, 4
      %v2398 = vshll.u32 %v2342, 16
      %v2400 = vrot.slane %v2398, 5
      %v2401 = vor.u32 %v2397, %v2400
      %v2402 = vrot.slane %v2401, 4
      %v2404 = vshll.u32 %v2343, 16
      %v2406 = vrot.slane %v2404, 5
      %v2407 = vsel %vm471, %v2402, %v2406
      %v2409 = vshrl.u32 %v2344, 16
      %v2411 = vrot.slane %v2409, 4
      %v2412 = vshll.u32 %v2344, 16
      %v2414 = vrot.slane %v2412, 5
      %v2415 = vor.u32 %v2411, %v2414
      %v2416 = vrot.slane %v2415, 4
      %v2418 = vshll.u32 %v2345, 16
      %v2420 = vrot.slane %v2418, 5
      %v2421 = vsel %vm471, %v2416, %v2420
      %v2423 = vshrl.u32 %v2346, 16
      %v2425 = vrot.slane %v2423, 4
      %v2426 = vshll.u32 %v2346, 16
      %v2428 = vrot.slane %v2426, 5
      %v2429 = vor.u32 %v2425, %v2428
      %v2430 = vrot.slane %v2429, 4
      %v2432 = vshll.u32 %v2347, 16
      %v2434 = vrot.slane %v2432, 5
      %v2435 = vsel %vm471, %v2430, %v2434
      %v2437 = vshrl.u32 %v2348, 16
      %v2439 = vrot.slane %v2437, 4
      %v2440 = vshll.u32 %v2348, 16
      %v2442 = vrot.slane %v2440, 5
      %v2443 = vor.u32 %v2439, %v2442
      %v2444 = vrot.slane %v2443, 4
      %v2446 = vshll.u32 %v2349, 16
      %v2448 = vrot.slane %v2446, 5
      %v2449 = vsel %vm471, %v2444, %v2448
      %v2451 = vshrl.u32 %v2350, 16
      %v2453 = vrot.slane %v2451, 4
      %v2454 = vshll.u32 %v2350, 16
      %v2456 = vrot.slane %v2454, 5
      %v2457 = vor.u32 %v2453, %v2456
      %v2458 = vrot.slane %v2457, 4
      %v2460 = vshll.u32 %v2351, 16
      %v2462 = vrot.slane %v2460, 5
      %v2463 = vsel %vm471, %v2458, %v2462
      %2464 = vrot.lane.b32.xlu0 %v2365, 56
      %v2465 = vpop.permute.xlu0 %2464
      %2466 = vrot.lane.b32.xlu0 %v2379, 56
      %v2467 = vpop.permute.xlu0 %2466
      %2468 = vrot.lane.b32.xlu0 %v2393, 56
      %v2469 = vpop.permute.xlu0 %2468
      %2470 = vrot.lane.b32.xlu0 %v2407, 56
      %v2471 = vpop.permute.xlu0 %2470
      %2472 = vrot.lane.b32.xlu0 %v2421, 56
      %v2473 = vpop.permute.xlu0 %2472
      %2474 = vrot.lane.b32.xlu0 %v2435, 56
      %v2475 = vpop.permute.xlu0 %2474
      %2476 = vrot.lane.b32.xlu0 %v2449, 56
      %v2477 = vpop.permute.xlu0 %2476
      %2478 = vrot.lane.b32.xlu0 %v2463, 56
      %v2479 = vpop.permute.xlu0 %2478
      %2488 = vst.msk [vmem:[#allocation5] sm:$0xf] %vm1226, %v2465
      %2489 = vst.msk [vmem:[#allocation5 + $0x4] sm:$0xf] %vm1226, %v2467
      %2490 = vst.msk [vmem:[#allocation5 + $0x8] sm:$0xf] %vm1226, %v2469
      %2491 = vst.msk [vmem:[#allocation5 + $0xc] sm:$0xf] %vm1226, %v2471
      %2492 = vst.msk [vmem:[#allocation5 + $0x10] sm:$0xf] %vm1226, %v2473
      %2493 = vst.msk [vmem:[#allocation5 + $0x14] sm:$0xf] %vm1226, %v2475
      %2494 = vst.msk [vmem:[#allocation5 + $0x18] sm:$0xf] %vm1226, %v2477
      %2495 = vst.msk [vmem:[#allocation5 + $0x1c] sm:$0xf] %vm1226, %v2479
      %v2496 = vld [vmem:[%s2287] sm:$0xe]
      %v2497 = vld [vmem:[%s2287 + $0x4] sm:$0x1]
      %v2498 = vld [vmem:[%s2287 + $0x8] sm:$0xe]
      %v2499 = vld [vmem:[%s2287 + $0xc] sm:$0x1]
      %v2500 = vld [vmem:[%s2287 + $0x10] sm:$0xe]
      %v2501 = vld [vmem:[%s2287 + $0x14] sm:$0x1]
      %v2502 = vld [vmem:[%s2287 + $0x18] sm:$0xe]
      %v2503 = vld [vmem:[%s2287 + $0x1c] sm:$0x1]
      %v2504 = vld [vmem:[%s2287 + $0x20] sm:$0xe]
      %v2505 = vld [vmem:[%s2287 + $0x24] sm:$0x1]
      %v2506 = vld [vmem:[%s2287 + $0x28] sm:$0xe]
      %v2507 = vld [vmem:[%s2287 + $0x2c] sm:$0x1]
      %v2508 = vld [vmem:[%s2287 + $0x30] sm:$0xe]
      %v2509 = vld [vmem:[%s2287 + $0x34] sm:$0x1]
      %v2510 = vld [vmem:[%s2287 + $0x38] sm:$0xe]
      %v2511 = vld [vmem:[%s2287 + $0x3c] sm:$0x1]
      %v2528 = vrot.slane %v2496, 5
      %v2529 = vrot.slane %v2528, 4
      %v2530 = vrot.slane %v2497, 5
      %v2531 = vsel %vm651, %v2529, %v2530
      %v2532 = vrot.slane %v2498, 5
      %v2533 = vrot.slane %v2532, 4
      %v2534 = vrot.slane %v2499, 5
      %v2535 = vsel %vm651, %v2533, %v2534
      %v2536 = vrot.slane %v2500, 5
      %v2537 = vrot.slane %v2536, 4
      %v2538 = vrot.slane %v2501, 5
      %v2539 = vsel %vm651, %v2537, %v2538
      %v2540 = vrot.slane %v2502, 5
      %v2541 = vrot.slane %v2540, 4
      %v2542 = vrot.slane %v2503, 5
      %v2543 = vsel %vm651, %v2541, %v2542
      %v2544 = vrot.slane %v2504, 5
      %v2545 = vrot.slane %v2544, 4
      %v2546 = vrot.slane %v2505, 5
      %v2547 = vsel %vm651, %v2545, %v2546
      %v2548 = vrot.slane %v2506, 5
      %v2549 = vrot.slane %v2548, 4
      %v2550 = vrot.slane %v2507, 5
      %v2551 = vsel %vm651, %v2549, %v2550
      %v2552 = vrot.slane %v2508, 5
      %v2553 = vrot.slane %v2552, 4
      %v2554 = vrot.slane %v2509, 5
      %v2555 = vsel %vm651, %v2553, %v2554
      %v2556 = vrot.slane %v2510, 5
      %v2557 = vrot.slane %v2556, 4
      %v2558 = vrot.slane %v2511, 5
      %v2559 = vsel %vm651, %v2557, %v2558
      %2560 = vrot.lane.b32.xlu0 %v2531, 64
      %v2561 = vpop.permute.xlu0 %2560
      %2562 = vrot.lane.b32.xlu0 %v2535, 64
      %v2563 = vpop.permute.xlu0 %2562
      %2564 = vrot.lane.b32.xlu0 %v2539, 64
      %v2565 = vpop.permute.xlu0 %2564
      %2566 = vrot.lane.b32.xlu0 %v2543, 64
      %v2567 = vpop.permute.xlu0 %2566
      %2568 = vrot.lane.b32.xlu0 %v2547, 64
      %v2569 = vpop.permute.xlu0 %2568
      %2570 = vrot.lane.b32.xlu0 %v2551, 64
      %v2571 = vpop.permute.xlu0 %2570
      %2572 = vrot.lane.b32.xlu0 %v2555, 64
      %v2573 = vpop.permute.xlu0 %2572
      %2574 = vrot.lane.b32.xlu0 %v2559, 64
      %v2575 = vpop.permute.xlu0 %2574
      %2584 = vst.msk [vmem:[#allocation5] sm:$0xf] %vm1323, %v2561
      %2585 = vst.msk [vmem:[#allocation5 + $0x4] sm:$0xf] %vm1323, %v2563
      %2586 = vst.msk [vmem:[#allocation5 + $0x8] sm:$0xf] %vm1323, %v2565
      %2587 = vst.msk [vmem:[#allocation5 + $0xc] sm:$0xf] %vm1323, %v2567
      %2588 = vst.msk [vmem:[#allocation5 + $0x10] sm:$0xf] %vm1323, %v2569
      %2589 = vst.msk [vmem:[#allocation5 + $0x14] sm:$0xf] %vm1323, %v2571
      %2590 = vst.msk [vmem:[#allocation5 + $0x18] sm:$0xf] %vm1323, %v2573
      %2591 = vst.msk [vmem:[#allocation5 + $0x1c] sm:$0xf] %vm1323, %v2575
      %v2592 = vld [vmem:[#allocation5] sm:$0xf]
      %v2593 = vld [vmem:[#allocation5 + $0x4] sm:$0xf]
      %v2594 = vld [vmem:[#allocation5 + $0x8] sm:$0xf]
      %v2595 = vld [vmem:[#allocation5 + $0xc] sm:$0xf]
      %v2596 = vld [vmem:[#allocation5 + $0x10] sm:$0xf]
      %v2597 = vld [vmem:[#allocation5 + $0x14] sm:$0xf]
      %v2598 = vld [vmem:[#allocation5 + $0x18] sm:$0xf]
      %v2599 = vld [vmem:[#allocation5 + $0x1c] sm:$0xf]
      %v2600 = vld [vmem:[%s3] sm:$0xf]
      %v2601 = vld [vmem:[%s3 + $0x4] sm:$0xf]
      %v2602 = vld [vmem:[%s3 + $0x8] sm:$0xf]
      %v2603 = vld [vmem:[%s3 + $0xc] sm:$0xf]
      %v2604 = vld [vmem:[%s3 + $0x10] sm:$0xf]
      %v2605 = vld [vmem:[%s3 + $0x14] sm:$0xf]
      %v2606 = vld [vmem:[%s3 + $0x18] sm:$0xf]
      %v2607 = vld [vmem:[%s3 + $0x1c] sm:$0xf]
      %v2608 = vld [vmem:[%s3 + $0x20] sm:$0xf]
      %v2609 = vld [vmem:[%s4] sm:$0x1]
      %v2611 = vlaneseq
      %v2612 = vshrl.u32 %v2611, 7
      %v2613 = vsub.s32 0, %v2612
      %v2614 = vrot.slane %v2609, %v2613
      %v2624 = vunpack.c.l.b16 %v2592
      %v2625 = vunpack.c.l.b16 %v2593
      %v2626 = vunpack.c.l.b16 %v2594
      %v2627 = vunpack.c.l.b16 %v2595
      %v2628 = vunpack.c.l.b16 %v2596
      %v2629 = vunpack.c.l.b16 %v2597
      %v2630 = vunpack.c.l.b16 %v2598
      %v2631 = vunpack.c.l.b16 %v2599
      %v2632 = vpack.c.b16 %v2625, %v2624
      %v2633 = vpack.c.b16 %v2627, %v2626
      %v2634 = vpack.c.b16 %v2629, %v2628
      %v2635 = vpack.c.b16 %v2631, %v2630
      %v2645 = vunpack.c.l.b16 %v2600
      %v2646 = vunpack.c.l.b16 %v2601
      %v2647 = vunpack.c.l.b16 %v2602
      %v2648 = vunpack.c.l.b16 %v2603
      %v2649 = vunpack.c.l.b16 %v2604
      %v2650 = vunpack.c.l.b16 %v2605
      %v2651 = vunpack.c.l.b16 %v2606
      %v2652 = vunpack.c.l.b16 %v2607
      %v2653 = vunpack.c.l.b16 %v2608
      %v2654 = vpack.c.b16 %v2646, %v2645
      %v2655 = vpack.c.b16 %v2648, %v2647
      %v2656 = vpack.c.b16 %v2650, %v2649
      %v2657 = vpack.c.b16 %v2652, %v2651
      %v2658 = vpack.c.b16 %v2653, %v2653
      %v2664 = vsel %vm1403, %v2632, 0
      %v2667 = vsel %vm1403, %v2633, 0
      %v2670 = vsel %vm1403, %v2634, 0
      %v2673 = vsel %vm1403, %v2635, 0
      %v2676 = vsel %vm1416, %v2658, 0
      %2678 = vmatprep.subr.bf16.mxu0 0
      %2679 = vmatpush1.bf16.msra.mxu0 %v2654
      %2680 = vmatprep.subr.bf16.mxu0 0
      %2681 = vmatpush1.bf16.msra.mxu0 %v2655
      %2682 = vmatprep.subr.bf16.mxu0 0
      %2683 = vmatpush1.bf16.msra.mxu0 %v2656
      %2684 = vmatprep.subr.bf16.mxu0 0
      %2685 = vmatpush1.bf16.msra.mxu0 %v2657
      %2686 = vmatprep.subr.bf16.mxu0 0
      %2687 = vmatpush1.bf16.msra.mxu0 %v2676
      %2688 = vmatprep.subr.bf16.mxu0 0
      %2689 = vmatpush1.bf16.msra.mxu0 0
      %2690 = vmatprep.subr.bf16.mxu0 0
      %2691 = vmatpush1.bf16.msra.mxu0 0
      %2692 = vmatprep.subr.bf16.mxu0 0
      %2693 = vmatpush1.bf16.msra.mxu0 0
      %2694 = vmatprep.subr.bf16.mxu0 0
      %2695 = vmatpush1.bf16.msra.mxu0 0
      %2696 = vmatprep.subr.bf16.mxu0 0
      %2697 = vmatpush1.bf16.msra.mxu0 0
      %2698 = vmatprep.subr.bf16.mxu0 0
      %2699 = vmatpush1.bf16.msra.mxu0 0
      %2700 = vmatprep.subr.bf16.mxu0 0
      %2701 = vmatpush1.bf16.msra.mxu0 0
      %2702 = vmatprep.subr.bf16.mxu0 0
      %2703 = vmatpush1.bf16.msra.mxu0 0
      %2704 = vmatprep.subr.bf16.mxu0 0
      %2705 = vmatpush1.bf16.msra.mxu0 0
      %2706 = vmatprep.subr.bf16.mxu0 0
      %2707 = vmatpush1.bf16.msra.mxu0 0
      %2708 = vmatprep.subr.bf16.mxu0 0
      %2709 = vmatpush1.bf16.msra.mxu0 0
      %2710 = vmatprep.mubr.bf16.mxu0 0
      %2711 = vmatmul.mubr.bf16.gmra.mrb[0].mxu0 %v2664
      %v2712 = vpop.f32.mrb[0].mxu0
      %v2713 = vadd.f32 %v2614, %v2712
      %v2714 = vpop.f32.mrb[0].mxu0
      %v2715 = vpop.f32.mrb[0].mxu0
      %v2716 = vadd.f32 %v2614, %v2715
      %v2717 = vpop.f32.mrb[0].mxu0
      %2718 = vmatprep.mubr.bf16.mxu0 0
      %2719 = vmatmul.mubr.bf16.gmra.mrb[0].mxu0 %v2667
      %v2720 = vpop.f32.mrb[0].mxu0
      %v2721 = vadd.f32 %v2614, %v2720
      %v2722 = vpop.f32.mrb[0].mxu0
      %v2723 = vpop.f32.mrb[0].mxu0
      %v2724 = vadd.f32 %v2614, %v2723
      %v2725 = vpop.f32.mrb[0].mxu0
      %2726 = vmatprep.mubr.bf16.mxu0 0
      %2727 = vmatmul.mubr.bf16.gmra.mrb[0].mxu0 %v2670
      %v2728 = vpop.f32.mrb[0].mxu0
      %v2729 = vadd.f32 %v2614, %v2728
      %v2730 = vpop.f32.mrb[0].mxu0
      %v2731 = vpop.f32.mrb[0].mxu0
      %v2732 = vadd.f32 %v2614, %v2731
      %v2733 = vpop.f32.mrb[0].mxu0
      %2734 = vmatprep.mubr.bf16.mxu0 0
      %2735 = vmatmul.mubr.bf16.gmra.mrb[0].mxu0 %v2673
      %v2736 = vpop.f32.mrb[0].mxu0
      %v2737 = vadd.f32 %v2614, %v2736
      %v2738 = vpop.f32.mrb[0].mxu0
      %v2739 = vpop.f32.mrb[0].mxu0
      %v2740 = vadd.f32 %v2614, %v2739
      %v2741 = vpop.f32.mrb[0].mxu0
      %2742 = vdwg.mxu0
      %v2743 = vld [vmem:[%s219] sm:$0xf]
      %v2744 = vld [vmem:[%s219 + $0x4] sm:$0xf]
      %v2745 = vld [vmem:[%s219 + $0x8] sm:$0xf]
      %v2746 = vld [vmem:[%s219 + $0xc] sm:$0xf]
      %v2747 = vld [vmem:[%s219 + $0x10] sm:$0xf]
      %v2748 = vld [vmem:[%s219 + $0x14] sm:$0xf]
      %v2749 = vld [vmem:[%s219 + $0x18] sm:$0xf]
      %v2750 = vld [vmem:[%s219 + $0x1c] sm:$0xf]
      %v2751 = vunpack.c.l.bf16 %v2743
      %v2752 = vunpack.c.l.bf16 %v2744
      %v2753 = vunpack.c.l.bf16 %v2745
      %v2754 = vunpack.c.l.bf16 %v2746
      %v2755 = vunpack.c.l.bf16 %v2747
      %v2756 = vunpack.c.l.bf16 %v2748
      %v2757 = vunpack.c.l.bf16 %v2749
      %v2758 = vunpack.c.l.bf16 %v2750
      %v2759 = vadd.f32 %v2713, %v2751
      %v2760 = vadd.f32 %v2716, %v2752
      %v2761 = vadd.f32 %v2721, %v2753
      %v2762 = vadd.f32 %v2724, %v2754
      %v2763 = vadd.f32 %v2729, %v2755
      %v2764 = vadd.f32 %v2732, %v2756
      %v2765 = vadd.f32 %v2737, %v2757
      %v2766 = vadd.f32 %v2740, %v2758
      %v2767 = vmax.f32 %v2759, 0.0
      %v2768 = vmax.f32 %v2760, 0.0
      %v2769 = vmax.f32 %v2761, 0.0
      %v2770 = vmax.f32 %v2762, 0.0
      %v2771 = vmax.f32 %v2763, 0.0
      %v2772 = vmax.f32 %v2764, 0.0
      %v2773 = vmax.f32 %v2765, 0.0
      %v2774 = vmax.f32 %v2766, 0.0
      %v2775 = vpack.c.bf16 %v2767, %v2767
      %v2776 = vpack.c.bf16 %v2768, %v2768
      %v2777 = vpack.c.bf16 %v2769, %v2769
      %v2778 = vpack.c.bf16 %v2770, %v2770
      %v2779 = vpack.c.bf16 %v2771, %v2771
      %v2780 = vpack.c.bf16 %v2772, %v2772
      %v2781 = vpack.c.bf16 %v2773, %v2773
      %v2782 = vpack.c.bf16 %v2774, %v2774
      %2783 = vst.msk [vmem:[%s224] sm:$0xf] %vm226, %v2775
      %2784 = vst.msk [vmem:[%s224 + $0x4] sm:$0xf] %vm226, %v2776
      %2785 = vst.msk [vmem:[%s224 + $0x8] sm:$0xf] %vm226, %v2777
      %2786 = vst.msk [vmem:[%s224 + $0xc] sm:$0xf] %vm226, %v2778
      %2787 = vst.msk [vmem:[%s224 + $0x10] sm:$0xf] %vm226, %v2779
      %2788 = vst.msk [vmem:[%s224 + $0x14] sm:$0xf] %vm226, %v2780
      %2789 = vst.msk [vmem:[%s224 + $0x18] sm:$0xf] %vm226, %v2781
      %2790 = vst.msk [vmem:[%s224 + $0x1c] sm:$0xf] %vm226, %v2782
      %p2791 = scmp.lt.s32.totalorder %s16, 1
      %s2792 = scalar_select %p2791, %s16, 1
      %s2793 = smul.addr %s2792, 8
      %s2794 = smul.addr %s2793, 4
      %s2795 = scalar_lea.vmem %s5, %s2794
      // Predicated region
      $region41: #{a_call__.3} parent=39 // pred_check
        %p2796 = pneg %p144
      $region42: #{a_call__.3} parent=39 // pred_check_branch
        %2798 = sbr.rel (%p2796) target = $region44
      $region43: #{a_call__.3} parent=39 // pred_region
        _
      $region44: #{a_call__.3} parent=39 // pred_fallthru
        _
    $region40: #{a_call__.3} parent=5 // pred_fallthru
      _
    %p2799 = scmp.le.s32.totalorder 2, %s11
    // Predicated region
    $region45: #{a_call__.3} parent=5 // pred_check
      %p2800 = pneg %p2799
    $region46: #{a_call__.3} parent=5 // pred_check_branch
      %2802 = sbr.rel (%p2800) target = $region48
    $region47: #{a_call__.3} parent=5 // pred_region
      %s2803 = ssub.s32 %s11, 2
      // Predicated region
      $region49: #{a_call__.3} parent=47 // pred_check
        %p2804 = pneg %p150
      $region50: #{a_call__.3} parent=47 // pred_check_branch
        %2806 = sbr.rel (%p2804) target = $region52
      $region51: #{a_call__.3} parent=47 // pred_region
        %p2807 = scmp.lt.s32.totalorder %s17, 1
        %s2808 = scalar_select %p2807, %s17, 1
        %s2809 = smul.addr %s2808, 8
        %s2810 = smul.addr %s2809, 4
        %s2811 = scalar_lea.vmem %s5, %s2810
      $region52: #{a_call__.3} parent=47 // pred_fallthru
        _
    $region48: #{a_call__.3} parent=5 // pred_fallthru
      _
  $region6: #{a_call__.3} parent=0 // loop_footer
    %s15 = sadd.s32 1, %s11
  $region7: #{a_call__.3} parent=0 // loop_footer_branch
    %10 = sbr.rel target = $region3
  $region8: #{a_call__.3} parent=0 // loop_exit
    _

</llo_original>
